<compile_context>
chip_gen: v7x
topology: tpu7x:2x2x1
jax: 0.10.0
libtpu: 0.0.40
codegen_flags: <defaults>
</compile_context>

<pallas_src>
import functools

import jax
import jax.numpy as jnp
from jax.experimental import pallas as pl
from jax.experimental.pallas import tpu as pltpu


_PARAM_ORDER = ("wqkv", "bqkv", "wo", "bo",
                "g1", "be1", "w1", "b1", "w2", "b2",
                "g2", "be2", "go", "beo")


def _layernorm(v, g, b, eps=1e-5):
    mu = jnp.mean(v, axis=-1, keepdims=True)
    var = jnp.mean((v - mu) ** 2, axis=-1, keepdims=True)
    return (v - mu) * jax.lax.rsqrt(var + eps) * g + b


def stack_kernel(x_ref,
                 wqkv_ref, bqkv_ref, wo_ref, bo_ref,
                 g1_ref, be1_ref,
                 w1_ref, b1_ref, w2_ref, b2_ref,
                 g2_ref, be2_ref,
                 go_ref, beo_ref,
                 out_ref,
                 state_ref, attn_ref,
                 *, num_heads, kv_block):
    l = pl.program_id(1)
    n_layers = pl.num_programs(1)

    # Layer 0: seed the resident f32 state.  state_ref is a VMEM scratch that
    # persists across grid iterations, so the inter-layer state never
    # round-trips through the (possibly bf16) output dtype.
    @pl.when(l == 0)
    def _():
        state_ref[...] = x_ref[...].astype(jnp.float32)

    bt, S, D = state_ref.shape
    H = num_heads
    hd = D // H
    N = bt * S

    x = state_ref[...]                            # (bt, S, D) f32 resident state
    x2 = x.reshape(N, D)                          # per-token rows
    xb = x2.astype(jnp.bfloat16)

    # ---- fused QKV projection: one (N, D) @ (D, 3D) MXU matmul ----
    # (softmax scale is pre-folded into the q columns of wqkv / bqkv at init)
    qkv = jnp.dot(xb, wqkv_ref[...], preferred_element_type=jnp.float32)
    qkv = qkv + bqkv_ref[...]
    q3 = qkv[:, :D].reshape(bt, S, D).astype(jnp.bfloat16)
    k3 = qkv[:, D:2 * D].reshape(bt, S, D).astype(jnp.bfloat16)
    v3 = qkv[:, 2 * D:].reshape(bt, S, D).astype(jnp.bfloat16)

    n_kv = S // kv_block

    # ---- multi-head self-attention ----
    # Flash-style online softmax over KV blocks keeps the score/prob tensors at
    # (bt, S, kv_block) instead of (bt, S, S).  Each head's output is staged
    # into attn_ref (bf16 VMEM scratch) at its lane offset; there is no value
    # accumulator carried across head iterations.
    for h in range(H):
        sl = slice(h * hd, (h + 1) * hd)
        qh = q3[:, :, sl]                                        # (bt, S, hd) bf16
        m_i = jnp.full((bt, S, 1), -jnp.inf, jnp.float32)
        l_i = jnp.zeros((bt, S, 1), jnp.float32)
        acc = jnp.zeros((bt, S, hd), jnp.float32)
        for t in range(n_kv):
            ks = slice(t * kv_block, (t + 1) * kv_block)
            kh = k3[:, ks, sl]                                   # (bt, tk, hd)
            vh = v3[:, ks, sl]
            s = jnp.einsum('bqd,bkd->bqk', qh, kh,
                           preferred_element_type=jnp.float32)   # (bt, S, tk)
            m_new = jnp.maximum(m_i, jnp.max(s, axis=-1, keepdims=True))
            alpha = jnp.exp(m_i - m_new)
            p = jnp.exp(s - m_new)
            l_i = alpha * l_i + jnp.sum(p, axis=-1, keepdims=True)
            acc = alpha * acc + jnp.einsum('bqk,bkd->bqd',
                                           p.astype(jnp.bfloat16), vh,
                                           preferred_element_type=jnp.float32)
            m_i = m_new
        oh = acc * pl.reciprocal(l_i, approx=True)               # (bt, S, hd) f32
        attn_ref[:, sl] = oh.reshape(N, hd).astype(jnp.bfloat16)

    # One full-contraction (N, D) @ (D, D) out-projection — fills the MXU depth
    # instead of H separate K=head_dim matmuls.
    attn = jnp.dot(attn_ref[...], wo_ref[...],
                   preferred_element_type=jnp.float32) + bo_ref[...]

    # ---- post-norm encoder layer (eval mode, dropout = 0) ----
    y = _layernorm(x2 + attn, g1_ref[...], be1_ref[...])
    h1 = jnp.dot(y.astype(jnp.bfloat16), w1_ref[...],
                 preferred_element_type=jnp.float32) + b1_ref[...]
    h1 = jnp.maximum(h1, 0.0)
    ff = jnp.dot(h1.astype(jnp.bfloat16), w2_ref[...],
                 preferred_element_type=jnp.float32) + b2_ref[...]
    z = _layernorm(y + ff, g2_ref[...], be2_ref[...])

    # ---- ResidualTransformer outer residual + LayerNorm ----
    new_x = _layernorm(z + x2, go_ref[...], beo_ref[...]).reshape(bt, S, D)
    state_ref[...] = new_x

    # Single HBM writeback per batch block: out_ref's block index is constant
    # along the layer axis and is only written at the last layer.
    @pl.when(l == n_layers - 1)
    def _():
        out_ref[...] = new_x.astype(out_ref.dtype)


def _tpu_generation_defaults():
    """(num_tensorcores, vmem_limit_bytes) for the current chip generation."""
    vmem_cap = None
    try:
        vmem_cap = int(pltpu.get_tpu_info().vmem_capacity_bytes)
    except Exception:
        vmem_cap = None
    kind = ""
    try:
        kind = jax.devices()[0].device_kind.lower()
    except Exception:
        pass
    cores = 2 if "v7" in kind else 1
    if vmem_cap is None:
        vmem_cap = (64 if "v7" in kind else 128) * 1024 * 1024
    if vmem_cap >= 128 * 1024 * 1024:
        vmem_limit = 100 * 1024 * 1024      # v5e / v6e: 128 MiB physical
    elif vmem_cap >= 64 * 1024 * 1024:
        vmem_limit = 48 * 1024 * 1024       # v7x: 64 MiB per TC
    else:
        vmem_limit = 32 * 1024 * 1024
    return cores, vmem_limit


def residual_transformer(x, params, *, num_heads, batch_block=None, kv_block=None):
    """Run the full stack of residual blocks in one pallas_call.

    params: dict of arrays stacked over layers (leading L axis), produced by
            init_stacked_params() and prepared with fold_attention_scale().
    """
    B, S, D = x.shape
    L = params["wqkv"].shape[0]
    assert D % num_heads == 0, "d_model must be divisible by nhead"

    cores, vmem_limit = _tpu_generation_defaults()

    if batch_block is None:
        # nb = number of TensorCores: 1 on v5e/v6e (splitting only re-streams the
        # whole weight stack from HBM for no parallelism), 2 on v7x (one block
        # per TC).  For real sizes pick batch_block so N = batch_block*S is at
        # least a few hundred rows, keeping the weight-streaming matmuls
        # MXU-bound rather than HBM-bound.
        if cores > 1 and B % cores == 0 and B >= cores:
            batch_block = B // cores
        else:
            batch_block = B
    assert B % batch_block == 0
    nb = B // batch_block

    if kv_block is None:
        kv_block = min(S, 512)
    if S % kv_block != 0:
        kv_block = S                     # fall back to a single KV tile
    assert S % kv_block == 0

    def wspec(p):
        assert p.ndim == 3
        # Block over the layer axis only; the kernel sees the per-layer slice.
        return pl.BlockSpec((None, p.shape[1], p.shape[2]),
                            lambda b, l: (l, 0, 0))

    in_specs = [pl.BlockSpec((batch_block, S, D), lambda b, l: (b, 0, 0))]
    args = [x]
    for name in _PARAM_ORDER:
        in_specs.append(wspec(params[name]))
        args.append(params[name])

    kernel = functools.partial(stack_kernel, num_heads=num_heads, kv_block=kv_block)
    return pl.pallas_call(
        kernel,
        out_shape=jax.ShapeDtypeStruct((B, S, D), x.dtype),
        grid=(nb, L),
        in_specs=in_specs,
        out_specs=pl.BlockSpec((batch_block, S, D), lambda b, l: (b, 0, 0)),
        scratch_shapes=[
            pltpu.VMEM((batch_block, S, D), jnp.float32),     # resident f32 state
            pltpu.VMEM((batch_block * S, D), jnp.bfloat16),   # staged head outputs
        ],
        compiler_params=pltpu.CompilerParams(
            dimension_semantics=("parallel", "arbitrary"),
            vmem_limit_bytes=vmem_limit,
        ),
    )(*args)


def init_stacked_params(key, num_layers, d_model, dim_ff):
    """Deterministic synthetic init, stacked over layers with a leading L axis.
    Matmul weights are generated PyTorch-style (out, in), pre-transposed so the
    kernel does x @ W, and stored in bf16; biases / LayerNorm params stay f32."""
    def one_layer(k):
        ks = jax.random.split(k, 6)
        rnd = lambda kk, shp: 0.1 * jax.random.normal(kk, shp, jnp.float32)
        wq = rnd(ks[0], (d_model, d_model)).T
        wk = rnd(ks[1], (d_model, d_model)).T
        wv = rnd(ks[2], (d_model, d_model)).T
        wo = rnd(ks[3], (d_model, d_model)).T
        w1 = rnd(ks[4], (dim_ff, d_model)).T       # (D, F)
        w2 = rnd(ks[5], (d_model, dim_ff)).T       # (F, D)
        zeros = lambda n: jnp.zeros((1, n), jnp.float32)
        ones = lambda n: jnp.ones((1, n), jnp.float32)
        return dict(
            wqkv=jnp.concatenate([wq, wk, wv], axis=1).astype(jnp.bfloat16),
            bqkv=zeros(3 * d_model),
            wo=wo.astype(jnp.bfloat16), bo=zeros(d_model),
            g1=ones(d_model), be1=zeros(d_model),
            w1=w1.astype(jnp.bfloat16), b1=zeros(dim_ff),
            w2=w2.astype(jnp.bfloat16), b2=zeros(d_model),
            g2=ones(d_model), be2=zeros(d_model),
            go=ones(d_model), beo=zeros(d_model),
        )

    per_layer = [one_layer(k) for k in jax.random.split(key, num_layers)]
    return {name: jnp.stack([p[name] for p in per_layer], axis=0)
            for name in _PARAM_ORDER}


def fold_attention_scale(params, *, num_heads):
    """One-time host-side prep: fold 1/sqrt(head_dim) into the q columns of
    wqkv and the q entries of bqkv.  Semantics-preserving:
       ((x @ (Wq*s)) + bq*s) == ((x @ Wq) + bq) * s
    and removes an (N, D) VPU multiply per layer from the kernel."""
    D = params["wo"].shape[-1]
    scale = float((D // num_heads) ** -0.5)
    out = dict(params)
    wqkv = params["wqkv"].astype(jnp.float32)
    wqkv = wqkv.at[:, :, :D].multiply(scale)
    out["wqkv"] = wqkv.astype(params["wqkv"].dtype)
    out["bqkv"] = params["bqkv"].at[:, :, :D].multiply(scale)
    return out


def reference_forward(x, params, *, num_heads):
    """Pure-JAX f32 reference with identical semantics (uses UNFOLDED params,
    applies the 1/sqrt(head_dim) scale explicitly, PyTorch-style)."""
    B, S, D = x.shape
    L = params["wqkv"].shape[0]
    H = num_heads
    hd = D // H

    def ln(v, g, b, eps=1e-5):
        mu = v.mean(-1, keepdims=True)
        var = ((v - mu) ** 2).mean(-1, keepdims=True)
        return (v - mu) / jnp.sqrt(var + eps) * g + b

    f32 = lambda a: a.astype(jnp.float32)
    for l in range(L):
        qkv = x @ f32(params["wqkv"][l]) + params["bqkv"][l]
        q, k, v = qkv[..., :D], qkv[..., D:2 * D], qkv[..., 2 * D:]
        q = q.reshape(B, S, H, hd).transpose(0, 2, 1, 3) / jnp.sqrt(hd)
        k = k.reshape(B, S, H, hd).transpose(0, 2, 1, 3)
        v = v.reshape(B, S, H, hd).transpose(0, 2, 1, 3)
        p = jax.nn.softmax(q @ jnp.swapaxes(k, -1, -2), axis=-1)
        o = (p @ v).transpose(0, 2, 1, 3).reshape(B, S, D)
        attn = o @ f32(params["wo"][l]) + params["bo"][l]
        y = ln(x + attn, params["g1"][l], params["be1"][l])
        ff = jnp.maximum(y @ f32(params["w1"][l]) + params["b1"][l], 0.0)
        ff = ff @ f32(params["w2"][l]) + params["b2"][l]
        z = ln(y + ff, params["g2"][l], params["be2"][l])
        x = ln(z + x, params["go"][l], params["beo"][l])
    return x


if __name__ == "__main__":
    # batch, seq, d_model, nhead, dim_ff, layers  (S mult of 8; D, F lane-friendly)
    B, S, D, H, F, L = 2, 16, 32, 4, 64, 2
    key = jax.random.PRNGKey(0)
    kx, kp = jax.random.split(key)
    x = jax.random.normal(kx, (B, S, D), jnp.float32)

    params = init_stacked_params(kp, L, D, F)           # PyTorch-semantics params
    kparams = fold_attention_scale(params, num_heads=H)  # one-time kernel prep

    # kv_block=8 (< S) exercises the online-softmax KV tiling path.
    out = residual_transformer(x, kparams, num_heads=H, kv_block=8)
    jax.block_until_ready(out)
    assert out.shape == (B, S, D)
    assert bool(jnp.all(jnp.isfinite(out)))

    ref = reference_forward(x, params, num_heads=H)
    err = float(jnp.max(jnp.abs(out - ref)))
    assert err < 5e-2, f"max abs err vs f32 reference: {err}"
    print("KERNEL_OK")
</pallas_src>

<mosaic_0001>
module attributes {stable_mosaic.version = 11 : i64} {
  func.func @stack_kernel(%arg0: i32, %arg1: i32, %arg2: memref<2x16x32xf32, #tpu.memory_space<vmem>>, %arg3: memref<1x32x96xbf16, #tpu.memory_space<vmem>>, %arg4: memref<1x1x96xf32, #tpu.memory_space<vmem>>, %arg5: memref<1x32x32xbf16, #tpu.memory_space<vmem>>, %arg6: memref<1x1x32xf32, #tpu.memory_space<vmem>>, %arg7: memref<1x1x32xf32, #tpu.memory_space<vmem>>, %arg8: memref<1x1x32xf32, #tpu.memory_space<vmem>>, %arg9: memref<1x32x64xbf16, #tpu.memory_space<vmem>>, %arg10: memref<1x1x64xf32, #tpu.memory_space<vmem>>, %arg11: memref<1x64x32xbf16, #tpu.memory_space<vmem>>, %arg12: memref<1x1x32xf32, #tpu.memory_space<vmem>>, %arg13: memref<1x1x32xf32, #tpu.memory_space<vmem>>, %arg14: memref<1x1x32xf32, #tpu.memory_space<vmem>>, %arg15: memref<1x1x32xf32, #tpu.memory_space<vmem>>, %arg16: memref<1x1x32xf32, #tpu.memory_space<vmem>>, %arg17: memref<2x16x32xf32, #tpu.memory_space<vmem>>, %arg18: memref<2x16x32xf32, #tpu.memory_space<vmem>>, %arg19: memref<32x32xbf16, #tpu.memory_space<vmem>>) attributes {dimension_semantics = [#tpu.dimension_semantics<parallel>, #tpu.dimension_semantics<arbitrary>], iteration_bounds = array<i64: 1, 2>, scalar_prefetch = 0 : i64, scratch_operands = 2 : i64, tpu.core_type = #tpu.core_type<tc>, window_params = [{transform_indices = @transform_0, window_bounds = array<i64: 2, 16, 32>}, {transform_indices = @transform_1, window_bounds = array<i64: 1, 32, 96>}, {transform_indices = @transform_2, window_bounds = array<i64: 1, 1, 96>}, {transform_indices = @transform_3, window_bounds = array<i64: 1, 32, 32>}, {transform_indices = @transform_4, window_bounds = array<i64: 1, 1, 32>}, {transform_indices = @transform_5, window_bounds = array<i64: 1, 1, 32>}, {transform_indices = @transform_6, window_bounds = array<i64: 1, 1, 32>}, {transform_indices = @transform_7, window_bounds = array<i64: 1, 32, 64>}, {transform_indices = @transform_8, window_bounds = array<i64: 1, 1, 64>}, {transform_indices = @transform_9, window_bounds = array<i64: 1, 64, 32>}, {transform_indices = @transform_10, window_bounds = array<i64: 1, 1, 32>}, {transform_indices = @transform_11, window_bounds = array<i64: 1, 1, 32>}, {transform_indices = @transform_12, window_bounds = array<i64: 1, 1, 32>}, {transform_indices = @transform_13, window_bounds = array<i64: 1, 1, 32>}, {transform_indices = @transform_14, window_bounds = array<i64: 1, 1, 32>}, {transform_indices = @transform_15, window_bounds = array<i64: 2, 16, 32>}]} {
    %c0_i32 = arith.constant 0 : i32
    %0 = arith.cmpi eq, %arg1, %c0_i32 : i32
    %1 = arith.extui %0 : i1 to i32
    %c0_i32_0 = arith.constant 0 : i32
    %2 = arith.cmpi ne, %1, %c0_i32_0 : i32
    scf.if %2 {
      %c0_119 = arith.constant 0 : index
      %c0_120 = arith.constant 0 : index
      %c0_121 = arith.constant 0 : index
      %334 = vector.load %arg2[%c0_119, %c0_120, %c0_121] : memref<2x16x32xf32, #tpu.memory_space<vmem>>, vector<2x16x32xf32>
      %c0_122 = arith.constant 0 : index
      %c0_123 = arith.constant 0 : index
      %c0_124 = arith.constant 0 : index
      %335 = vector.load %arg18[%c0_122, %c0_123, %c0_124] : memref<2x16x32xf32, #tpu.memory_space<vmem>>, vector<2x16x32xf32>
      tpu.vector_store %arg18[%c0_122, %c0_123, %c0_124], %334 {strides = array<i32>} : memref<2x16x32xf32, #tpu.memory_space<vmem>>, vector<2x16x32xf32>,
    } else {
    }
    %c0 = arith.constant 0 : index
    %c0_1 = arith.constant 0 : index
    %c0_2 = arith.constant 0 : index
    %3 = vector.load %arg18[%c0, %c0_1, %c0_2] : memref<2x16x32xf32, #tpu.memory_space<vmem>>, vector<2x16x32xf32>
    %4 = vector.shape_cast %3 : vector<2x16x32xf32> to vector<32x32xf32>
    %5 = arith.truncf %4 : vector<32x32xf32> to vector<32x32xbf16>
    %c0_3 = arith.constant 0 : index
    %c0_4 = arith.constant 0 : index
    %c0_5 = arith.constant 0 : index
    %6 = vector.load %arg3[%c0_3, %c0_4, %c0_5] : memref<1x32x96xbf16, #tpu.memory_space<vmem>>, vector<1x32x96xbf16>
    %7 = vector.shape_cast %6 : vector<1x32x96xbf16> to vector<32x96xbf16>
    %cst = arith.constant dense<0.000000e+00> : vector<32x96xf32>
    %8 = tpu.matmul %5, %7, %cst {dimension_numbers = #tpu.dot_dimension_numbers<[1], [0], [0], [1], [0, 0, 1, 1], [], []>} : vector<32x32xbf16>, vector<32x96xbf16>, vector<32x96xf32> -> vector<32x96xf32>
    %c0_6 = arith.constant 0 : index
    %c0_7 = arith.constant 0 : index
    %c0_8 = arith.constant 0 : index
    %9 = vector.load %arg4[%c0_6, %c0_7, %c0_8] : memref<1x1x96xf32, #tpu.memory_space<vmem>>, vector<1x1x96xf32>
    %10 = vector.shape_cast %9 : vector<1x1x96xf32> to vector<1x96xf32>
    %11 = vector.broadcast %10 : vector<1x96xf32> to vector<32x96xf32>
    %12 = arith.addf %8, %11 : vector<32x96xf32>
    %13 = vector.extract_strided_slice %12 {offsets = [0, 0], sizes = [32, 32], strides = [1, 1]} : vector<32x96xf32> to vector<32x32xf32>
    %14 = vector.shape_cast %13 : vector<32x32xf32> to vector<2x16x32xf32>
    %15 = arith.truncf %14 : vector<2x16x32xf32> to vector<2x16x32xbf16>
    %16 = vector.extract_strided_slice %12 {offsets = [0, 32], sizes = [32, 32], strides = [1, 1]} : vector<32x96xf32> to vector<32x32xf32>
    %17 = vector.shape_cast %16 : vector<32x32xf32> to vector<2x16x32xf32>
    %18 = arith.truncf %17 : vector<2x16x32xf32> to vector<2x16x32xbf16>
    %19 = vector.extract_strided_slice %12 {offsets = [0, 64], sizes = [32, 32], strides = [1, 1]} : vector<32x96xf32> to vector<32x32xf32>
    %20 = vector.shape_cast %19 : vector<32x32xf32> to vector<2x16x32xf32>
    %21 = arith.truncf %20 : vector<2x16x32xf32> to vector<2x16x32xbf16>
    %22 = vector.extract_strided_slice %15 {offsets = [0, 0, 0], sizes = [2, 16, 8], strides = [1, 1, 1]} : vector<2x16x32xbf16> to vector<2x16x8xbf16>
    %cst_9 = arith.constant 0xFF800000 : f32
    %23 = vector.broadcast %cst_9 : f32 to vector<2x16x1xf32>
    %cst_10 = arith.constant 0.000000e+00 : f32
    %24 = vector.broadcast %cst_10 : f32 to vector<2x16x1xf32>
    %cst_11 = arith.constant 0.000000e+00 : f32
    %25 = vector.broadcast %cst_11 : f32 to vector<2x16x8xf32>
    %26 = vector.extract_strided_slice %18 {offsets = [0, 0, 0], sizes = [2, 8, 8], strides = [1, 1, 1]} : vector<2x16x32xbf16> to vector<2x8x8xbf16>
    %27 = vector.extract_strided_slice %21 {offsets = [0, 0, 0], sizes = [2, 8, 8], strides = [1, 1, 1]} : vector<2x16x32xbf16> to vector<2x8x8xbf16>
    "tpu.trace_start"() <{level = 10 : i32, message = "bqd,bkd->bqk"}> : () -> ()
    %cst_12 = arith.constant dense<0.000000e+00> : vector<2x16x8xf32>
    %28 = tpu.matmul %22, %26, %cst_12 {dimension_numbers = #tpu.dot_dimension_numbers<[2], [2], [1], [1], [0, 0, 0, 1, 1, 1], [0], [0]>} : vector<2x16x8xbf16>, vector<2x8x8xbf16>, vector<2x16x8xf32> -> vector<2x16x8xf32>
    "tpu.trace_stop"() : () -> ()
    %cst_13 = arith.constant dense<0xFF800000> : vector<2x16xf32>
    %29 = vector.multi_reduction <maximumf>, %28, %cst_13 [2] : vector<2x16x8xf32> to vector<2x16xf32>
    %30 = vector.shape_cast %29 : vector<2x16xf32> to vector<2x16x1xf32>
    %31 = arith.maximumf %23, %30 : vector<2x16x1xf32>
    %32 = arith.subf %23, %31 : vector<2x16x1xf32>
    %33 = math.exp %32 : vector<2x16x1xf32>
    %34 = vector.broadcast %31 : vector<2x16x1xf32> to vector<2x16x8xf32>
    %35 = arith.subf %28, %34 : vector<2x16x8xf32>
    %36 = math.exp %35 : vector<2x16x8xf32>
    %37 = arith.mulf %33, %24 : vector<2x16x1xf32>
    %cst_14 = arith.constant dense<0.000000e+00> : vector<2x16xf32>
    %38 = vector.multi_reduction <add>, %36, %cst_14 [2] : vector<2x16x8xf32> to vector<2x16xf32>
    %39 = vector.shape_cast %38 : vector<2x16xf32> to vector<2x16x1xf32>
    %40 = arith.addf %37, %39 : vector<2x16x1xf32>
    %41 = vector.broadcast %33 : vector<2x16x1xf32> to vector<2x16x8xf32>
    %42 = arith.mulf %41, %25 : vector<2x16x8xf32>
    %43 = arith.truncf %36 : vector<2x16x8xf32> to vector<2x16x8xbf16>
    "tpu.trace_start"() <{level = 10 : i32, message = "bqk,bkd->bqd"}> : () -> ()
    %cst_15 = arith.constant dense<0.000000e+00> : vector<2x16x8xf32>
    %44 = tpu.matmul %43, %27, %cst_15 {dimension_numbers = #tpu.dot_dimension_numbers<[2], [1], [1], [2], [0, 0, 0, 1, 1, 2], [0], [0]>} : vector<2x16x8xbf16>, vector<2x8x8xbf16>, vector<2x16x8xf32> -> vector<2x16x8xf32>
    "tpu.trace_stop"() : () -> ()
    %45 = arith.addf %42, %44 : vector<2x16x8xf32>
    %46 = vector.extract_strided_slice %18 {offsets = [0, 8, 0], sizes = [2, 8, 8], strides = [1, 1, 1]} : vector<2x16x32xbf16> to vector<2x8x8xbf16>
    %47 = vector.extract_strided_slice %21 {offsets = [0, 8, 0], sizes = [2, 8, 8], strides = [1, 1, 1]} : vector<2x16x32xbf16> to vector<2x8x8xbf16>
    "tpu.trace_start"() <{level = 10 : i32, message = "bqd,bkd->bqk"}> : () -> ()
    %cst_16 = arith.constant dense<0.000000e+00> : vector<2x16x8xf32>
    %48 = tpu.matmul %22, %46, %cst_16 {dimension_numbers = #tpu.dot_dimension_numbers<[2], [2], [1], [1], [0, 0, 0, 1, 1, 1], [0], [0]>} : vector<2x16x8xbf16>, vector<2x8x8xbf16>, vector<2x16x8xf32> -> vector<2x16x8xf32>
    "tpu.trace_stop"() : () -> ()
    %cst_17 = arith.constant dense<0xFF800000> : vector<2x16xf32>
    %49 = vector.multi_reduction <maximumf>, %48, %cst_17 [2] : vector<2x16x8xf32> to vector<2x16xf32>
    %50 = vector.shape_cast %49 : vector<2x16xf32> to vector<2x16x1xf32>
    %51 = arith.maximumf %31, %50 : vector<2x16x1xf32>
    %52 = arith.subf %31, %51 : vector<2x16x1xf32>
    %53 = math.exp %52 : vector<2x16x1xf32>
    %54 = vector.broadcast %51 : vector<2x16x1xf32> to vector<2x16x8xf32>
    %55 = arith.subf %48, %54 : vector<2x16x8xf32>
    %56 = math.exp %55 : vector<2x16x8xf32>
    %57 = arith.mulf %53, %40 : vector<2x16x1xf32>
    %cst_18 = arith.constant dense<0.000000e+00> : vector<2x16xf32>
    %58 = vector.multi_reduction <add>, %56, %cst_18 [2] : vector<2x16x8xf32> to vector<2x16xf32>
    %59 = vector.shape_cast %58 : vector<2x16xf32> to vector<2x16x1xf32>
    %60 = arith.addf %57, %59 : vector<2x16x1xf32>
    %61 = vector.broadcast %53 : vector<2x16x1xf32> to vector<2x16x8xf32>
    %62 = arith.mulf %61, %45 : vector<2x16x8xf32>
    %63 = arith.truncf %56 : vector<2x16x8xf32> to vector<2x16x8xbf16>
    "tpu.trace_start"() <{level = 10 : i32, message = "bqk,bkd->bqd"}> : () -> ()
    %cst_19 = arith.constant dense<0.000000e+00> : vector<2x16x8xf32>
    %64 = tpu.matmul %63, %47, %cst_19 {dimension_numbers = #tpu.dot_dimension_numbers<[2], [1], [1], [2], [0, 0, 0, 1, 1, 2], [0], [0]>} : vector<2x16x8xbf16>, vector<2x8x8xbf16>, vector<2x16x8xf32> -> vector<2x16x8xf32>
    "tpu.trace_stop"() : () -> ()
    %65 = arith.addf %62, %64 : vector<2x16x8xf32>
    %66 = tpu.reciprocal %60 {approx = true} : vector<2x16x1xf32> -> vector<2x16x1xf32>
    %67 = vector.broadcast %66 : vector<2x16x1xf32> to vector<2x16x8xf32>
    %68 = arith.mulf %65, %67 : vector<2x16x8xf32>
    %69 = vector.shape_cast %68 : vector<2x16x8xf32> to vector<32x8xf32>
    %70 = arith.truncf %69 : vector<32x8xf32> to vector<32x8xbf16>
    %c0_20 = arith.constant 0 : index
    %c0_21 = arith.constant 0 : index
    %71 = vector.load %arg19[%c0_20, %c0_21] : memref<32x32xbf16, #tpu.memory_space<vmem>>, vector<32x8xbf16>
    tpu.vector_store %arg19[%c0_20, %c0_21], %70 {strides = array<i32>} : memref<32x32xbf16, #tpu.memory_space<vmem>>, vector<32x8xbf16>,
    %72 = vector.extract_strided_slice %15 {offsets = [0, 0, 8], sizes = [2, 16, 8], strides = [1, 1, 1]} : vector<2x16x32xbf16> to vector<2x16x8xbf16>
    %cst_22 = arith.constant 0xFF800000 : f32
    %73 = vector.broadcast %cst_22 : f32 to vector<2x16x1xf32>
    %cst_23 = arith.constant 0.000000e+00 : f32
    %74 = vector.broadcast %cst_23 : f32 to vector<2x16x1xf32>
    %cst_24 = arith.constant 0.000000e+00 : f32
    %75 = vector.broadcast %cst_24 : f32 to vector<2x16x8xf32>
    %76 = vector.extract_strided_slice %18 {offsets = [0, 0, 8], sizes = [2, 8, 8], strides = [1, 1, 1]} : vector<2x16x32xbf16> to vector<2x8x8xbf16>
    %77 = vector.extract_strided_slice %21 {offsets = [0, 0, 8], sizes = [2, 8, 8], strides = [1, 1, 1]} : vector<2x16x32xbf16> to vector<2x8x8xbf16>
    "tpu.trace_start"() <{level = 10 : i32, message = "bqd,bkd->bqk"}> : () -> ()
    %cst_25 = arith.constant dense<0.000000e+00> : vector<2x16x8xf32>
    %78 = tpu.matmul %72, %76, %cst_25 {dimension_numbers = #tpu.dot_dimension_numbers<[2], [2], [1], [1], [0, 0, 0, 1, 1, 1], [0], [0]>} : vector<2x16x8xbf16>, vector<2x8x8xbf16>, vector<2x16x8xf32> -> vector<2x16x8xf32>
    "tpu.trace_stop"() : () -> ()
    %cst_26 = arith.constant dense<0xFF800000> : vector<2x16xf32>
    %79 = vector.multi_reduction <maximumf>, %78, %cst_26 [2] : vector<2x16x8xf32> to vector<2x16xf32>
    %80 = vector.shape_cast %79 : vector<2x16xf32> to vector<2x16x1xf32>
    %81 = arith.maximumf %73, %80 : vector<2x16x1xf32>
    %82 = arith.subf %73, %81 : vector<2x16x1xf32>
    %83 = math.exp %82 : vector<2x16x1xf32>
    %84 = vector.broadcast %81 : vector<2x16x1xf32> to vector<2x16x8xf32>
    %85 = arith.subf %78, %84 : vector<2x16x8xf32>
    %86 = math.exp %85 : vector<2x16x8xf32>
    %87 = arith.mulf %83, %74 : vector<2x16x1xf32>
    %cst_27 = arith.constant dense<0.000000e+00> : vector<2x16xf32>
    %88 = vector.multi_reduction <add>, %86, %cst_27 [2] : vector<2x16x8xf32> to vector<2x16xf32>
    %89 = vector.shape_cast %88 : vector<2x16xf32> to vector<2x16x1xf32>
    %90 = arith.addf %87, %89 : vector<2x16x1xf32>
    %91 = vector.broadcast %83 : vector<2x16x1xf32> to vector<2x16x8xf32>
    %92 = arith.mulf %91, %75 : vector<2x16x8xf32>
    %93 = arith.truncf %86 : vector<2x16x8xf32> to vector<2x16x8xbf16>
    "tpu.trace_start"() <{level = 10 : i32, message = "bqk,bkd->bqd"}> : () -> ()
    %cst_28 = arith.constant dense<0.000000e+00> : vector<2x16x8xf32>
    %94 = tpu.matmul %93, %77, %cst_28 {dimension_numbers = #tpu.dot_dimension_numbers<[2], [1], [1], [2], [0, 0, 0, 1, 1, 2], [0], [0]>} : vector<2x16x8xbf16>, vector<2x8x8xbf16>, vector<2x16x8xf32> -> vector<2x16x8xf32>
    "tpu.trace_stop"() : () -> ()
    %95 = arith.addf %92, %94 : vector<2x16x8xf32>
    %96 = vector.extract_strided_slice %18 {offsets = [0, 8, 8], sizes = [2, 8, 8], strides = [1, 1, 1]} : vector<2x16x32xbf16> to vector<2x8x8xbf16>
    %97 = vector.extract_strided_slice %21 {offsets = [0, 8, 8], sizes = [2, 8, 8], strides = [1, 1, 1]} : vector<2x16x32xbf16> to vector<2x8x8xbf16>
    "tpu.trace_start"() <{level = 10 : i32, message = "bqd,bkd->bqk"}> : () -> ()
    %cst_29 = arith.constant dense<0.000000e+00> : vector<2x16x8xf32>
    %98 = tpu.matmul %72, %96, %cst_29 {dimension_numbers = #tpu.dot_dimension_numbers<[2], [2], [1], [1], [0, 0, 0, 1, 1, 1], [0], [0]>} : vector<2x16x8xbf16>, vector<2x8x8xbf16>, vector<2x16x8xf32> -> vector<2x16x8xf32>
    "tpu.trace_stop"() : () -> ()
    %cst_30 = arith.constant dense<0xFF800000> : vector<2x16xf32>
    %99 = vector.multi_reduction <maximumf>, %98, %cst_30 [2] : vector<2x16x8xf32> to vector<2x16xf32>
    %100 = vector.shape_cast %99 : vector<2x16xf32> to vector<2x16x1xf32>
    %101 = arith.maximumf %81, %100 : vector<2x16x1xf32>
    %102 = arith.subf %81, %101 : vector<2x16x1xf32>
    %103 = math.exp %102 : vector<2x16x1xf32>
    %104 = vector.broadcast %101 : vector<2x16x1xf32> to vector<2x16x8xf32>
    %105 = arith.subf %98, %104 : vector<2x16x8xf32>
    %106 = math.exp %105 : vector<2x16x8xf32>
    %107 = arith.mulf %103, %90 : vector<2x16x1xf32>
    %cst_31 = arith.constant dense<0.000000e+00> : vector<2x16xf32>
    %108 = vector.multi_reduction <add>, %106, %cst_31 [2] : vector<2x16x8xf32> to vector<2x16xf32>
    %109 = vector.shape_cast %108 : vector<2x16xf32> to vector<2x16x1xf32>
    %110 = arith.addf %107, %109 : vector<2x16x1xf32>
    %111 = vector.broadcast %103 : vector<2x16x1xf32> to vector<2x16x8xf32>
    %112 = arith.mulf %111, %95 : vector<2x16x8xf32>
    %113 = arith.truncf %106 : vector<2x16x8xf32> to vector<2x16x8xbf16>
    "tpu.trace_start"() <{level = 10 : i32, message = "bqk,bkd->bqd"}> : () -> ()
    %cst_32 = arith.constant dense<0.000000e+00> : vector<2x16x8xf32>
    %114 = tpu.matmul %113, %97, %cst_32 {dimension_numbers = #tpu.dot_dimension_numbers<[2], [1], [1], [2], [0, 0, 0, 1, 1, 2], [0], [0]>} : vector<2x16x8xbf16>, vector<2x8x8xbf16>, vector<2x16x8xf32> -> vector<2x16x8xf32>
    "tpu.trace_stop"() : () -> ()
    %115 = arith.addf %112, %114 : vector<2x16x8xf32>
    %116 = tpu.reciprocal %110 {approx = true} : vector<2x16x1xf32> -> vector<2x16x1xf32>
    %117 = vector.broadcast %116 : vector<2x16x1xf32> to vector<2x16x8xf32>
    %118 = arith.mulf %115, %117 : vector<2x16x8xf32>
    %119 = vector.shape_cast %118 : vector<2x16x8xf32> to vector<32x8xf32>
    %120 = arith.truncf %119 : vector<32x8xf32> to vector<32x8xbf16>
    %c0_33 = arith.constant 0 : index
    %c8 = arith.constant 8 : index
    %121 = vector.load %arg19[%c0_33, %c8] : memref<32x32xbf16, #tpu.memory_space<vmem>>, vector<32x8xbf16>
    tpu.vector_store %arg19[%c0_33, %c8], %120 {strides = array<i32>} : memref<32x32xbf16, #tpu.memory_space<vmem>>, vector<32x8xbf16>,
    %122 = vector.extract_strided_slice %15 {offsets = [0, 0, 16], sizes = [2, 16, 8], strides = [1, 1, 1]} : vector<2x16x32xbf16> to vector<2x16x8xbf16>
    %cst_34 = arith.constant 0xFF800000 : f32
    %123 = vector.broadcast %cst_34 : f32 to vector<2x16x1xf32>
    %cst_35 = arith.constant 0.000000e+00 : f32
    %124 = vector.broadcast %cst_35 : f32 to vector<2x16x1xf32>
    %cst_36 = arith.constant 0.000000e+00 : f32
    %125 = vector.broadcast %cst_36 : f32 to vector<2x16x8xf32>
    %126 = vector.extract_strided_slice %18 {offsets = [0, 0, 16], sizes = [2, 8, 8], strides = [1, 1, 1]} : vector<2x16x32xbf16> to vector<2x8x8xbf16>
    %127 = vector.extract_strided_slice %21 {offsets = [0, 0, 16], sizes = [2, 8, 8], strides = [1, 1, 1]} : vector<2x16x32xbf16> to vector<2x8x8xbf16>
    "tpu.trace_start"() <{level = 10 : i32, message = "bqd,bkd->bqk"}> : () -> ()
    %cst_37 = arith.constant dense<0.000000e+00> : vector<2x16x8xf32>
    %128 = tpu.matmul %122, %126, %cst_37 {dimension_numbers = #tpu.dot_dimension_numbers<[2], [2], [1], [1], [0, 0, 0, 1, 1, 1], [0], [0]>} : vector<2x16x8xbf16>, vector<2x8x8xbf16>, vector<2x16x8xf32> -> vector<2x16x8xf32>
    "tpu.trace_stop"() : () -> ()
    %cst_38 = arith.constant dense<0xFF800000> : vector<2x16xf32>
    %129 = vector.multi_reduction <maximumf>, %128, %cst_38 [2] : vector<2x16x8xf32> to vector<2x16xf32>
    %130 = vector.shape_cast %129 : vector<2x16xf32> to vector<2x16x1xf32>
    %131 = arith.maximumf %123, %130 : vector<2x16x1xf32>
    %132 = arith.subf %123, %131 : vector<2x16x1xf32>
    %133 = math.exp %132 : vector<2x16x1xf32>
    %134 = vector.broadcast %131 : vector<2x16x1xf32> to vector<2x16x8xf32>
    %135 = arith.subf %128, %134 : vector<2x16x8xf32>
    %136 = math.exp %135 : vector<2x16x8xf32>
    %137 = arith.mulf %133, %124 : vector<2x16x1xf32>
    %cst_39 = arith.constant dense<0.000000e+00> : vector<2x16xf32>
    %138 = vector.multi_reduction <add>, %136, %cst_39 [2] : vector<2x16x8xf32> to vector<2x16xf32>
    %139 = vector.shape_cast %138 : vector<2x16xf32> to vector<2x16x1xf32>
    %140 = arith.addf %137, %139 : vector<2x16x1xf32>
    %141 = vector.broadcast %133 : vector<2x16x1xf32> to vector<2x16x8xf32>
    %142 = arith.mulf %141, %125 : vector<2x16x8xf32>
    %143 = arith.truncf %136 : vector<2x16x8xf32> to vector<2x16x8xbf16>
    "tpu.trace_start"() <{level = 10 : i32, message = "bqk,bkd->bqd"}> : () -> ()
    %cst_40 = arith.constant dense<0.000000e+00> : vector<2x16x8xf32>
    %144 = tpu.matmul %143, %127, %cst_40 {dimension_numbers = #tpu.dot_dimension_numbers<[2], [1], [1], [2], [0, 0, 0, 1, 1, 2], [0], [0]>} : vector<2x16x8xbf16>, vector<2x8x8xbf16>, vector<2x16x8xf32> -> vector<2x16x8xf32>
    "tpu.trace_stop"() : () -> ()
    %145 = arith.addf %142, %144 : vector<2x16x8xf32>
    %146 = vector.extract_strided_slice %18 {offsets = [0, 8, 16], sizes = [2, 8, 8], strides = [1, 1, 1]} : vector<2x16x32xbf16> to vector<2x8x8xbf16>
    %147 = vector.extract_strided_slice %21 {offsets = [0, 8, 16], sizes = [2, 8, 8], strides = [1, 1, 1]} : vector<2x16x32xbf16> to vector<2x8x8xbf16>
    "tpu.trace_start"() <{level = 10 : i32, message = "bqd,bkd->bqk"}> : () -> ()
    %cst_41 = arith.constant dense<0.000000e+00> : vector<2x16x8xf32>
    %148 = tpu.matmul %122, %146, %cst_41 {dimension_numbers = #tpu.dot_dimension_numbers<[2], [2], [1], [1], [0, 0, 0, 1, 1, 1], [0], [0]>} : vector<2x16x8xbf16>, vector<2x8x8xbf16>, vector<2x16x8xf32> -> vector<2x16x8xf32>
    "tpu.trace_stop"() : () -> ()
    %cst_42 = arith.constant dense<0xFF800000> : vector<2x16xf32>
    %149 = vector.multi_reduction <maximumf>, %148, %cst_42 [2] : vector<2x16x8xf32> to vector<2x16xf32>
    %150 = vector.shape_cast %149 : vector<2x16xf32> to vector<2x16x1xf32>
    %151 = arith.maximumf %131, %150 : vector<2x16x1xf32>
    %152 = arith.subf %131, %151 : vector<2x16x1xf32>
    %153 = math.exp %152 : vector<2x16x1xf32>
    %154 = vector.broadcast %151 : vector<2x16x1xf32> to vector<2x16x8xf32>
    %155 = arith.subf %148, %154 : vector<2x16x8xf32>
    %156 = math.exp %155 : vector<2x16x8xf32>
    %157 = arith.mulf %153, %140 : vector<2x16x1xf32>
    %cst_43 = arith.constant dense<0.000000e+00> : vector<2x16xf32>
    %158 = vector.multi_reduction <add>, %156, %cst_43 [2] : vector<2x16x8xf32> to vector<2x16xf32>
    %159 = vector.shape_cast %158 : vector<2x16xf32> to vector<2x16x1xf32>
    %160 = arith.addf %157, %159 : vector<2x16x1xf32>
    %161 = vector.broadcast %153 : vector<2x16x1xf32> to vector<2x16x8xf32>
    %162 = arith.mulf %161, %145 : vector<2x16x8xf32>
    %163 = arith.truncf %156 : vector<2x16x8xf32> to vector<2x16x8xbf16>
    "tpu.trace_start"() <{level = 10 : i32, message = "bqk,bkd->bqd"}> : () -> ()
    %cst_44 = arith.constant dense<0.000000e+00> : vector<2x16x8xf32>
    %164 = tpu.matmul %163, %147, %cst_44 {dimension_numbers = #tpu.dot_dimension_numbers<[2], [1], [1], [2], [0, 0, 0, 1, 1, 2], [0], [0]>} : vector<2x16x8xbf16>, vector<2x8x8xbf16>, vector<2x16x8xf32> -> vector<2x16x8xf32>
    "tpu.trace_stop"() : () -> ()
    %165 = arith.addf %162, %164 : vector<2x16x8xf32>
    %166 = tpu.reciprocal %160 {approx = true} : vector<2x16x1xf32> -> vector<2x16x1xf32>
    %167 = vector.broadcast %166 : vector<2x16x1xf32> to vector<2x16x8xf32>
    %168 = arith.mulf %165, %167 : vector<2x16x8xf32>
    %169 = vector.shape_cast %168 : vector<2x16x8xf32> to vector<32x8xf32>
    %170 = arith.truncf %169 : vector<32x8xf32> to vector<32x8xbf16>
    %c0_45 = arith.constant 0 : index
    %c16 = arith.constant 16 : index
    %171 = vector.load %arg19[%c0_45, %c16] : memref<32x32xbf16, #tpu.memory_space<vmem>>, vector<32x8xbf16>
    tpu.vector_store %arg19[%c0_45, %c16], %170 {strides = array<i32>} : memref<32x32xbf16, #tpu.memory_space<vmem>>, vector<32x8xbf16>,
    %172 = vector.extract_strided_slice %15 {offsets = [0, 0, 24], sizes = [2, 16, 8], strides = [1, 1, 1]} : vector<2x16x32xbf16> to vector<2x16x8xbf16>
    %cst_46 = arith.constant 0xFF800000 : f32
    %173 = vector.broadcast %cst_46 : f32 to vector<2x16x1xf32>
    %cst_47 = arith.constant 0.000000e+00 : f32
    %174 = vector.broadcast %cst_47 : f32 to vector<2x16x1xf32>
    %cst_48 = arith.constant 0.000000e+00 : f32
    %175 = vector.broadcast %cst_48 : f32 to vector<2x16x8xf32>
    %176 = vector.extract_strided_slice %18 {offsets = [0, 0, 24], sizes = [2, 8, 8], strides = [1, 1, 1]} : vector<2x16x32xbf16> to vector<2x8x8xbf16>
    %177 = vector.extract_strided_slice %21 {offsets = [0, 0, 24], sizes = [2, 8, 8], strides = [1, 1, 1]} : vector<2x16x32xbf16> to vector<2x8x8xbf16>
    "tpu.trace_start"() <{level = 10 : i32, message = "bqd,bkd->bqk"}> : () -> ()
    %cst_49 = arith.constant dense<0.000000e+00> : vector<2x16x8xf32>
    %178 = tpu.matmul %172, %176, %cst_49 {dimension_numbers = #tpu.dot_dimension_numbers<[2], [2], [1], [1], [0, 0, 0, 1, 1, 1], [0], [0]>} : vector<2x16x8xbf16>, vector<2x8x8xbf16>, vector<2x16x8xf32> -> vector<2x16x8xf32>
    "tpu.trace_stop"() : () -> ()
    %cst_50 = arith.constant dense<0xFF800000> : vector<2x16xf32>
    %179 = vector.multi_reduction <maximumf>, %178, %cst_50 [2] : vector<2x16x8xf32> to vector<2x16xf32>
    %180 = vector.shape_cast %179 : vector<2x16xf32> to vector<2x16x1xf32>
    %181 = arith.maximumf %173, %180 : vector<2x16x1xf32>
    %182 = arith.subf %173, %181 : vector<2x16x1xf32>
    %183 = math.exp %182 : vector<2x16x1xf32>
    %184 = vector.broadcast %181 : vector<2x16x1xf32> to vector<2x16x8xf32>
    %185 = arith.subf %178, %184 : vector<2x16x8xf32>
    %186 = math.exp %185 : vector<2x16x8xf32>
    %187 = arith.mulf %183, %174 : vector<2x16x1xf32>
    %cst_51 = arith.constant dense<0.000000e+00> : vector<2x16xf32>
    %188 = vector.multi_reduction <add>, %186, %cst_51 [2] : vector<2x16x8xf32> to vector<2x16xf32>
    %189 = vector.shape_cast %188 : vector<2x16xf32> to vector<2x16x1xf32>
    %190 = arith.addf %187, %189 : vector<2x16x1xf32>
    %191 = vector.broadcast %183 : vector<2x16x1xf32> to vector<2x16x8xf32>
    %192 = arith.mulf %191, %175 : vector<2x16x8xf32>
    %193 = arith.truncf %186 : vector<2x16x8xf32> to vector<2x16x8xbf16>
    "tpu.trace_start"() <{level = 10 : i32, message = "bqk,bkd->bqd"}> : () -> ()
    %cst_52 = arith.constant dense<0.000000e+00> : vector<2x16x8xf32>
    %194 = tpu.matmul %193, %177, %cst_52 {dimension_numbers = #tpu.dot_dimension_numbers<[2], [1], [1], [2], [0, 0, 0, 1, 1, 2], [0], [0]>} : vector<2x16x8xbf16>, vector<2x8x8xbf16>, vector<2x16x8xf32> -> vector<2x16x8xf32>
    "tpu.trace_stop"() : () -> ()
    %195 = arith.addf %192, %194 : vector<2x16x8xf32>
    %196 = vector.extract_strided_slice %18 {offsets = [0, 8, 24], sizes = [2, 8, 8], strides = [1, 1, 1]} : vector<2x16x32xbf16> to vector<2x8x8xbf16>
    %197 = vector.extract_strided_slice %21 {offsets = [0, 8, 24], sizes = [2, 8, 8], strides = [1, 1, 1]} : vector<2x16x32xbf16> to vector<2x8x8xbf16>
    "tpu.trace_start"() <{level = 10 : i32, message = "bqd,bkd->bqk"}> : () -> ()
    %cst_53 = arith.constant dense<0.000000e+00> : vector<2x16x8xf32>
    %198 = tpu.matmul %172, %196, %cst_53 {dimension_numbers = #tpu.dot_dimension_numbers<[2], [2], [1], [1], [0, 0, 0, 1, 1, 1], [0], [0]>} : vector<2x16x8xbf16>, vector<2x8x8xbf16>, vector<2x16x8xf32> -> vector<2x16x8xf32>
    "tpu.trace_stop"() : () -> ()
    %cst_54 = arith.constant dense<0xFF800000> : vector<2x16xf32>
    %199 = vector.multi_reduction <maximumf>, %198, %cst_54 [2] : vector<2x16x8xf32> to vector<2x16xf32>
    %200 = vector.shape_cast %199 : vector<2x16xf32> to vector<2x16x1xf32>
    %201 = arith.maximumf %181, %200 : vector<2x16x1xf32>
    %202 = arith.subf %181, %201 : vector<2x16x1xf32>
    %203 = math.exp %202 : vector<2x16x1xf32>
    %204 = vector.broadcast %201 : vector<2x16x1xf32> to vector<2x16x8xf32>
    %205 = arith.subf %198, %204 : vector<2x16x8xf32>
    %206 = math.exp %205 : vector<2x16x8xf32>
    %207 = arith.mulf %203, %190 : vector<2x16x1xf32>
    %cst_55 = arith.constant dense<0.000000e+00> : vector<2x16xf32>
    %208 = vector.multi_reduction <add>, %206, %cst_55 [2] : vector<2x16x8xf32> to vector<2x16xf32>
    %209 = vector.shape_cast %208 : vector<2x16xf32> to vector<2x16x1xf32>
    %210 = arith.addf %207, %209 : vector<2x16x1xf32>
    %211 = vector.broadcast %203 : vector<2x16x1xf32> to vector<2x16x8xf32>
    %212 = arith.mulf %211, %195 : vector<2x16x8xf32>
    %213 = arith.truncf %206 : vector<2x16x8xf32> to vector<2x16x8xbf16>
    "tpu.trace_start"() <{level = 10 : i32, message = "bqk,bkd->bqd"}> : () -> ()
    %cst_56 = arith.constant dense<0.000000e+00> : vector<2x16x8xf32>
    %214 = tpu.matmul %213, %197, %cst_56 {dimension_numbers = #tpu.dot_dimension_numbers<[2], [1], [1], [2], [0, 0, 0, 1, 1, 2], [0], [0]>} : vector<2x16x8xbf16>, vector<2x8x8xbf16>, vector<2x16x8xf32> -> vector<2x16x8xf32>
    "tpu.trace_stop"() : () -> ()
    %215 = arith.addf %212, %214 : vector<2x16x8xf32>
    %216 = tpu.reciprocal %210 {approx = true} : vector<2x16x1xf32> -> vector<2x16x1xf32>
    %217 = vector.broadcast %216 : vector<2x16x1xf32> to vector<2x16x8xf32>
    %218 = arith.mulf %215, %217 : vector<2x16x8xf32>
    %219 = vector.shape_cast %218 : vector<2x16x8xf32> to vector<32x8xf32>
    %220 = arith.truncf %219 : vector<32x8xf32> to vector<32x8xbf16>
    %c0_57 = arith.constant 0 : index
    %c24 = arith.constant 24 : index
    %221 = vector.load %arg19[%c0_57, %c24] : memref<32x32xbf16, #tpu.memory_space<vmem>>, vector<32x8xbf16>
    tpu.vector_store %arg19[%c0_57, %c24], %220 {strides = array<i32>} : memref<32x32xbf16, #tpu.memory_space<vmem>>, vector<32x8xbf16>,
    %c0_58 = arith.constant 0 : index
    %c0_59 = arith.constant 0 : index
    %222 = vector.load %arg19[%c0_58, %c0_59] : memref<32x32xbf16, #tpu.memory_space<vmem>>, vector<32x32xbf16>
    %c0_60 = arith.constant 0 : index
    %c0_61 = arith.constant 0 : index
    %c0_62 = arith.constant 0 : index
    %223 = vector.load %arg5[%c0_60, %c0_61, %c0_62] : memref<1x32x32xbf16, #tpu.memory_space<vmem>>, vector<1x32x32xbf16>
    %224 = vector.shape_cast %223 : vector<1x32x32xbf16> to vector<32x32xbf16>
    %cst_63 = arith.constant dense<0.000000e+00> : vector<32x32xf32>
    %225 = tpu.matmul %222, %224, %cst_63 {dimension_numbers = #tpu.dot_dimension_numbers<[1], [0], [0], [1], [0, 0, 1, 1], [], []>} : vector<32x32xbf16>, vector<32x32xbf16>, vector<32x32xf32> -> vector<32x32xf32>
    %c0_64 = arith.constant 0 : index
    %c0_65 = arith.constant 0 : index
    %c0_66 = arith.constant 0 : index
    %226 = vector.load %arg6[%c0_64, %c0_65, %c0_66] : memref<1x1x32xf32, #tpu.memory_space<vmem>>, vector<1x1x32xf32>
    %227 = vector.shape_cast %226 : vector<1x1x32xf32> to vector<1x32xf32>
    %228 = vector.broadcast %227 : vector<1x32xf32> to vector<32x32xf32>
    %229 = arith.addf %225, %228 : vector<32x32xf32>
    %230 = arith.addf %4, %229 : vector<32x32xf32>
    %c0_67 = arith.constant 0 : index
    %c0_68 = arith.constant 0 : index
    %c0_69 = arith.constant 0 : index
    %231 = vector.load %arg7[%c0_67, %c0_68, %c0_69] : memref<1x1x32xf32, #tpu.memory_space<vmem>>, vector<1x1x32xf32>
    %232 = vector.shape_cast %231 : vector<1x1x32xf32> to vector<1x32xf32>
    %c0_70 = arith.constant 0 : index
    %c0_71 = arith.constant 0 : index
    %c0_72 = arith.constant 0 : index
    %233 = vector.load %arg8[%c0_70, %c0_71, %c0_72] : memref<1x1x32xf32, #tpu.memory_space<vmem>>, vector<1x1x32xf32>
    %234 = vector.shape_cast %233 : vector<1x1x32xf32> to vector<1x32xf32>
    %cst_73 = arith.constant dense<0.000000e+00> : vector<32xf32>
    %235 = vector.multi_reduction <add>, %230, %cst_73 [1] : vector<32x32xf32> to vector<32xf32>
    %236 = vector.shape_cast %235 : vector<32xf32> to vector<32x1xf32>
    %cst_74 = arith.constant 3.200000e+01 : f32
    %237 = vector.broadcast %cst_74 : f32 to vector<32x1xf32>
    %238 = arith.divf %236, %237 : vector<32x1xf32>
    %239 = vector.broadcast %238 : vector<32x1xf32> to vector<32x32xf32>
    %240 = arith.subf %230, %239 : vector<32x32xf32>
    %241 = arith.mulf %240, %240 : vector<32x32xf32>
    %cst_75 = arith.constant dense<0.000000e+00> : vector<32xf32>
    %242 = vector.multi_reduction <add>, %241, %cst_75 [1] : vector<32x32xf32> to vector<32xf32>
    %243 = vector.shape_cast %242 : vector<32xf32> to vector<32x1xf32>
    %cst_76 = arith.constant 3.200000e+01 : f32
    %244 = vector.broadcast %cst_76 : f32 to vector<32x1xf32>
    %245 = arith.divf %243, %244 : vector<32x1xf32>
    %246 = vector.broadcast %238 : vector<32x1xf32> to vector<32x32xf32>
    %247 = arith.subf %230, %246 : vector<32x32xf32>
    %cst_77 = arith.constant 9.99999974E-6 : f32
    %248 = vector.broadcast %cst_77 : f32 to vector<32x1xf32>
    %249 = arith.addf %245, %248 : vector<32x1xf32>
    %250 = math.rsqrt %249 : vector<32x1xf32>
    %251 = vector.broadcast %250 : vector<32x1xf32> to vector<32x32xf32>
    %252 = arith.mulf %247, %251 : vector<32x32xf32>
    %253 = vector.broadcast %232 : vector<1x32xf32> to vector<32x32xf32>
    %254 = arith.mulf %252, %253 : vector<32x32xf32>
    %255 = vector.broadcast %234 : vector<1x32xf32> to vector<32x32xf32>
    %256 = arith.addf %254, %255 : vector<32x32xf32>
    %257 = arith.truncf %256 : vector<32x32xf32> to vector<32x32xbf16>
    %c0_78 = arith.constant 0 : index
    %c0_79 = arith.constant 0 : index
    %c0_80 = arith.constant 0 : index
    %258 = vector.load %arg9[%c0_78, %c0_79, %c0_80] : memref<1x32x64xbf16, #tpu.memory_space<vmem>>, vector<1x32x64xbf16>
    %259 = vector.shape_cast %258 : vector<1x32x64xbf16> to vector<32x64xbf16>
    %cst_81 = arith.constant dense<0.000000e+00> : vector<32x64xf32>
    %260 = tpu.matmul %257, %259, %cst_81 {dimension_numbers = #tpu.dot_dimension_numbers<[1], [0], [0], [1], [0, 0, 1, 1], [], []>} : vector<32x32xbf16>, vector<32x64xbf16>, vector<32x64xf32> -> vector<32x64xf32>
    %c0_82 = arith.constant 0 : index
    %c0_83 = arith.constant 0 : index
    %c0_84 = arith.constant 0 : index
    %261 = vector.load %arg10[%c0_82, %c0_83, %c0_84] : memref<1x1x64xf32, #tpu.memory_space<vmem>>, vector<1x1x64xf32>
    %262 = vector.shape_cast %261 : vector<1x1x64xf32> to vector<1x64xf32>
    %263 = vector.broadcast %262 : vector<1x64xf32> to vector<32x64xf32>
    %264 = arith.addf %260, %263 : vector<32x64xf32>
    %cst_85 = arith.constant 0.000000e+00 : f32
    %265 = vector.broadcast %cst_85 : f32 to vector<32x64xf32>
    %266 = arith.maximumf %264, %265 : vector<32x64xf32>
    %267 = arith.truncf %266 : vector<32x64xf32> to vector<32x64xbf16>
    %c0_86 = arith.constant 0 : index
    %c0_87 = arith.constant 0 : index
    %c0_88 = arith.constant 0 : index
    %268 = vector.load %arg11[%c0_86, %c0_87, %c0_88] : memref<1x64x32xbf16, #tpu.memory_space<vmem>>, vector<1x64x32xbf16>
    %269 = vector.shape_cast %268 : vector<1x64x32xbf16> to vector<64x32xbf16>
    %cst_89 = arith.constant dense<0.000000e+00> : vector<32x32xf32>
    %270 = tpu.matmul %267, %269, %cst_89 {dimension_numbers = #tpu.dot_dimension_numbers<[1], [0], [0], [1], [0, 0, 1, 1], [], []>} : vector<32x64xbf16>, vector<64x32xbf16>, vector<32x32xf32> -> vector<32x32xf32>
    %c0_90 = arith.constant 0 : index
    %c0_91 = arith.constant 0 : index
    %c0_92 = arith.constant 0 : index
    %271 = vector.load %arg12[%c0_90, %c0_91, %c0_92] : memref<1x1x32xf32, #tpu.memory_space<vmem>>, vector<1x1x32xf32>
    %272 = vector.shape_cast %271 : vector<1x1x32xf32> to vector<1x32xf32>
    %273 = vector.broadcast %272 : vector<1x32xf32> to vector<32x32xf32>
    %274 = arith.addf %270, %273 : vector<32x32xf32>
    %275 = arith.addf %256, %274 : vector<32x32xf32>
    %c0_93 = arith.constant 0 : index
    %c0_94 = arith.constant 0 : index
    %c0_95 = arith.constant 0 : index
    %276 = vector.load %arg13[%c0_93, %c0_94, %c0_95] : memref<1x1x32xf32, #tpu.memory_space<vmem>>, vector<1x1x32xf32>
    %277 = vector.shape_cast %276 : vector<1x1x32xf32> to vector<1x32xf32>
    %c0_96 = arith.constant 0 : index
    %c0_97 = arith.constant 0 : index
    %c0_98 = arith.constant 0 : index
    %278 = vector.load %arg14[%c0_96, %c0_97, %c0_98] : memref<1x1x32xf32, #tpu.memory_space<vmem>>, vector<1x1x32xf32>
    %279 = vector.shape_cast %278 : vector<1x1x32xf32> to vector<1x32xf32>
    %cst_99 = arith.constant dense<0.000000e+00> : vector<32xf32>
    %280 = vector.multi_reduction <add>, %275, %cst_99 [1] : vector<32x32xf32> to vector<32xf32>
    %281 = vector.shape_cast %280 : vector<32xf32> to vector<32x1xf32>
    %cst_100 = arith.constant 3.200000e+01 : f32
    %282 = vector.broadcast %cst_100 : f32 to vector<32x1xf32>
    %283 = arith.divf %281, %282 : vector<32x1xf32>
    %284 = vector.broadcast %283 : vector<32x1xf32> to vector<32x32xf32>
    %285 = arith.subf %275, %284 : vector<32x32xf32>
    %286 = arith.mulf %285, %285 : vector<32x32xf32>
    %cst_101 = arith.constant dense<0.000000e+00> : vector<32xf32>
    %287 = vector.multi_reduction <add>, %286, %cst_101 [1] : vector<32x32xf32> to vector<32xf32>
    %288 = vector.shape_cast %287 : vector<32xf32> to vector<32x1xf32>
    %cst_102 = arith.constant 3.200000e+01 : f32
    %289 = vector.broadcast %cst_102 : f32 to vector<32x1xf32>
    %290 = arith.divf %288, %289 : vector<32x1xf32>
    %291 = vector.broadcast %283 : vector<32x1xf32> to vector<32x32xf32>
    %292 = arith.subf %275, %291 : vector<32x32xf32>
    %cst_103 = arith.constant 9.99999974E-6 : f32
    %293 = vector.broadcast %cst_103 : f32 to vector<32x1xf32>
    %294 = arith.addf %290, %293 : vector<32x1xf32>
    %295 = math.rsqrt %294 : vector<32x1xf32>
    %296 = vector.broadcast %295 : vector<32x1xf32> to vector<32x32xf32>
    %297 = arith.mulf %292, %296 : vector<32x32xf32>
    %298 = vector.broadcast %277 : vector<1x32xf32> to vector<32x32xf32>
    %299 = arith.mulf %297, %298 : vector<32x32xf32>
    %300 = vector.broadcast %279 : vector<1x32xf32> to vector<32x32xf32>
    %301 = arith.addf %299, %300 : vector<32x32xf32>
    %302 = arith.addf %301, %4 : vector<32x32xf32>
    %c0_104 = arith.constant 0 : index
    %c0_105 = arith.constant 0 : index
    %c0_106 = arith.constant 0 : index
    %303 = vector.load %arg15[%c0_104, %c0_105, %c0_106] : memref<1x1x32xf32, #tpu.memory_space<vmem>>, vector<1x1x32xf32>
    %304 = vector.shape_cast %303 : vector<1x1x32xf32> to vector<1x32xf32>
    %c0_107 = arith.constant 0 : index
    %c0_108 = arith.constant 0 : index
    %c0_109 = arith.constant 0 : index
    %305 = vector.load %arg16[%c0_107, %c0_108, %c0_109] : memref<1x1x32xf32, #tpu.memory_space<vmem>>, vector<1x1x32xf32>
    %306 = vector.shape_cast %305 : vector<1x1x32xf32> to vector<1x32xf32>
    %cst_110 = arith.constant dense<0.000000e+00> : vector<32xf32>
    %307 = vector.multi_reduction <add>, %302, %cst_110 [1] : vector<32x32xf32> to vector<32xf32>
    %308 = vector.shape_cast %307 : vector<32xf32> to vector<32x1xf32>
    %cst_111 = arith.constant 3.200000e+01 : f32
    %309 = vector.broadcast %cst_111 : f32 to vector<32x1xf32>
    %310 = arith.divf %308, %309 : vector<32x1xf32>
    %311 = vector.broadcast %310 : vector<32x1xf32> to vector<32x32xf32>
    %312 = arith.subf %302, %311 : vector<32x32xf32>
    %313 = arith.mulf %312, %312 : vector<32x32xf32>
    %cst_112 = arith.constant dense<0.000000e+00> : vector<32xf32>
    %314 = vector.multi_reduction <add>, %313, %cst_112 [1] : vector<32x32xf32> to vector<32xf32>
    %315 = vector.shape_cast %314 : vector<32xf32> to vector<32x1xf32>
    %cst_113 = arith.constant 3.200000e+01 : f32
    %316 = vector.broadcast %cst_113 : f32 to vector<32x1xf32>
    %317 = arith.divf %315, %316 : vector<32x1xf32>
    %318 = vector.broadcast %310 : vector<32x1xf32> to vector<32x32xf32>
    %319 = arith.subf %302, %318 : vector<32x32xf32>
    %cst_114 = arith.constant 9.99999974E-6 : f32
    %320 = vector.broadcast %cst_114 : f32 to vector<32x1xf32>
    %321 = arith.addf %317, %320 : vector<32x1xf32>
    %322 = math.rsqrt %321 : vector<32x1xf32>
    %323 = vector.broadcast %322 : vector<32x1xf32> to vector<32x32xf32>
    %324 = arith.mulf %319, %323 : vector<32x32xf32>
    %325 = vector.broadcast %304 : vector<1x32xf32> to vector<32x32xf32>
    %326 = arith.mulf %324, %325 : vector<32x32xf32>
    %327 = vector.broadcast %306 : vector<1x32xf32> to vector<32x32xf32>
    %328 = arith.addf %326, %327 : vector<32x32xf32>
    %329 = vector.shape_cast %328 : vector<32x32xf32> to vector<2x16x32xf32>
    %c0_115 = arith.constant 0 : index
    %c0_116 = arith.constant 0 : index
    %c0_117 = arith.constant 0 : index
    %330 = vector.load %arg18[%c0_115, %c0_116, %c0_117] : memref<2x16x32xf32, #tpu.memory_space<vmem>>, vector<2x16x32xf32>
    tpu.vector_store %arg18[%c0_115, %c0_116, %c0_117], %329 {strides = array<i32>} : memref<2x16x32xf32, #tpu.memory_space<vmem>>, vector<2x16x32xf32>,
    %c1_i32 = arith.constant 1 : i32
    %331 = arith.cmpi eq, %arg1, %c1_i32 : i32
    %332 = arith.extui %331 : i1 to i32
    %c0_i32_118 = arith.constant 0 : i32
    %333 = arith.cmpi ne, %332, %c0_i32_118 : i32
    scf.if %333 {
      %c0_119 = arith.constant 0 : index
      %c0_120 = arith.constant 0 : index
      %c0_121 = arith.constant 0 : index
      %334 = vector.load %arg17[%c0_119, %c0_120, %c0_121] : memref<2x16x32xf32, #tpu.memory_space<vmem>>, vector<2x16x32xf32>
      tpu.vector_store %arg17[%c0_119, %c0_120, %c0_121], %329 {strides = array<i32>} : memref<2x16x32xf32, #tpu.memory_space<vmem>>, vector<2x16x32xf32>,
    } else {
    }
    return
  }
  func.func @transform_0(%arg0: i32, %arg1: i32) -> (i32, i32, i32) {
    %c0_i32 = arith.constant 0 : i32
    %c0_i32_0 = arith.constant 0 : i32
    %c0_i32_1 = arith.constant 0 : i32
    return %arg0, %c0_i32, %c0_i32_0 : i32, i32, i32
  }
  func.func @transform_1(%arg0: i32, %arg1: i32) -> (i32, i32, i32) {
    %c0_i32 = arith.constant 0 : i32
    %c0_i32_0 = arith.constant 0 : i32
    %c0_i32_1 = arith.constant 0 : i32
    return %arg1, %c0_i32, %c0_i32_0 : i32, i32, i32
  }
  func.func @transform_2(%arg0: i32, %arg1: i32) -> (i32, i32, i32) {
    %c0_i32 = arith.constant 0 : i32
    %c0_i32_0 = arith.constant 0 : i32
    %c0_i32_1 = arith.constant 0 : i32
    return %arg1, %c0_i32, %c0_i32_0 : i32, i32, i32
  }
  func.func @transform_3(%arg0: i32, %arg1: i32) -> (i32, i32, i32) {
    %c0_i32 = arith.constant 0 : i32
    %c0_i32_0 = arith.constant 0 : i32
    %c0_i32_1 = arith.constant 0 : i32
    return %arg1, %c0_i32, %c0_i32_0 : i32, i32, i32
  }
  func.func @transform_4(%arg0: i32, %arg1: i32) -> (i32, i32, i32) {
    %c0_i32 = arith.constant 0 : i32
    %c0_i32_0 = arith.constant 0 : i32
    %c0_i32_1 = arith.constant 0 : i32
    return %arg1, %c0_i32, %c0_i32_0 : i32, i32, i32
  }
  func.func @transform_5(%arg0: i32, %arg1: i32) -> (i32, i32, i32) {
    %c0_i32 = arith.constant 0 : i32
    %c0_i32_0 = arith.constant 0 : i32
    %c0_i32_1 = arith.constant 0 : i32
    return %arg1, %c0_i32, %c0_i32_0 : i32, i32, i32
  }
  func.func @transform_6(%arg0: i32, %arg1: i32) -> (i32, i32, i32) {
    %c0_i32 = arith.constant 0 : i32
    %c0_i32_0 = arith.constant 0 : i32
    %c0_i32_1 = arith.constant 0 : i32
    return %arg1, %c0_i32, %c0_i32_0 : i32, i32, i32
  }
  func.func @transform_7(%arg0: i32, %arg1: i32) -> (i32, i32, i32) {
    %c0_i32 = arith.constant 0 : i32
    %c0_i32_0 = arith.constant 0 : i32
    %c0_i32_1 = arith.constant 0 : i32
    return %arg1, %c0_i32, %c0_i32_0 : i32, i32, i32
  }
  func.func @transform_8(%arg0: i32, %arg1: i32) -> (i32, i32, i32) {
    %c0_i32 = arith.constant 0 : i32
    %c0_i32_0 = arith.constant 0 : i32
    %c0_i32_1 = arith.constant 0 : i32
    return %arg1, %c0_i32, %c0_i32_0 : i32, i32, i32
  }
  func.func @transform_9(%arg0: i32, %arg1: i32) -> (i32, i32, i32) {
    %c0_i32 = arith.constant 0 : i32
    %c0_i32_0 = arith.constant 0 : i32
    %c0_i32_1 = arith.constant 0 : i32
    return %arg1, %c0_i32, %c0_i32_0 : i32, i32, i32
  }
  func.func @transform_10(%arg0: i32, %arg1: i32) -> (i32, i32, i32) {
    %c0_i32 = arith.constant 0 : i32
    %c0_i32_0 = arith.constant 0 : i32
    %c0_i32_1 = arith.constant 0 : i32
    return %arg1, %c0_i32, %c0_i32_0 : i32, i32, i32
  }
  func.func @transform_11(%arg0: i32, %arg1: i32) -> (i32, i32, i32) {
    %c0_i32 = arith.constant 0 : i32
    %c0_i32_0 = arith.constant 0 : i32
    %c0_i32_1 = arith.constant 0 : i32
    return %arg1, %c0_i32, %c0_i32_0 : i32, i32, i32
  }
  func.func @transform_12(%arg0: i32, %arg1: i32) -> (i32, i32, i32) {
    %c0_i32 = arith.constant 0 : i32
    %c0_i32_0 = arith.constant 0 : i32
    %c0_i32_1 = arith.constant 0 : i32
    return %arg1, %c0_i32, %c0_i32_0 : i32, i32, i32
  }
  func.func @transform_13(%arg0: i32, %arg1: i32) -> (i32, i32, i32) {
    %c0_i32 = arith.constant 0 : i32
    %c0_i32_0 = arith.constant 0 : i32
    %c0_i32_1 = arith.constant 0 : i32
    return %arg1, %c0_i32, %c0_i32_0 : i32, i32, i32
  }
  func.func @transform_14(%arg0: i32, %arg1: i32) -> (i32, i32, i32) {
    %c0_i32 = arith.constant 0 : i32
    %c0_i32_0 = arith.constant 0 : i32
    %c0_i32_1 = arith.constant 0 : i32
    return %arg1, %c0_i32, %c0_i32_0 : i32, i32, i32
  }
  func.func @transform_15(%arg0: i32, %arg1: i32) -> (i32, i32, i32) {
    %c0_i32 = arith.constant 0 : i32
    %c0_i32_0 = arith.constant 0 : i32
    %c0_i32_1 = arith.constant 0 : i32
    return %arg0, %c0_i32, %c0_i32_0 : i32, i32, i32
  }
}

</mosaic_0001>

<llo_original>
// kernel: tpu_custom_call.1
$region0: #{tpu_custom_call.1}
  #allocation0 [shape = 'u32[]', space=smem, size = 0x4, offset = 0x4, fixed_abs, tag = 'smem constant byte address 0x4 - core index']
  #allocation1 [shape = 'u32[144,128]{1,0:T(1,128)}', space=vmem, size = 0x12000, scoped, tag = 'internal scratch']
  #allocation2 [shape = 'f32[2,16,32]{2,1,0:T(8,128)}', space=vmem, size = 0x4000, scoped, tag = 'scratch operand']
  #allocation3 [shape = 'bf16[32,32]{1,0:T(16,128)(2,1)}', space=vmem, size = 0x2000, scoped, tag = 'scratch operand']
  %s0 = inlined_call_operand.hbm [shape: f32[2,16,32], index: 0, kind: input, shape index: {}]
  %s1 = inlined_call_operand.hbm [shape: bf16[2,32,96], index: 1, kind: input, shape index: {}]
  %s2 = inlined_call_operand.hbm [shape: f32[2,1,96], index: 2, kind: input, shape index: {}]
  %s3 = inlined_call_operand.hbm [shape: bf16[2,32,32], index: 3, kind: input, shape index: {}]
  %s4 = inlined_call_operand.hbm [shape: f32[2,1,32], index: 4, kind: input, shape index: {}]
  %s5 = inlined_call_operand.hbm [shape: f32[2,1,32], index: 5, kind: input, shape index: {}]
  %s6 = inlined_call_operand.hbm [shape: f32[2,1,32], index: 6, kind: input, shape index: {}]
  %s7 = inlined_call_operand.hbm [shape: bf16[2,32,64], index: 7, kind: input, shape index: {}]
  %s8 = inlined_call_operand.hbm [shape: f32[2,1,64], index: 8, kind: input, shape index: {}]
  %s9 = inlined_call_operand.hbm [shape: bf16[2,64,32], index: 9, kind: input, shape index: {}]
  %s10 = inlined_call_operand.hbm [shape: f32[2,1,32], index: 10, kind: input, shape index: {}]
  %s11 = inlined_call_operand.hbm [shape: f32[2,1,32], index: 11, kind: input, shape index: {}]
  %s12 = inlined_call_operand.hbm [shape: f32[2,1,32], index: 12, kind: input, shape index: {}]
  %s13 = inlined_call_operand.hbm [shape: f32[2,1,32], index: 13, kind: input, shape index: {}]
  %s14 = inlined_call_operand.hbm [shape: f32[2,1,32], index: 14, kind: input, shape index: {}]
  %s15 = inlined_call_operand.hbm [shape: f32[2,16,32], index: 15, kind: output, shape index: {}]
  %s16 = sld [smem:[#allocation0]]
  $region161: #{tpu_custom_call.1} parent=0
    _
  %s18 = ssub.s32 1, %s16
  %s19 = scalar_select 0, %s18, %s16
  $region1: #{tpu_custom_call.1} parent=0
    #allocation4 [shape = 'u8[16384]{0}', space=vmem, size = 0x4000, scoped, tag = 'input window, operand 0, single buffered']
    #allocation5 [shape = 's32[2]{0}', space=sflag, size = 0x8, scoped, tag = 'scoped memory for tpu_custom_call.1']
    #allocation6 [shape = 's32[2]{0}', space=sflag, size = 0x8, scoped, tag = 'scoped memory for tpu_custom_call.1']
    #allocation7 [shape = 'u8[16384]{0}', space=vmem, size = 0x4000, scoped, tag = 'input window, operand 1']
    #allocation8 [shape = 's32[2]{0}', space=sflag, size = 0x8, scoped, tag = 'scoped memory for tpu_custom_call.1']
    #allocation9 [shape = 'u8[1024]{0}', space=vmem, size = 0x400, scoped, tag = 'input window, operand 2']
    #allocation10 [shape = 'u8[16384]{0}', space=vmem, size = 0x4000, scoped, tag = 'input window, operand 3']
    #allocation11 [shape = 's32[2]{0}', space=sflag, size = 0x8, scoped, tag = 'scoped memory for tpu_custom_call.1']
    #allocation12 [shape = 'u8[1024]{0}', space=vmem, size = 0x400, scoped, tag = 'input window, operand 4']
    #allocation13 [shape = 'u8[1024]{0}', space=vmem, size = 0x400, scoped, tag = 'input window, operand 5']
    #allocation14 [shape = 's32[2]{0}', space=sflag, size = 0x8, scoped, tag = 'scoped memory for tpu_custom_call.1']
    #allocation15 [shape = 'u8[1024]{0}', space=vmem, size = 0x400, scoped, tag = 'input window, operand 6']
    #allocation16 [shape = 'u8[16384]{0}', space=vmem, size = 0x4000, scoped, tag = 'input window, operand 7']
    #allocation17 [shape = 's32[2]{0}', space=sflag, size = 0x8, scoped, tag = 'scoped memory for tpu_custom_call.1']
    #allocation18 [shape = 'u8[1024]{0}', space=vmem, size = 0x400, scoped, tag = 'input window, operand 8']
    #allocation19 [shape = 'u8[32768]{0}', space=vmem, size = 0x8000, scoped, tag = 'input window, operand 9']
    #allocation20 [shape = 's32[2]{0}', space=sflag, size = 0x8, scoped, tag = 'scoped memory for tpu_custom_call.1']
    #allocation21 [shape = 'u8[1024]{0}', space=vmem, size = 0x400, scoped, tag = 'input window, operand 10']
    #allocation22 [shape = 'u8[1024]{0}', space=vmem, size = 0x400, scoped, tag = 'input window, operand 11']
    #allocation23 [shape = 's32[2]{0}', space=sflag, size = 0x8, scoped, tag = 'scoped memory for tpu_custom_call.1']
    #allocation24 [shape = 'u8[1024]{0}', space=vmem, size = 0x400, scoped, tag = 'input window, operand 12']
    #allocation25 [shape = 'u8[1024]{0}', space=vmem, size = 0x400, scoped, tag = 'input window, operand 13']
    #allocation26 [shape = 's32[2]{0}', space=sflag, size = 0x8, scoped, tag = 'scoped memory for tpu_custom_call.1']
    #allocation27 [shape = 'u8[1024]{0}', space=vmem, size = 0x400, scoped, tag = 'input window, operand 14']
    #allocation28 [shape = 'u8[16384]{0}', space=vmem, size = 0x4000, scoped, tag = 'output window, operand 0, single buffered']
    %20 = vsyncpa [#allocation5], 0
    %21 = vsyncpa [#allocation8], 0
    %s22 = scalar_lea.sflag [#allocation8], 1
    %23 = vsyncpa %s22, 0
    %24 = vsyncpa [#allocation11], 0
    %s25 = scalar_lea.sflag [#allocation11], 1
    %26 = vsyncpa %s25, 0
    %27 = vsyncpa [#allocation14], 0
    %s28 = scalar_lea.sflag [#allocation14], 1
    %29 = vsyncpa %s28, 0
    %30 = vsyncpa [#allocation17], 0
    %s31 = scalar_lea.sflag [#allocation17], 1
    %32 = vsyncpa %s31, 0
    %33 = vsyncpa [#allocation20], 0
    %s34 = scalar_lea.sflag [#allocation20], 1
    %35 = vsyncpa %s34, 0
    %36 = vsyncpa [#allocation23], 0
    %s37 = scalar_lea.sflag [#allocation23], 1
    %38 = vsyncpa %s37, 0
    %39 = vsyncpa [#allocation26], 0
    %s40 = scalar_lea.sflag [#allocation26], 1
    %41 = vsyncpa %s40, 0
    %42 = vsyncpa [#allocation6], 0
    loop: start=0, step=1, limit=4
    $region2: #{tpu_custom_call.1} parent=1 // loop_pre_header
      _
    $region3: #{tpu_custom_call.1} parent=1 // loop_header
      %s44 = sphi 0, %s48
      %p45 = scmp.ge.s32.totalorder %s44, 4
      %s51 = sphi 0, %s63
      %s52 = sphi 0, %s59
      %s53 = sphi 0, %s51
      %s54 = sphi 0, %s52
      %s55 = sphi 0, %s53
      %s56 = sphi 0, %s54
      %s66 = sphi 0, %s68
      %s69 = sphi 0, %s66
      %s70 = sphi 0, %s69
      %s86 = sphi 0, %s70
      %s92 = sphi 0, %s94
      %s95 = sphi 0, %s92
      %s96 = sphi 0, %s95
      %s112 = sphi 0, %s96
      %s118 = sphi 0, %s120
      %s121 = sphi 0, %s118
      %s122 = sphi 0, %s121
      %s138 = sphi 0, %s122
      %s144 = sphi 0, %s146
      %s147 = sphi 0, %s144
      %s148 = sphi 0, %s147
      %s164 = sphi 0, %s148
      %s170 = sphi 0, %s172
      %s173 = sphi 0, %s170
      %s174 = sphi 0, %s173
      %s190 = sphi 0, %s174
      %s196 = sphi 0, %s198
      %s199 = sphi 0, %s196
      %s200 = sphi 0, %s199
      %s216 = sphi 0, %s200
      %s222 = sphi 0, %s224
      %s225 = sphi 0, %s222
      %s226 = sphi 0, %s225
      %s242 = sphi 0, %s226
      %s248 = sphi 0, %s250
      %s251 = sphi 0, %s248
      %s252 = sphi 0, %s251
      %s268 = sphi 0, %s252
      %s274 = sphi 0, %s276
      %s277 = sphi 0, %s274
      %s278 = sphi 0, %s277
      %s294 = sphi 0, %s278
      %s300 = sphi 0, %s302
      %s303 = sphi 0, %s300
      %s304 = sphi 0, %s303
      %s320 = sphi 0, %s304
      %s326 = sphi 0, %s328
      %s329 = sphi 0, %s326
      %s330 = sphi 0, %s329
      %s346 = sphi 0, %s330
      %s352 = sphi 0, %s354
      %s355 = sphi 0, %s352
      %s356 = sphi 0, %s355
      %s372 = sphi 0, %s356
      %s378 = sphi 0, %s380
      %s381 = sphi 0, %s378
      %s382 = sphi 0, %s381
      %s398 = sphi 0, %s382
      %s404 = sphi 0, %s406
      %s407 = sphi 0, %s404
      %s408 = sphi 0, %s407
      %s424 = sphi 0, %s408
      %s430 = sphi 0, %s432
      %s433 = sphi 0, %s430
      %s434 = sphi 0, %s433
      %s450 = sphi 0, %s434
      %s456 = sphi 0, %s458
      %s459 = sphi 0, %s456
      %s460 = sphi 0, %s459
      %s476 = sphi 0, %s460
    $region4: #{tpu_custom_call.1} parent=1 // loop_header_branch
      %47 = sbr.rel (%p45) target = $region8
    $region5: #{tpu_custom_call.1} parent=1 // loop_body
      %s49 = ssub.s32 %s44, 1
      %s50 = ssub.s32 %s44, 2
      %s57 = sadd.s32 1, %s52
      %p58 = scmp.ge.s32.totalorder %s57, 2
      %s59 = scalar_select %p58, 0, %s57
      %s60 = sadd.s32 1, %s51
      %s61 = scalar_select %p58, %s60, %s51
      %p62 = scmp.ge.s32.totalorder %s61, 1
      %s63 = scalar_select %p62, 0, %s61
      %s64 = ssub.s32 %s51, %s63
      %p65 = scmp.eq.s32.totalorder %s64, 0
      %s67 = sadd.s32 %s66, 1
      %s68 = scalar_select %p65, %s66, %s67
      %p71 = pneg %p65
      %p72 = scmp.eq.s32.totalorder %s44, 1
      %p73 = por %p71, %p72
      %p74 = scmp.ne.s32.totalorder %s66, %s69
      %p75 = scmp.eq.s32.totalorder %s44, 0
      %p76 = por %p74, %p75
      %p77 = scmp.ne.s32.totalorder %s66, %s69
      %p78 = scmp.eq.s32.totalorder %s49, 1
      %p79 = por %p77, %p78
      %p80 = scmp.ne.s32.totalorder %s69, %s70
      %p81 = scmp.eq.s32.totalorder %s49, 0
      %p82 = por %p80, %p81
      %p83 = scmp.ne.s32.totalorder %s69, %s70
      %p84 = scmp.eq.s32.totalorder %s50, 1
      %p85 = por %p83, %p84
      %p87 = scmp.ne.s32.totalorder %s70, %s86
      %p88 = scmp.eq.s32.totalorder %s50, 0
      %p89 = por %p87, %p88
      %s90 = ssub.s32 %s52, %s59
      %p91 = scmp.eq.s32.totalorder %s90, 0
      %s93 = sadd.s32 %s92, 1
      %s94 = scalar_select %p91, %s92, %s93
      %p97 = pneg %p91
      %p98 = scmp.eq.s32.totalorder %s44, 1
      %p99 = por %p97, %p98
      %p100 = scmp.ne.s32.totalorder %s92, %s95
      %p101 = scmp.eq.s32.totalorder %s44, 0
      %p102 = por %p100, %p101
      %p103 = scmp.ne.s32.totalorder %s92, %s95
      %p104 = scmp.eq.s32.totalorder %s49, 1
      %p105 = por %p103, %p104
      %p106 = scmp.ne.s32.totalorder %s95, %s96
      %p107 = scmp.eq.s32.totalorder %s49, 0
      %p108 = por %p106, %p107
      %p109 = scmp.ne.s32.totalorder %s95, %s96
      %p110 = scmp.eq.s32.totalorder %s50, 1
      %p111 = por %p109, %p110
      %p113 = scmp.ne.s32.totalorder %s96, %s112
      %p114 = scmp.eq.s32.totalorder %s50, 0
      %p115 = por %p113, %p114
      %s116 = ssub.s32 %s52, %s59
      %p117 = scmp.eq.s32.totalorder %s116, 0
      %s119 = sadd.s32 %s118, 1
      %s120 = scalar_select %p117, %s118, %s119
      %p123 = pneg %p117
      %p124 = scmp.eq.s32.totalorder %s44, 1
      %p125 = por %p123, %p124
      %p126 = scmp.ne.s32.totalorder %s118, %s121
      %p127 = scmp.eq.s32.totalorder %s44, 0
      %p128 = por %p126, %p127
      %p129 = scmp.ne.s32.totalorder %s118, %s121
      %p130 = scmp.eq.s32.totalorder %s49, 1
      %p131 = por %p129, %p130
      %p132 = scmp.ne.s32.totalorder %s121, %s122
      %p133 = scmp.eq.s32.totalorder %s49, 0
      %p134 = por %p132, %p133
      %p135 = scmp.ne.s32.totalorder %s121, %s122
      %p136 = scmp.eq.s32.totalorder %s50, 1
      %p137 = por %p135, %p136
      %p139 = scmp.ne.s32.totalorder %s122, %s138
      %p140 = scmp.eq.s32.totalorder %s50, 0
      %p141 = por %p139, %p140
      %s142 = ssub.s32 %s52, %s59
      %p143 = scmp.eq.s32.totalorder %s142, 0
      %s145 = sadd.s32 %s144, 1
      %s146 = scalar_select %p143, %s144, %s145
      %p149 = pneg %p143
      %p150 = scmp.eq.s32.totalorder %s44, 1
      %p151 = por %p149, %p150
      %p152 = scmp.ne.s32.totalorder %s144, %s147
      %p153 = scmp.eq.s32.totalorder %s44, 0
      %p154 = por %p152, %p153
      %p155 = scmp.ne.s32.totalorder %s144, %s147
      %p156 = scmp.eq.s32.totalorder %s49, 1
      %p157 = por %p155, %p156
      %p158 = scmp.ne.s32.totalorder %s147, %s148
      %p159 = scmp.eq.s32.totalorder %s49, 0
      %p160 = por %p158, %p159
      %p161 = scmp.ne.s32.totalorder %s147, %s148
      %p162 = scmp.eq.s32.totalorder %s50, 1
      %p163 = por %p161, %p162
      %p165 = scmp.ne.s32.totalorder %s148, %s164
      %p166 = scmp.eq.s32.totalorder %s50, 0
      %p167 = por %p165, %p166
      %s168 = ssub.s32 %s52, %s59
      %p169 = scmp.eq.s32.totalorder %s168, 0
      %s171 = sadd.s32 %s170, 1
      %s172 = scalar_select %p169, %s170, %s171
      %p175 = pneg %p169
      %p176 = scmp.eq.s32.totalorder %s44, 1
      %p177 = por %p175, %p176
      %p178 = scmp.ne.s32.totalorder %s170, %s173
      %p179 = scmp.eq.s32.totalorder %s44, 0
      %p180 = por %p178, %p179
      %p181 = scmp.ne.s32.totalorder %s170, %s173
      %p182 = scmp.eq.s32.totalorder %s49, 1
      %p183 = por %p181, %p182
      %p184 = scmp.ne.s32.totalorder %s173, %s174
      %p185 = scmp.eq.s32.totalorder %s49, 0
      %p186 = por %p184, %p185
      %p187 = scmp.ne.s32.totalorder %s173, %s174
      %p188 = scmp.eq.s32.totalorder %s50, 1
      %p189 = por %p187, %p188
      %p191 = scmp.ne.s32.totalorder %s174, %s190
      %p192 = scmp.eq.s32.totalorder %s50, 0
      %p193 = por %p191, %p192
      %s194 = ssub.s32 %s52, %s59
      %p195 = scmp.eq.s32.totalorder %s194, 0
      %s197 = sadd.s32 %s196, 1
      %s198 = scalar_select %p195, %s196, %s197
      %p201 = pneg %p195
      %p202 = scmp.eq.s32.totalorder %s44, 1
      %p203 = por %p201, %p202
      %p204 = scmp.ne.s32.totalorder %s196, %s199
      %p205 = scmp.eq.s32.totalorder %s44, 0
      %p206 = por %p204, %p205
      %p207 = scmp.ne.s32.totalorder %s196, %s199
      %p208 = scmp.eq.s32.totalorder %s49, 1
      %p209 = por %p207, %p208
      %p210 = scmp.ne.s32.totalorder %s199, %s200
      %p211 = scmp.eq.s32.totalorder %s49, 0
      %p212 = por %p210, %p211
      %p213 = scmp.ne.s32.totalorder %s199, %s200
      %p214 = scmp.eq.s32.totalorder %s50, 1
      %p215 = por %p213, %p214
      %p217 = scmp.ne.s32.totalorder %s200, %s216
      %p218 = scmp.eq.s32.totalorder %s50, 0
      %p219 = por %p217, %p218
      %s220 = ssub.s32 %s52, %s59
      %p221 = scmp.eq.s32.totalorder %s220, 0
      %s223 = sadd.s32 %s222, 1
      %s224 = scalar_select %p221, %s222, %s223
      %p227 = pneg %p221
      %p228 = scmp.eq.s32.totalorder %s44, 1
      %p229 = por %p227, %p228
      %p230 = scmp.ne.s32.totalorder %s222, %s225
      %p231 = scmp.eq.s32.totalorder %s44, 0
      %p232 = por %p230, %p231
      %p233 = scmp.ne.s32.totalorder %s222, %s225
      %p234 = scmp.eq.s32.totalorder %s49, 1
      %p235 = por %p233, %p234
      %p236 = scmp.ne.s32.totalorder %s225, %s226
      %p237 = scmp.eq.s32.totalorder %s49, 0
      %p238 = por %p236, %p237
      %p239 = scmp.ne.s32.totalorder %s225, %s226
      %p240 = scmp.eq.s32.totalorder %s50, 1
      %p241 = por %p239, %p240
      %p243 = scmp.ne.s32.totalorder %s226, %s242
      %p244 = scmp.eq.s32.totalorder %s50, 0
      %p245 = por %p243, %p244
      %s246 = ssub.s32 %s52, %s59
      %p247 = scmp.eq.s32.totalorder %s246, 0
      %s249 = sadd.s32 %s248, 1
      %s250 = scalar_select %p247, %s248, %s249
      %p253 = pneg %p247
      %p254 = scmp.eq.s32.totalorder %s44, 1
      %p255 = por %p253, %p254
      %p256 = scmp.ne.s32.totalorder %s248, %s251
      %p257 = scmp.eq.s32.totalorder %s44, 0
      %p258 = por %p256, %p257
      %p259 = scmp.ne.s32.totalorder %s248, %s251
      %p260 = scmp.eq.s32.totalorder %s49, 1
      %p261 = por %p259, %p260
      %p262 = scmp.ne.s32.totalorder %s251, %s252
      %p263 = scmp.eq.s32.totalorder %s49, 0
      %p264 = por %p262, %p263
      %p265 = scmp.ne.s32.totalorder %s251, %s252
      %p266 = scmp.eq.s32.totalorder %s50, 1
      %p267 = por %p265, %p266
      %p269 = scmp.ne.s32.totalorder %s252, %s268
      %p270 = scmp.eq.s32.totalorder %s50, 0
      %p271 = por %p269, %p270
      %s272 = ssub.s32 %s52, %s59
      %p273 = scmp.eq.s32.totalorder %s272, 0
      %s275 = sadd.s32 %s274, 1
      %s276 = scalar_select %p273, %s274, %s275
      %p279 = pneg %p273
      %p280 = scmp.eq.s32.totalorder %s44, 1
      %p281 = por %p279, %p280
      %p282 = scmp.ne.s32.totalorder %s274, %s277
      %p283 = scmp.eq.s32.totalorder %s44, 0
      %p284 = por %p282, %p283
      %p285 = scmp.ne.s32.totalorder %s274, %s277
      %p286 = scmp.eq.s32.totalorder %s49, 1
      %p287 = por %p285, %p286
      %p288 = scmp.ne.s32.totalorder %s277, %s278
      %p289 = scmp.eq.s32.totalorder %s49, 0
      %p290 = por %p288, %p289
      %p291 = scmp.ne.s32.totalorder %s277, %s278
      %p292 = scmp.eq.s32.totalorder %s50, 1
      %p293 = por %p291, %p292
      %p295 = scmp.ne.s32.totalorder %s278, %s294
      %p296 = scmp.eq.s32.totalorder %s50, 0
      %p297 = por %p295, %p296
      %s298 = ssub.s32 %s52, %s59
      %p299 = scmp.eq.s32.totalorder %s298, 0
      %s301 = sadd.s32 %s300, 1
      %s302 = scalar_select %p299, %s300, %s301
      %p305 = pneg %p299
      %p306 = scmp.eq.s32.totalorder %s44, 1
      %p307 = por %p305, %p306
      %p308 = scmp.ne.s32.totalorder %s300, %s303
      %p309 = scmp.eq.s32.totalorder %s44, 0
      %p310 = por %p308, %p309
      %p311 = scmp.ne.s32.totalorder %s300, %s303
      %p312 = scmp.eq.s32.totalorder %s49, 1
      %p313 = por %p311, %p312
      %p314 = scmp.ne.s32.totalorder %s303, %s304
      %p315 = scmp.eq.s32.totalorder %s49, 0
      %p316 = por %p314, %p315
      %p317 = scmp.ne.s32.totalorder %s303, %s304
      %p318 = scmp.eq.s32.totalorder %s50, 1
      %p319 = por %p317, %p318
      %p321 = scmp.ne.s32.totalorder %s304, %s320
      %p322 = scmp.eq.s32.totalorder %s50, 0
      %p323 = por %p321, %p322
      %s324 = ssub.s32 %s52, %s59
      %p325 = scmp.eq.s32.totalorder %s324, 0
      %s327 = sadd.s32 %s326, 1
      %s328 = scalar_select %p325, %s326, %s327
      %p331 = pneg %p325
      %p332 = scmp.eq.s32.totalorder %s44, 1
      %p333 = por %p331, %p332
      %p334 = scmp.ne.s32.totalorder %s326, %s329
      %p335 = scmp.eq.s32.totalorder %s44, 0
      %p336 = por %p334, %p335
      %p337 = scmp.ne.s32.totalorder %s326, %s329
      %p338 = scmp.eq.s32.totalorder %s49, 1
      %p339 = por %p337, %p338
      %p340 = scmp.ne.s32.totalorder %s329, %s330
      %p341 = scmp.eq.s32.totalorder %s49, 0
      %p342 = por %p340, %p341
      %p343 = scmp.ne.s32.totalorder %s329, %s330
      %p344 = scmp.eq.s32.totalorder %s50, 1
      %p345 = por %p343, %p344
      %p347 = scmp.ne.s32.totalorder %s330, %s346
      %p348 = scmp.eq.s32.totalorder %s50, 0
      %p349 = por %p347, %p348
      %s350 = ssub.s32 %s52, %s59
      %p351 = scmp.eq.s32.totalorder %s350, 0
      %s353 = sadd.s32 %s352, 1
      %s354 = scalar_select %p351, %s352, %s353
      %p357 = pneg %p351
      %p358 = scmp.eq.s32.totalorder %s44, 1
      %p359 = por %p357, %p358
      %p360 = scmp.ne.s32.totalorder %s352, %s355
      %p361 = scmp.eq.s32.totalorder %s44, 0
      %p362 = por %p360, %p361
      %p363 = scmp.ne.s32.totalorder %s352, %s355
      %p364 = scmp.eq.s32.totalorder %s49, 1
      %p365 = por %p363, %p364
      %p366 = scmp.ne.s32.totalorder %s355, %s356
      %p367 = scmp.eq.s32.totalorder %s49, 0
      %p368 = por %p366, %p367
      %p369 = scmp.ne.s32.totalorder %s355, %s356
      %p370 = scmp.eq.s32.totalorder %s50, 1
      %p371 = por %p369, %p370
      %p373 = scmp.ne.s32.totalorder %s356, %s372
      %p374 = scmp.eq.s32.totalorder %s50, 0
      %p375 = por %p373, %p374
      %s376 = ssub.s32 %s52, %s59
      %p377 = scmp.eq.s32.totalorder %s376, 0
      %s379 = sadd.s32 %s378, 1
      %s380 = scalar_select %p377, %s378, %s379
      %p383 = pneg %p377
      %p384 = scmp.eq.s32.totalorder %s44, 1
      %p385 = por %p383, %p384
      %p386 = scmp.ne.s32.totalorder %s378, %s381
      %p387 = scmp.eq.s32.totalorder %s44, 0
      %p388 = por %p386, %p387
      %p389 = scmp.ne.s32.totalorder %s378, %s381
      %p390 = scmp.eq.s32.totalorder %s49, 1
      %p391 = por %p389, %p390
      %p392 = scmp.ne.s32.totalorder %s381, %s382
      %p393 = scmp.eq.s32.totalorder %s49, 0
      %p394 = por %p392, %p393
      %p395 = scmp.ne.s32.totalorder %s381, %s382
      %p396 = scmp.eq.s32.totalorder %s50, 1
      %p397 = por %p395, %p396
      %p399 = scmp.ne.s32.totalorder %s382, %s398
      %p400 = scmp.eq.s32.totalorder %s50, 0
      %p401 = por %p399, %p400
      %s402 = ssub.s32 %s52, %s59
      %p403 = scmp.eq.s32.totalorder %s402, 0
      %s405 = sadd.s32 %s404, 1
      %s406 = scalar_select %p403, %s404, %s405
      %p409 = pneg %p403
      %p410 = scmp.eq.s32.totalorder %s44, 1
      %p411 = por %p409, %p410
      %p412 = scmp.ne.s32.totalorder %s404, %s407
      %p413 = scmp.eq.s32.totalorder %s44, 0
      %p414 = por %p412, %p413
      %p415 = scmp.ne.s32.totalorder %s404, %s407
      %p416 = scmp.eq.s32.totalorder %s49, 1
      %p417 = por %p415, %p416
      %p418 = scmp.ne.s32.totalorder %s407, %s408
      %p419 = scmp.eq.s32.totalorder %s49, 0
      %p420 = por %p418, %p419
      %p421 = scmp.ne.s32.totalorder %s407, %s408
      %p422 = scmp.eq.s32.totalorder %s50, 1
      %p423 = por %p421, %p422
      %p425 = scmp.ne.s32.totalorder %s408, %s424
      %p426 = scmp.eq.s32.totalorder %s50, 0
      %p427 = por %p425, %p426
      %s428 = ssub.s32 %s52, %s59
      %p429 = scmp.eq.s32.totalorder %s428, 0
      %s431 = sadd.s32 %s430, 1
      %s432 = scalar_select %p429, %s430, %s431
      %p435 = pneg %p429
      %p436 = scmp.eq.s32.totalorder %s44, 1
      %p437 = por %p435, %p436
      %p438 = scmp.ne.s32.totalorder %s430, %s433
      %p439 = scmp.eq.s32.totalorder %s44, 0
      %p440 = por %p438, %p439
      %p441 = scmp.ne.s32.totalorder %s430, %s433
      %p442 = scmp.eq.s32.totalorder %s49, 1
      %p443 = por %p441, %p442
      %p444 = scmp.ne.s32.totalorder %s433, %s434
      %p445 = scmp.eq.s32.totalorder %s49, 0
      %p446 = por %p444, %p445
      %p447 = scmp.ne.s32.totalorder %s433, %s434
      %p448 = scmp.eq.s32.totalorder %s50, 1
      %p449 = por %p447, %p448
      %p451 = scmp.ne.s32.totalorder %s434, %s450
      %p452 = scmp.eq.s32.totalorder %s50, 0
      %p453 = por %p451, %p452
      %s454 = ssub.s32 %s51, %s63
      %p455 = scmp.eq.s32.totalorder %s454, 0
      %s457 = sadd.s32 %s456, 1
      %s458 = scalar_select %p455, %s456, %s457
      %p461 = pneg %p455
      %p462 = scmp.eq.s32.totalorder %s44, 1
      %p463 = por %p461, %p462
      %p464 = scmp.ne.s32.totalorder %s456, %s459
      %p465 = scmp.eq.s32.totalorder %s44, 0
      %p466 = por %p464, %p465
      %p467 = scmp.ne.s32.totalorder %s456, %s459
      %p468 = scmp.eq.s32.totalorder %s49, 1
      %p469 = por %p467, %p468
      %p470 = scmp.ne.s32.totalorder %s459, %s460
      %p471 = scmp.eq.s32.totalorder %s49, 0
      %p472 = por %p470, %p471
      %p473 = scmp.ne.s32.totalorder %s459, %s460
      %p474 = scmp.eq.s32.totalorder %s50, 1
      %p475 = por %p473, %p474
      %p477 = scmp.ne.s32.totalorder %s460, %s476
      %p478 = scmp.eq.s32.totalorder %s50, 0
      %p479 = por %p477, %p478
      %p480 = scmp.le.s32.totalorder 1, %s44
      %p481 = scmp.lt.s32.totalorder %s44, 3
      %p482 = pnand %p480, %p481
      %p483 = pneg %p482
      // Predicated region
      $region9: #{tpu_custom_call.1} parent=5 // pred_check
        _
      $region10: #{tpu_custom_call.1} parent=5 // pred_check_branch
        %485 = sbr.rel (%p482) target = $region12
      $region11: #{tpu_custom_call.1} parent=5 // pred_region
        %s486 = ssub.s32 %s44, 1
        // Predicated region
        $region13: #{tpu_custom_call.1} parent=11 // pred_check
          %p487 = pneg %p82
        $region14: #{tpu_custom_call.1} parent=11 // pred_check_branch
          %489 = sbr.rel (%p487) target = $region16
        $region15: #{tpu_custom_call.1} parent=11 // pred_region
          %s490 = smul.u32 2, %s53
          %s492 = ssub.s32 512, 512
          %493 = vsyncadd [#allocation5], %s492
          %s494 = smul.addr %s490, 2
          %s495 = smul.addr %s494, 128
          %s496 = scalar_lea.hbm %s0, %s495
          %s497 = sshll.u32 [#allocation4], 4
          %s498 = int_to_ptr.vmem [resolvable:$true] %s497
          %503 = dma.hbm_to_vmem [thread:$0]  %s496, 512, %s498, [#allocation5], 128, 128, 8
        $region16: #{tpu_custom_call.1} parent=11 // pred_fallthru
          _
      $region12: #{tpu_custom_call.1} parent=5 // pred_fallthru
        _
      %p504 = scmp.lt.s32.totalorder %s44, 2
      // Predicated region
      $region17: #{tpu_custom_call.1} parent=5 // pred_check
        %p505 = pneg %p504
      $region18: #{tpu_custom_call.1} parent=5 // pred_check_branch
        %507 = sbr.rel (%p505) target = $region20
      $region19: #{tpu_custom_call.1} parent=5 // pred_region
        // Predicated region
        $region21: #{tpu_custom_call.1} parent=19 // pred_check
          %p508 = pneg %p102
        $region22: #{tpu_custom_call.1} parent=19 // pred_check_branch
          %510 = sbr.rel (%p508) target = $region24
        $region23: #{tpu_custom_call.1} parent=19 // pred_region
          %s511 = sand.u32 %s44, 1
          %s512 = scalar_lea.sflag [#allocation8], %s511
          %s513 = sand.u32 %s92, 1
          %s514 = smul.addr %s513, 16
          %s515 = scalar_lea.vmem [#allocation7], %s514
          %s517 = ssub.s32 256, 256
          %518 = vsyncadd %s512, %s517
          %s519 = smul.addr %s52, 4
          %s520 = smul.addr %s519, 64
          %s521 = scalar_lea.hbm %s1, %s520
          %s522 = sshll.u32 %s515, 4
          %s523 = int_to_ptr.vmem [resolvable:$true] %s522
          %528 = dma.hbm_to_vmem [thread:$0]  %s521, 256, %s523, %s512, 64, 64, 4
        $region24: #{tpu_custom_call.1} parent=19 // pred_fallthru
          _
        // Predicated region
        $region25: #{tpu_custom_call.1} parent=19 // pred_check
          %p529 = pneg %p128
        $region26: #{tpu_custom_call.1} parent=19 // pred_check_branch
          %531 = sbr.rel (%p529) target = $region28
        $region27: #{tpu_custom_call.1} parent=19 // pred_region
          %s532 = sand.u32 %s44, 1
          %s533 = scalar_lea.sflag [#allocation8], %s532
          %s534 = sand.u32 %s118, 1
          %s535 = scalar_lea.vmem [#allocation9], %s534
          %s537 = ssub.s32 16, 16
          %538 = vsyncadd %s533, %s537
          %s539 = smul.addr %s52, 16
          %s540 = scalar_lea.hbm %s2, %s539
          %s542 = sshll.u32 %s535, 4
          %s543 = int_to_ptr.vmem [resolvable:$true] %s542
          %545 = dma.hbm_to_vmem [thread:$0]  %s540, 16, %s543, %s533
        $region28: #{tpu_custom_call.1} parent=19 // pred_fallthru
          _
        // Predicated region
        $region29: #{tpu_custom_call.1} parent=19 // pred_check
          %p546 = pneg %p154
        $region30: #{tpu_custom_call.1} parent=19 // pred_check_branch
          %548 = sbr.rel (%p546) target = $region32
        $region31: #{tpu_custom_call.1} parent=19 // pred_region
          %s549 = sand.u32 %s44, 1
          %s550 = scalar_lea.sflag [#allocation11], %s549
          %s551 = sand.u32 %s144, 1
          %s552 = smul.addr %s551, 16
          %s553 = scalar_lea.vmem [#allocation10], %s552
          %s555 = ssub.s32 256, 256
          %556 = vsyncadd %s550, %s555
          %s557 = smul.addr %s52, 4
          %s558 = smul.addr %s557, 64
          %s559 = scalar_lea.hbm %s3, %s558
          %s560 = sshll.u32 %s553, 4
          %s561 = int_to_ptr.vmem [resolvable:$true] %s560
          %566 = dma.hbm_to_vmem [thread:$0]  %s559, 256, %s561, %s550, 64, 64, 4
        $region32: #{tpu_custom_call.1} parent=19 // pred_fallthru
          _
        // Predicated region
        $region33: #{tpu_custom_call.1} parent=19 // pred_check
          %p567 = pneg %p180
        $region34: #{tpu_custom_call.1} parent=19 // pred_check_branch
          %569 = sbr.rel (%p567) target = $region36
        $region35: #{tpu_custom_call.1} parent=19 // pred_region
          %s570 = sand.u32 %s44, 1
          %s571 = scalar_lea.sflag [#allocation11], %s570
          %s572 = sand.u32 %s170, 1
          %s573 = scalar_lea.vmem [#allocation12], %s572
          %s575 = ssub.s32 16, 16
          %576 = vsyncadd %s571, %s575
          %s577 = smul.addr %s52, 16
          %s578 = scalar_lea.hbm %s4, %s577
          %s580 = sshll.u32 %s573, 4
          %s581 = int_to_ptr.vmem [resolvable:$true] %s580
          %583 = dma.hbm_to_vmem [thread:$0]  %s578, 16, %s581, %s571
        $region36: #{tpu_custom_call.1} parent=19 // pred_fallthru
          _
        // Predicated region
        $region37: #{tpu_custom_call.1} parent=19 // pred_check
          %p584 = pneg %p206
        $region38: #{tpu_custom_call.1} parent=19 // pred_check_branch
          %586 = sbr.rel (%p584) target = $region40
        $region39: #{tpu_custom_call.1} parent=19 // pred_region
          %s587 = sand.u32 %s44, 1
          %s588 = scalar_lea.sflag [#allocation14], %s587
          %s589 = sand.u32 %s196, 1
          %s590 = scalar_lea.vmem [#allocation13], %s589
          %s592 = ssub.s32 16, 16
          %593 = vsyncadd %s588, %s592
          %s594 = smul.addr %s52, 16
          %s595 = scalar_lea.hbm %s5, %s594
          %s597 = sshll.u32 %s590, 4
          %s598 = int_to_ptr.vmem [resolvable:$true] %s597
          %600 = dma.hbm_to_vmem [thread:$0]  %s595, 16, %s598, %s588
        $region40: #{tpu_custom_call.1} parent=19 // pred_fallthru
          _
        // Predicated region
        $region41: #{tpu_custom_call.1} parent=19 // pred_check
          %p601 = pneg %p232
        $region42: #{tpu_custom_call.1} parent=19 // pred_check_branch
          %603 = sbr.rel (%p601) target = $region44
        $region43: #{tpu_custom_call.1} parent=19 // pred_region
          %s604 = sand.u32 %s44, 1
          %s605 = scalar_lea.sflag [#allocation14], %s604
          %s606 = sand.u32 %s222, 1
          %s607 = scalar_lea.vmem [#allocation15], %s606
          %s609 = ssub.s32 16, 16
          %610 = vsyncadd %s605, %s609
          %s611 = smul.addr %s52, 16
          %s612 = scalar_lea.hbm %s6, %s611
          %s614 = sshll.u32 %s607, 4
          %s615 = int_to_ptr.vmem [resolvable:$true] %s614
          %617 = dma.hbm_to_vmem [thread:$0]  %s612, 16, %s615, %s605
        $region44: #{tpu_custom_call.1} parent=19 // pred_fallthru
          _
        // Predicated region
        $region45: #{tpu_custom_call.1} parent=19 // pred_check
          %p618 = pneg %p258
        $region46: #{tpu_custom_call.1} parent=19 // pred_check_branch
          %620 = sbr.rel (%p618) target = $region48
        $region47: #{tpu_custom_call.1} parent=19 // pred_region
          %s621 = sand.u32 %s44, 1
          %s622 = scalar_lea.sflag [#allocation17], %s621
          %s623 = sand.u32 %s248, 1
          %s624 = smul.addr %s623, 16
          %s625 = scalar_lea.vmem [#allocation16], %s624
          %s627 = ssub.s32 256, 256
          %628 = vsyncadd %s622, %s627
          %s629 = smul.addr %s52, 4
          %s630 = smul.addr %s629, 64
          %s631 = scalar_lea.hbm %s7, %s630
          %s632 = sshll.u32 %s625, 4
          %s633 = int_to_ptr.vmem [resolvable:$true] %s632
          %638 = dma.hbm_to_vmem [thread:$0]  %s631, 256, %s633, %s622, 64, 64, 4
        $region48: #{tpu_custom_call.1} parent=19 // pred_fallthru
          _
        // Predicated region
        $region49: #{tpu_custom_call.1} parent=19 // pred_check
          %p639 = pneg %p284
        $region50: #{tpu_custom_call.1} parent=19 // pred_check_branch
          %641 = sbr.rel (%p639) target = $region52
        $region51: #{tpu_custom_call.1} parent=19 // pred_region
          %s642 = sand.u32 %s44, 1
          %s643 = scalar_lea.sflag [#allocation17], %s642
          %s644 = sand.u32 %s274, 1
          %s645 = scalar_lea.vmem [#allocation18], %s644
          %s647 = ssub.s32 16, 16
          %648 = vsyncadd %s643, %s647
          %s649 = smul.addr %s52, 16
          %s650 = scalar_lea.hbm %s8, %s649
          %s652 = sshll.u32 %s645, 4
          %s653 = int_to_ptr.vmem [resolvable:$true] %s652
          %655 = dma.hbm_to_vmem [thread:$0]  %s650, 16, %s653, %s643
        $region52: #{tpu_custom_call.1} parent=19 // pred_fallthru
          _
        // Predicated region
        $region53: #{tpu_custom_call.1} parent=19 // pred_check
          %p656 = pneg %p310
        $region54: #{tpu_custom_call.1} parent=19 // pred_check_branch
          %658 = sbr.rel (%p656) target = $region56
        $region55: #{tpu_custom_call.1} parent=19 // pred_region
          %s659 = sand.u32 %s44, 1
          %s660 = scalar_lea.sflag [#allocation20], %s659
          %s661 = sand.u32 %s300, 1
          %s662 = smul.addr %s661, 32
          %s663 = scalar_lea.vmem [#allocation19], %s662
          %s665 = ssub.s32 512, 512
          %666 = vsyncadd %s660, %s665
          %s667 = smul.addr %s52, 8
          %s668 = smul.addr %s667, 64
          %s669 = scalar_lea.hbm %s9, %s668
          %s670 = sshll.u32 %s663, 4
          %s671 = int_to_ptr.vmem [resolvable:$true] %s670
          %676 = dma.hbm_to_vmem [thread:$0]  %s669, 512, %s671, %s660, 64, 64, 4
        $region56: #{tpu_custom_call.1} parent=19 // pred_fallthru
          _
        // Predicated region
        $region57: #{tpu_custom_call.1} parent=19 // pred_check
          %p677 = pneg %p336
        $region58: #{tpu_custom_call.1} parent=19 // pred_check_branch
          %679 = sbr.rel (%p677) target = $region60
        $region59: #{tpu_custom_call.1} parent=19 // pred_region
          %s680 = sand.u32 %s44, 1
          %s681 = scalar_lea.sflag [#allocation20], %s680
          %s682 = sand.u32 %s326, 1
          %s683 = scalar_lea.vmem [#allocation21], %s682
          %s685 = ssub.s32 16, 16
          %686 = vsyncadd %s681, %s685
          %s687 = smul.addr %s52, 16
          %s688 = scalar_lea.hbm %s10, %s687
          %s690 = sshll.u32 %s683, 4
          %s691 = int_to_ptr.vmem [resolvable:$true] %s690
          %693 = dma.hbm_to_vmem [thread:$0]  %s688, 16, %s691, %s681
        $region60: #{tpu_custom_call.1} parent=19 // pred_fallthru
          _
        // Predicated region
        $region61: #{tpu_custom_call.1} parent=19 // pred_check
          %p694 = pneg %p362
        $region62: #{tpu_custom_call.1} parent=19 // pred_check_branch
          %696 = sbr.rel (%p694) target = $region64
        $region63: #{tpu_custom_call.1} parent=19 // pred_region
          %s697 = sand.u32 %s44, 1
          %s698 = scalar_lea.sflag [#allocation23], %s697
          %s699 = sand.u32 %s352, 1
          %s700 = scalar_lea.vmem [#allocation22], %s699
          %s702 = ssub.s32 16, 16
          %703 = vsyncadd %s698, %s702
          %s704 = smul.addr %s52, 16
          %s705 = scalar_lea.hbm %s11, %s704
          %s707 = sshll.u32 %s700, 4
          %s708 = int_to_ptr.vmem [resolvable:$true] %s707
          %710 = dma.hbm_to_vmem [thread:$0]  %s705, 16, %s708, %s698
        $region64: #{tpu_custom_call.1} parent=19 // pred_fallthru
          _
        // Predicated region
        $region65: #{tpu_custom_call.1} parent=19 // pred_check
          %p711 = pneg %p388
        $region66: #{tpu_custom_call.1} parent=19 // pred_check_branch
          %713 = sbr.rel (%p711) target = $region68
        $region67: #{tpu_custom_call.1} parent=19 // pred_region
          %s714 = sand.u32 %s44, 1
          %s715 = scalar_lea.sflag [#allocation23], %s714
          %s716 = sand.u32 %s378, 1
          %s717 = scalar_lea.vmem [#allocation24], %s716
          %s719 = ssub.s32 16, 16
          %720 = vsyncadd %s715, %s719
          %s721 = smul.addr %s52, 16
          %s722 = scalar_lea.hbm %s12, %s721
          %s724 = sshll.u32 %s717, 4
          %s725 = int_to_ptr.vmem [resolvable:$true] %s724
          %727 = dma.hbm_to_vmem [thread:$0]  %s722, 16, %s725, %s715
        $region68: #{tpu_custom_call.1} parent=19 // pred_fallthru
          _
        // Predicated region
        $region69: #{tpu_custom_call.1} parent=19 // pred_check
          %p728 = pneg %p414
        $region70: #{tpu_custom_call.1} parent=19 // pred_check_branch
          %730 = sbr.rel (%p728) target = $region72
        $region71: #{tpu_custom_call.1} parent=19 // pred_region
          %s731 = sand.u32 %s44, 1
          %s732 = scalar_lea.sflag [#allocation26], %s731
          %s733 = sand.u32 %s404, 1
          %s734 = scalar_lea.vmem [#allocation25], %s733
          %s736 = ssub.s32 16, 16
          %737 = vsyncadd %s732, %s736
          %s738 = smul.addr %s52, 16
          %s739 = scalar_lea.hbm %s13, %s738
          %s741 = sshll.u32 %s734, 4
          %s742 = int_to_ptr.vmem [resolvable:$true] %s741
          %744 = dma.hbm_to_vmem [thread:$0]  %s739, 16, %s742, %s732
        $region72: #{tpu_custom_call.1} parent=19 // pred_fallthru
          _
        // Predicated region
        $region73: #{tpu_custom_call.1} parent=19 // pred_check
          %p745 = pneg %p440
        $region74: #{tpu_custom_call.1} parent=19 // pred_check_branch
          %747 = sbr.rel (%p745) target = $region76
        $region75: #{tpu_custom_call.1} parent=19 // pred_region
          %s748 = sand.u32 %s44, 1
          %s749 = scalar_lea.sflag [#allocation26], %s748
          %s750 = sand.u32 %s430, 1
          %s751 = scalar_lea.vmem [#allocation27], %s750
          %s753 = ssub.s32 16, 16
          %754 = vsyncadd %s749, %s753
          %s755 = smul.addr %s52, 16
          %s756 = scalar_lea.hbm %s14, %s755
          %s758 = sshll.u32 %s751, 4
          %s759 = int_to_ptr.vmem [resolvable:$true] %s758
          %761 = dma.hbm_to_vmem [thread:$0]  %s756, 16, %s759, %s749
        $region76: #{tpu_custom_call.1} parent=19 // pred_fallthru
          _
      $region20: #{tpu_custom_call.1} parent=5 // pred_fallthru
        _
      %p762 = scmp.le.s32.totalorder 1, %s44
      %p763 = scmp.lt.s32.totalorder %s44, 3
      %p764 = pnand %p762, %p763
      %p765 = pneg %p764
      // Predicated region
      $region77: #{tpu_custom_call.1} parent=5 // pred_check
        _
      $region78: #{tpu_custom_call.1} parent=5 // pred_check_branch
        %767 = sbr.rel (%p764) target = $region80
      $region79: #{tpu_custom_call.1} parent=5 // pred_region
        %s768 = ssub.s32 %s44, 1
        // Predicated region
        $region81: #{tpu_custom_call.1} parent=79 // pred_check
          %p769 = pneg %p82
        $region82: #{tpu_custom_call.1} parent=79 // pred_check_branch
          %771 = sbr.rel (%p769) target = $region84
        $region83: #{tpu_custom_call.1} parent=79 // pred_region
          %772 = dma.done [#allocation5], 512
        $region84: #{tpu_custom_call.1} parent=79 // pred_fallthru
          _
        %s773 = sand.u32 %s49, 1
        %s774 = scalar_lea.sflag [#allocation8], %s773
        %s775 = sand.u32 %s95, 1
        %s776 = smul.addr %s775, 16
        %s777 = scalar_lea.vmem [#allocation7], %s776
        // Predicated region
        $region85: #{tpu_custom_call.1} parent=79 // pred_check
          %p778 = pneg %p108
        $region86: #{tpu_custom_call.1} parent=79 // pred_check_branch
          %780 = sbr.rel (%p778) target = $region88
        $region87: #{tpu_custom_call.1} parent=79 // pred_region
          %781 = dma.done %s774, 256
        $region88: #{tpu_custom_call.1} parent=79 // pred_fallthru
          _
        %s782 = sand.u32 %s49, 1
        %s783 = scalar_lea.sflag [#allocation8], %s782
        %s784 = sand.u32 %s121, 1
        %s785 = scalar_lea.vmem [#allocation9], %s784
        // Predicated region
        $region89: #{tpu_custom_call.1} parent=79 // pred_check
          %p786 = pneg %p134
        $region90: #{tpu_custom_call.1} parent=79 // pred_check_branch
          %788 = sbr.rel (%p786) target = $region92
        $region91: #{tpu_custom_call.1} parent=79 // pred_region
          %789 = dma.done %s783, 16
        $region92: #{tpu_custom_call.1} parent=79 // pred_fallthru
          _
        %s790 = sand.u32 %s49, 1
        %s791 = scalar_lea.sflag [#allocation11], %s790
        %s792 = sand.u32 %s147, 1
        %s793 = smul.addr %s792, 16
        %s794 = scalar_lea.vmem [#allocation10], %s793
        // Predicated region
        $region93: #{tpu_custom_call.1} parent=79 // pred_check
          %p795 = pneg %p160
        $region94: #{tpu_custom_call.1} parent=79 // pred_check_branch
          %797 = sbr.rel (%p795) target = $region96
        $region95: #{tpu_custom_call.1} parent=79 // pred_region
          %798 = dma.done %s791, 256
        $region96: #{tpu_custom_call.1} parent=79 // pred_fallthru
          _
        %s799 = sand.u32 %s49, 1
        %s800 = scalar_lea.sflag [#allocation11], %s799
        %s801 = sand.u32 %s173, 1
        %s802 = scalar_lea.vmem [#allocation12], %s801
        // Predicated region
        $region97: #{tpu_custom_call.1} parent=79 // pred_check
          %p803 = pneg %p186
        $region98: #{tpu_custom_call.1} parent=79 // pred_check_branch
          %805 = sbr.rel (%p803) target = $region100
        $region99: #{tpu_custom_call.1} parent=79 // pred_region
          %806 = dma.done %s800, 16
        $region100: #{tpu_custom_call.1} parent=79 // pred_fallthru
          _
        %s807 = sand.u32 %s49, 1
        %s808 = scalar_lea.sflag [#allocation14], %s807
        %s809 = sand.u32 %s199, 1
        %s810 = scalar_lea.vmem [#allocation13], %s809
        // Predicated region
        $region101: #{tpu_custom_call.1} parent=79 // pred_check
          %p811 = pneg %p212
        $region102: #{tpu_custom_call.1} parent=79 // pred_check_branch
          %813 = sbr.rel (%p811) target = $region104
        $region103: #{tpu_custom_call.1} parent=79 // pred_region
          %814 = dma.done %s808, 16
        $region104: #{tpu_custom_call.1} parent=79 // pred_fallthru
          _
        %s815 = sand.u32 %s49, 1
        %s816 = scalar_lea.sflag [#allocation14], %s815
        %s817 = sand.u32 %s225, 1
        %s818 = scalar_lea.vmem [#allocation15], %s817
        // Predicated region
        $region105: #{tpu_custom_call.1} parent=79 // pred_check
          %p819 = pneg %p238
        $region106: #{tpu_custom_call.1} parent=79 // pred_check_branch
          %821 = sbr.rel (%p819) target = $region108
        $region107: #{tpu_custom_call.1} parent=79 // pred_region
          %822 = dma.done %s816, 16
        $region108: #{tpu_custom_call.1} parent=79 // pred_fallthru
          _
        %s823 = sand.u32 %s49, 1
        %s824 = scalar_lea.sflag [#allocation17], %s823
        %s825 = sand.u32 %s251, 1
        %s826 = smul.addr %s825, 16
        %s827 = scalar_lea.vmem [#allocation16], %s826
        // Predicated region
        $region109: #{tpu_custom_call.1} parent=79 // pred_check
          %p828 = pneg %p264
        $region110: #{tpu_custom_call.1} parent=79 // pred_check_branch
          %830 = sbr.rel (%p828) target = $region112
        $region111: #{tpu_custom_call.1} parent=79 // pred_region
          %831 = dma.done %s824, 256
        $region112: #{tpu_custom_call.1} parent=79 // pred_fallthru
          _
        %s832 = sand.u32 %s49, 1
        %s833 = scalar_lea.sflag [#allocation17], %s832
        %s834 = sand.u32 %s277, 1
        %s835 = scalar_lea.vmem [#allocation18], %s834
        // Predicated region
        $region113: #{tpu_custom_call.1} parent=79 // pred_check
          %p836 = pneg %p290
        $region114: #{tpu_custom_call.1} parent=79 // pred_check_branch
          %838 = sbr.rel (%p836) target = $region116
        $region115: #{tpu_custom_call.1} parent=79 // pred_region
          %839 = dma.done %s833, 16
        $region116: #{tpu_custom_call.1} parent=79 // pred_fallthru
          _
        %s840 = sand.u32 %s49, 1
        %s841 = scalar_lea.sflag [#allocation20], %s840
        %s842 = sand.u32 %s303, 1
        %s843 = smul.addr %s842, 32
        %s844 = scalar_lea.vmem [#allocation19], %s843
        // Predicated region
        $region117: #{tpu_custom_call.1} parent=79 // pred_check
          %p845 = pneg %p316
        $region118: #{tpu_custom_call.1} parent=79 // pred_check_branch
          %847 = sbr.rel (%p845) target = $region120
        $region119: #{tpu_custom_call.1} parent=79 // pred_region
          %848 = dma.done %s841, 512
        $region120: #{tpu_custom_call.1} parent=79 // pred_fallthru
          _
        %s849 = sand.u32 %s49, 1
        %s850 = scalar_lea.sflag [#allocation20], %s849
        %s851 = sand.u32 %s329, 1
        %s852 = scalar_lea.vmem [#allocation21], %s851
        // Predicated region
        $region121: #{tpu_custom_call.1} parent=79 // pred_check
          %p853 = pneg %p342
        $region122: #{tpu_custom_call.1} parent=79 // pred_check_branch
          %855 = sbr.rel (%p853) target = $region124
        $region123: #{tpu_custom_call.1} parent=79 // pred_region
          %856 = dma.done %s850, 16
        $region124: #{tpu_custom_call.1} parent=79 // pred_fallthru
          _
        %s857 = sand.u32 %s49, 1
        %s858 = scalar_lea.sflag [#allocation23], %s857
        %s859 = sand.u32 %s355, 1
        %s860 = scalar_lea.vmem [#allocation22], %s859
        // Predicated region
        $region125: #{tpu_custom_call.1} parent=79 // pred_check
          %p861 = pneg %p368
        $region126: #{tpu_custom_call.1} parent=79 // pred_check_branch
          %863 = sbr.rel (%p861) target = $region128
        $region127: #{tpu_custom_call.1} parent=79 // pred_region
          %864 = dma.done %s858, 16
        $region128: #{tpu_custom_call.1} parent=79 // pred_fallthru
          _
        %s865 = sand.u32 %s49, 1
        %s866 = scalar_lea.sflag [#allocation23], %s865
        %s867 = sand.u32 %s381, 1
        %s868 = scalar_lea.vmem [#allocation24], %s867
        // Predicated region
        $region129: #{tpu_custom_call.1} parent=79 // pred_check
          %p869 = pneg %p394
        $region130: #{tpu_custom_call.1} parent=79 // pred_check_branch
          %871 = sbr.rel (%p869) target = $region132
        $region131: #{tpu_custom_call.1} parent=79 // pred_region
          %872 = dma.done %s866, 16
        $region132: #{tpu_custom_call.1} parent=79 // pred_fallthru
          _
        %s873 = sand.u32 %s49, 1
        %s874 = scalar_lea.sflag [#allocation26], %s873
        %s875 = sand.u32 %s407, 1
        %s876 = scalar_lea.vmem [#allocation25], %s875
        // Predicated region
        $region133: #{tpu_custom_call.1} parent=79 // pred_check
          %p877 = pneg %p420
        $region134: #{tpu_custom_call.1} parent=79 // pred_check_branch
          %879 = sbr.rel (%p877) target = $region136
        $region135: #{tpu_custom_call.1} parent=79 // pred_region
          %880 = dma.done %s874, 16
        $region136: #{tpu_custom_call.1} parent=79 // pred_fallthru
          _
        %s881 = sand.u32 %s49, 1
        %s882 = scalar_lea.sflag [#allocation26], %s881
        %s883 = sand.u32 %s433, 1
        %s884 = scalar_lea.vmem [#allocation27], %s883
        // Predicated region
        $region137: #{tpu_custom_call.1} parent=79 // pred_check
          %p885 = pneg %p446
        $region138: #{tpu_custom_call.1} parent=79 // pred_check_branch
          %887 = sbr.rel (%p885) target = $region140
        $region139: #{tpu_custom_call.1} parent=79 // pred_region
          %888 = dma.done %s882, 16
        $region140: #{tpu_custom_call.1} parent=79 // pred_fallthru
          _
        %p889 = pneg %p82
        %p890 = pneg %p79
        %s891 = sand.u32 %s49, 1
        %s892 = scalar_lea.sflag [#allocation8], %s891
        %s893 = sand.u32 %s95, 1
        %s894 = smul.addr %s893, 16
        %s895 = scalar_lea.vmem [#allocation7], %s894
        %p896 = pneg %p108
        %p897 = pneg %p105
        %s898 = sand.u32 %s49, 1
        %s899 = scalar_lea.sflag [#allocation8], %s898
        %s900 = sand.u32 %s121, 1
        %s901 = scalar_lea.vmem [#allocation9], %s900
        %p902 = pneg %p134
        %p903 = pneg %p131
        %s904 = sand.u32 %s49, 1
        %s905 = scalar_lea.sflag [#allocation11], %s904
        %s906 = sand.u32 %s147, 1
        %s907 = smul.addr %s906, 16
        %s908 = scalar_lea.vmem [#allocation10], %s907
        %p909 = pneg %p160
        %p910 = pneg %p157
        %s911 = sand.u32 %s49, 1
        %s912 = scalar_lea.sflag [#allocation11], %s911
        %s913 = sand.u32 %s173, 1
        %s914 = scalar_lea.vmem [#allocation12], %s913
        %p915 = pneg %p186
        %p916 = pneg %p183
        %s917 = sand.u32 %s49, 1
        %s918 = scalar_lea.sflag [#allocation14], %s917
        %s919 = sand.u32 %s199, 1
        %s920 = scalar_lea.vmem [#allocation13], %s919
        %p921 = pneg %p212
        %p922 = pneg %p209
        %s923 = sand.u32 %s49, 1
        %s924 = scalar_lea.sflag [#allocation14], %s923
        %s925 = sand.u32 %s225, 1
        %s926 = scalar_lea.vmem [#allocation15], %s925
        %p927 = pneg %p238
        %p928 = pneg %p235
        %s929 = sand.u32 %s49, 1
        %s930 = scalar_lea.sflag [#allocation17], %s929
        %s931 = sand.u32 %s251, 1
        %s932 = smul.addr %s931, 16
        %s933 = scalar_lea.vmem [#allocation16], %s932
        %p934 = pneg %p264
        %p935 = pneg %p261
        %s936 = sand.u32 %s49, 1
        %s937 = scalar_lea.sflag [#allocation17], %s936
        %s938 = sand.u32 %s277, 1
        %s939 = scalar_lea.vmem [#allocation18], %s938
        %p940 = pneg %p290
        %p941 = pneg %p287
        %s942 = sand.u32 %s49, 1
        %s943 = scalar_lea.sflag [#allocation20], %s942
        %s944 = sand.u32 %s303, 1
        %s945 = smul.addr %s944, 32
        %s946 = scalar_lea.vmem [#allocation19], %s945
        %p947 = pneg %p316
        %p948 = pneg %p313
        %s949 = sand.u32 %s49, 1
        %s950 = scalar_lea.sflag [#allocation20], %s949
        %s951 = sand.u32 %s329, 1
        %s952 = scalar_lea.vmem [#allocation21], %s951
        %p953 = pneg %p342
        %p954 = pneg %p339
        %s955 = sand.u32 %s49, 1
        %s956 = scalar_lea.sflag [#allocation23], %s955
        %s957 = sand.u32 %s355, 1
        %s958 = scalar_lea.vmem [#allocation22], %s957
        %p959 = pneg %p368
        %p960 = pneg %p365
        %s961 = sand.u32 %s49, 1
        %s962 = scalar_lea.sflag [#allocation23], %s961
        %s963 = sand.u32 %s381, 1
        %s964 = scalar_lea.vmem [#allocation24], %s963
        %p965 = pneg %p394
        %p966 = pneg %p391
        %s967 = sand.u32 %s49, 1
        %s968 = scalar_lea.sflag [#allocation26], %s967
        %s969 = sand.u32 %s407, 1
        %s970 = scalar_lea.vmem [#allocation25], %s969
        %p971 = pneg %p420
        %p972 = pneg %p417
        %s973 = sand.u32 %s49, 1
        %s974 = scalar_lea.sflag [#allocation26], %s973
        %s975 = sand.u32 %s433, 1
        %s976 = scalar_lea.vmem [#allocation27], %s975
        %p977 = pneg %p446
        %p978 = pneg %p443
        %p979 = pneg %p472
        %p980 = pneg %p469
        %s981 = smul.u32 2, %s53
        %s982 = smul.u32 2, %s53
        %p984 = scmp.eq.s32.totalorder %s54, 0
        // Predicated region
        $region141: #{tpu_custom_call.1} parent=79 // pred_check
          %p985 = pneg %p984
        $region142: #{tpu_custom_call.1} parent=79 // pred_check_branch
          %987 = sbr.rel (%p985) target = $region144
        $region143: #{tpu_custom_call.1} parent=79 // pred_region
          %v988 = vld [vmem:[#allocation4] sm:$0xff]
          %v989 = vld [vmem:[#allocation4 + $0x8] sm:$0xff]
          %v990 = vld [vmem:[#allocation4 + $0x10] sm:$0xff]
          %v991 = vld [vmem:[#allocation4 + $0x18] sm:$0xff]
          %vm992 = vcmask 261120
          %993 = vst.msk [vmem:[#allocation2] sm:$0xff] %vm992, %v988
          %994 = vst.msk [vmem:[#allocation2 + $0x8] sm:$0xff] %vm992, %v989
          %995 = vst.msk [vmem:[#allocation2 + $0x10] sm:$0xff] %vm992, %v990
          %996 = vst.msk [vmem:[#allocation2 + $0x18] sm:$0xff] %vm992, %v991
        $region144: #{tpu_custom_call.1} parent=79 // pred_fallthru
          _
        %v997 = vld [vmem:[#allocation2] sm:$0xff]
        %v998 = vld [vmem:[#allocation2 + $0x8] sm:$0xff]
        %v999 = vld [vmem:[#allocation2 + $0x10] sm:$0xff]
        %v1000 = vld [vmem:[#allocation2 + $0x18] sm:$0xff]
        %v1001 = vpack.c.bf16 %v998, %v997
        %v1002 = vpack.c.bf16 %v1000, %v999
        %v1003 = vld [vmem:[%s777] sm:$0xf]
        %v1004 = vld [vmem:[%s777 + $0x4] sm:$0xf]
        %v1005 = vld [vmem:[%s777 + $0x8] sm:$0xf]
        %v1006 = vld [vmem:[%s777 + $0xc] sm:$0xf]
        %v1007 = vld [vmem:[%s785] sm:$0x1]
        %v1009 = vlaneseq
        %v1010 = vshrl.u32 %v1009, 7
        %v1011 = vsub.s32 0, %v1010
        %v1012 = vrot.slane %v1007, %v1011
        %v1018 = vunpack.c.l.b16 %v1003
        %v1019 = vunpack.c.l.b16 %v1004
        %v1020 = vunpack.c.l.b16 %v1005
        %v1021 = vunpack.c.l.b16 %v1006
        %v1022 = vpack.c.b16 %v1019, %v1018
        %v1023 = vpack.c.b16 %v1021, %v1020
        %vm1026 = vcmask 261120
        %v1028 = vsel %vm1026, %v1001, 0
        %v1031 = vsel %vm1026, %v1002, 0
        %1033 = vmatprep.subr.bf16.mxu0 0
        %1034 = vmatpush1.bf16.msra.mxu0 %v1022
        %1035 = vmatprep.subr.bf16.mxu0 0
        %1036 = vmatpush1.bf16.msra.mxu0 %v1023
        %1037 = vmatprep.subr.bf16.mxu0 0
        %1038 = vmatpush1.bf16.msra.mxu0 0
        %1039 = vmatprep.subr.bf16.mxu0 0
        %1040 = vmatpush1.bf16.msra.mxu0 0
        %1041 = vmatprep.subr.bf16.mxu0 0
        %1042 = vmatpush1.bf16.msra.mxu0 0
        %1043 = vmatprep.subr.bf16.mxu0 0
        %1044 = vmatpush1.bf16.msra.mxu0 0
        %1045 = vmatprep.subr.bf16.mxu0 0
        %1046 = vmatpush1.bf16.msra.mxu0 0
        %1047 = vmatprep.subr.bf16.mxu0 0
        %1048 = vmatpush1.bf16.msra.mxu0 0
        %1049 = vmatprep.subr.bf16.mxu0 0
        %1050 = vmatpush1.bf16.msra.mxu0 0
        %1051 = vmatprep.subr.bf16.mxu0 0
        %1052 = vmatpush1.bf16.msra.mxu0 0
        %1053 = vmatprep.subr.bf16.mxu0 0
        %1054 = vmatpush1.bf16.msra.mxu0 0
        %1055 = vmatprep.subr.bf16.mxu0 0
        %1056 = vmatpush1.bf16.msra.mxu0 0
        %1057 = vmatprep.subr.bf16.mxu0 0
        %1058 = vmatpush1.bf16.msra.mxu0 0
        %1059 = vmatprep.subr.bf16.mxu0 0
        %1060 = vmatpush1.bf16.msra.mxu0 0
        %1061 = vmatprep.subr.bf16.mxu0 0
        %1062 = vmatpush1.bf16.msra.mxu0 0
        %1063 = vmatprep.subr.bf16.mxu0 0
        %1064 = vmatpush1.bf16.msra.mxu0 0
        %1065 = vmatprep.mubr.bf16.mxu0 0
        %1066 = vmatmul.mubr.bf16.gmra.mrb[0].mxu0 %v1028
        %v1067 = vpop.f32.mrb[0].mxu0
        %v1068 = vadd.f32 %v1012, %v1067
        %v1069 = vpop.f32.mrb[0].mxu0
        %v1070 = vpop.f32.mrb[0].mxu0
        %v1071 = vadd.f32 %v1012, %v1070
        %v1072 = vpop.f32.mrb[0].mxu0
        %1073 = vmatprep.mubr.bf16.mxu0 0
        %1074 = vmatmul.mubr.bf16.gmra.mrb[0].mxu0 %v1031
        %v1075 = vpop.f32.mrb[0].mxu0
        %v1076 = vadd.f32 %v1012, %v1075
        %v1077 = vpop.f32.mrb[0].mxu0
        %v1078 = vpop.f32.mrb[0].mxu0
        %v1079 = vadd.f32 %v1012, %v1078
        %v1080 = vpop.f32.mrb[0].mxu0
        %1081 = vdwg.mxu0
        %v1082 = vpack.c.bf16 %v1071, %v1068
        %v1083 = vpack.c.bf16 %v1079, %v1076
        %1085 = vrot.lane.b32.xlu0 %v1082, 96
        %v1086 = vpop.permute.xlu0 %1085
        %vm1087 = vcmask 64512
        %v1089 = vsel %vm1087, %v1082, 0
        %v1092 = vsel %vm1087, %v1086, 0
        %1094 = vmatprep.subr.bf16.mxu0 0
        %1095 = vmatpush1.bf16.xpose.msra.mxu0 %v1092
        %1096 = vmatprep.subr.bf16.mxu0 0
        %1097 = vmatpush1.bf16.xpose.msra.mxu0 0
        %1098 = vmatprep.subr.bf16.mxu0 0
        %1099 = vmatpush1.bf16.xpose.msra.mxu0 0
        %1100 = vmatprep.subr.bf16.mxu0 0
        %1101 = vmatpush1.bf16.xpose.msra.mxu0 0
        %1102 = vmatprep.subr.bf16.mxu0 0
        %1103 = vmatpush1.bf16.xpose.msra.mxu0 0
        %1104 = vmatprep.subr.bf16.mxu0 0
        %1105 = vmatpush1.bf16.xpose.msra.mxu0 0
        %1106 = vmatprep.subr.bf16.mxu0 0
        %1107 = vmatpush1.bf16.xpose.msra.mxu0 0
        %1108 = vmatprep.subr.bf16.mxu0 0
        %1109 = vmatpush1.bf16.xpose.msra.mxu0 0
        %1110 = vmatprep.subr.bf16.mxu0 0
        %1111 = vmatpush1.bf16.xpose.msra.mxu0 0
        %1112 = vmatprep.subr.bf16.mxu0 0
        %1113 = vmatpush1.bf16.xpose.msra.mxu0 0
        %1114 = vmatprep.subr.bf16.mxu0 0
        %1115 = vmatpush1.bf16.xpose.msra.mxu0 0
        %1116 = vmatprep.subr.bf16.mxu0 0
        %1117 = vmatpush1.bf16.xpose.msra.mxu0 0
        %1118 = vmatprep.subr.bf16.mxu0 0
        %1119 = vmatpush1.bf16.xpose.msra.mxu0 0
        %1120 = vmatprep.subr.bf16.mxu0 0
        %1121 = vmatpush1.bf16.xpose.msra.mxu0 0
        %1122 = vmatprep.subr.bf16.mxu0 0
        %1123 = vmatpush1.bf16.xpose.msra.mxu0 0
        %1124 = vmatprep.subr.bf16.mxu0 0
        %1125 = vmatpush1.bf16.xpose.msra.mxu0 0
        %1126 = vmatprep.mubr.bf16.mxu0 0
        %1127 = vmatmul.mubr.bf16.gmra.mrb[0].mxu0 %v1089
        %v1128 = vpop.f32.mrb[0].mxu0
        %v1129 = vadd.f32 0.0, %v1128
        %v1130 = vpop.f32.mrb[0].mxu0
        %v1131 = vpop.f32.mrb[0].mxu0
        %v1132 = vadd.f32 0.0, %v1131
        %v1133 = vpop.f32.mrb[0].mxu0
        %1134 = vdwg.mxu0
        %1136 = vrot.lane.b32.xlu0 %v1083, 96
        %v1137 = vpop.permute.xlu0 %1136
        %v1139 = vsel %vm1087, %v1083, 0
        %v1142 = vsel %vm1087, %v1137, 0
        %1144 = vmatprep.subr.bf16.mxu0 0
        %1145 = vmatpush1.bf16.xpose.msra.mxu0 %v1142
        %1146 = vmatprep.subr.bf16.mxu0 0
        %1147 = vmatpush1.bf16.xpose.msra.mxu0 0
        %1148 = vmatprep.subr.bf16.mxu0 0
        %1149 = vmatpush1.bf16.xpose.msra.mxu0 0
        %1150 = vmatprep.subr.bf16.mxu0 0
        %1151 = vmatpush1.bf16.xpose.msra.mxu0 0
        %1152 = vmatprep.subr.bf16.mxu0 0
        %1153 = vmatpush1.bf16.xpose.msra.mxu0 0
        %1154 = vmatprep.subr.bf16.mxu0 0
        %1155 = vmatpush1.bf16.xpose.msra.mxu0 0
        %1156 = vmatprep.subr.bf16.mxu0 0
        %1157 = vmatpush1.bf16.xpose.msra.mxu0 0
        %1158 = vmatprep.subr.bf16.mxu0 0
        %1159 = vmatpush1.bf16.xpose.msra.mxu0 0
        %1160 = vmatprep.subr.bf16.mxu0 0
        %1161 = vmatpush1.bf16.xpose.msra.mxu0 0
        %1162 = vmatprep.subr.bf16.mxu0 0
        %1163 = vmatpush1.bf16.xpose.msra.mxu0 0
        %1164 = vmatprep.subr.bf16.mxu0 0
        %1165 = vmatpush1.bf16.xpose.msra.mxu0 0
        %1166 = vmatprep.subr.bf16.mxu0 0
        %1167 = vmatpush1.bf16.xpose.msra.mxu0 0
        %1168 = vmatprep.subr.bf16.mxu0 0
        %1169 = vmatpush1.bf16.xpose.msra.mxu0 0
        %1170 = vmatprep.subr.bf16.mxu0 0
        %1171 = vmatpush1.bf16.xpose.msra.mxu0 0
        %1172 = vmatprep.subr.bf16.mxu0 0
        %1173 = vmatpush1.bf16.xpose.msra.mxu0 0
        %1174 = vmatprep.subr.bf16.mxu0 0
        %1175 = vmatpush1.bf16.xpose.msra.mxu0 0
        %1176 = vmatprep.mubr.bf16.mxu0 0
        %1177 = vmatmul.mubr.bf16.gmra.mrb[0].mxu0 %v1139
        %v1178 = vpop.f32.mrb[0].mxu0
        %v1179 = vadd.f32 0.0, %v1178
        %v1180 = vpop.f32.mrb[0].mxu0
        %v1181 = vpop.f32.mrb[0].mxu0
        %v1182 = vadd.f32 0.0, %v1181
        %v1183 = vpop.f32.mrb[0].mxu0
        %1184 = vdwg.mxu0
        %v1185 = vsel %vm1087, %v1129, -inf
        %1186 = vmax.xlane.f32.xlu0 %v1185
        %v1187 = vpop.xlane.xlu0 %1186
        %v1188 = vsel %vm1087, %v1132, -inf
        %1189 = vmax.xlane.f32.xlu0 %v1188
        %v1190 = vpop.xlane.xlu0 %1189
        %v1191 = vsel %vm1087, %v1179, -inf
        %1192 = vmax.xlane.f32.xlu0 %v1191
        %v1193 = vpop.xlane.xlu0 %1192
        %v1194 = vsel %vm1087, %v1182, -inf
        %1195 = vmax.xlane.f32.xlu0 %v1194
        %v1196 = vpop.xlane.xlu0 %1195
        %v1197 = vsub.f32 -inf, %v1187
        %v1198 = vsub.f32 -inf, %v1190
        %v1199 = vsub.f32 -inf, %v1193
        %v1200 = vsub.f32 -inf, %v1196
        %v1201 = vmul.f32 %v1197, 1.442695
        %v1202 = vpow.pop %v1201
        %v1203 = vmul.f32 %v1198, 1.442695
        %v1204 = vpow.pop %v1203
        %v1205 = vmul.f32 %v1199, 1.442695
        %v1206 = vpow.pop %v1205
        %v1207 = vmul.f32 %v1200, 1.442695
        %v1208 = vpow.pop %v1207
        %v1209 = vsub.f32 %v1129, %v1187
        %v1210 = vsub.f32 %v1132, %v1190
        %v1211 = vsub.f32 %v1179, %v1193
        %v1212 = vsub.f32 %v1182, %v1196
        %v1213 = vmul.f32 %v1209, 1.442695
        %v1214 = vpow.pop %v1213
        %v1215 = vmul.f32 %v1210, 1.442695
        %v1216 = vpow.pop %v1215
        %v1217 = vmul.f32 %v1211, 1.442695
        %v1218 = vpow.pop %v1217
        %v1219 = vmul.f32 %v1212, 1.442695
        %v1220 = vpow.pop %v1219
        %v1221 = vmul.f32 %v1202, 0.0
        %v1222 = vmul.f32 %v1204, 0.0
        %v1223 = vmul.f32 %v1206, 0.0
        %v1224 = vmul.f32 %v1208, 0.0
        %v1225 = vsel %vm1087, %v1214, 0.0
        %1226 = vadd.xlane.f32.xlu0 %v1225
        %v1227 = vpop.xlane.xlu0 %1226
        %v1228 = vsel %vm1087, %v1216, 0.0
        %1229 = vadd.xlane.f32.xlu0 %v1228
        %v1230 = vpop.xlane.xlu0 %1229
        %v1231 = vsel %vm1087, %v1218, 0.0
        %1232 = vadd.xlane.f32.xlu0 %v1231
        %v1233 = vpop.xlane.xlu0 %1232
        %v1234 = vsel %vm1087, %v1220, 0.0
        %1235 = vadd.xlane.f32.xlu0 %v1234
        %v1236 = vpop.xlane.xlu0 %1235
        %v1237 = vadd.f32 %v1221, %v1227
        %v1238 = vadd.f32 %v1222, %v1230
        %v1239 = vadd.f32 %v1223, %v1233
        %v1240 = vadd.f32 %v1224, %v1236
        %v1241 = vpack.c.bf16 %v1216, %v1214
        %v1242 = vpack.c.bf16 %v1220, %v1218
        %1243 = vrot.lane.b32.xlu0 %v1082, 64
        %v1244 = vpop.permute.xlu0 %1243
        %v1246 = vsel %vm1087, %v1241, 0
        %vm1248 = vcmask 1043456
        %v1250 = vsel %vm1248, %v1244, 0
        %1252 = vmatprep.subr.bf16.mxu0 0
        %1253 = vmatpush1.bf16.msra.mxu0 %v1250
        %1254 = vmatprep.subr.bf16.mxu0 0
        %1255 = vmatpush1.bf16.msra.mxu0 0
        %1256 = vmatprep.subr.bf16.mxu0 0
        %1257 = vmatpush1.bf16.msra.mxu0 0
        %1258 = vmatprep.subr.bf16.mxu0 0
        %1259 = vmatpush1.bf16.msra.mxu0 0
        %1260 = vmatprep.subr.bf16.mxu0 0
        %1261 = vmatpush1.bf16.msra.mxu0 0
        %1262 = vmatprep.subr.bf16.mxu0 0
        %1263 = vmatpush1.bf16.msra.mxu0 0
        %1264 = vmatprep.subr.bf16.mxu0 0
        %1265 = vmatpush1.bf16.msra.mxu0 0
        %1266 = vmatprep.subr.bf16.mxu0 0
        %1267 = vmatpush1.bf16.msra.mxu0 0
        %1268 = vmatprep.subr.bf16.mxu0 0
        %1269 = vmatpush1.bf16.msra.mxu0 0
        %1270 = vmatprep.subr.bf16.mxu0 0
        %1271 = vmatpush1.bf16.msra.mxu0 0
        %1272 = vmatprep.subr.bf16.mxu0 0
        %1273 = vmatpush1.bf16.msra.mxu0 0
        %1274 = vmatprep.subr.bf16.mxu0 0
        %1275 = vmatpush1.bf16.msra.mxu0 0
        %1276 = vmatprep.subr.bf16.mxu0 0
        %1277 = vmatpush1.bf16.msra.mxu0 0
        %1278 = vmatprep.subr.bf16.mxu0 0
        %1279 = vmatpush1.bf16.msra.mxu0 0
        %1280 = vmatprep.subr.bf16.mxu0 0
        %1281 = vmatpush1.bf16.msra.mxu0 0
        %1282 = vmatprep.subr.bf16.mxu0 0
        %1283 = vmatpush1.bf16.msra.mxu0 0
        %1284 = vmatprep.mubr.bf16.mxu0 0
        %1285 = vmatmul.mubr.bf16.gmra.mrb[0].mxu0 %v1246
        %v1286 = vpop.f32.mrb[0].mxu0
        %v1287 = vadd.f32 0.0, %v1286
        %v1288 = vpop.f32.mrb[0].mxu0
        %v1289 = vpop.f32.mrb[0].mxu0
        %v1290 = vadd.f32 0.0, %v1289
        %v1291 = vpop.f32.mrb[0].mxu0
        %1292 = vdwg.mxu0
        %1293 = vrot.lane.b32.xlu0 %v1083, 64
        %v1294 = vpop.permute.xlu0 %1293
        %v1296 = vsel %vm1087, %v1242, 0
        %v1299 = vsel %vm1248, %v1294, 0
        %1301 = vmatprep.subr.bf16.mxu0 0
        %1302 = vmatpush1.bf16.msra.mxu0 %v1299
        %1303 = vmatprep.subr.bf16.mxu0 0
        %1304 = vmatpush1.bf16.msra.mxu0 0
        %1305 = vmatprep.subr.bf16.mxu0 0
        %1306 = vmatpush1.bf16.msra.mxu0 0
        %1307 = vmatprep.subr.bf16.mxu0 0
        %1308 = vmatpush1.bf16.msra.mxu0 0
        %1309 = vmatprep.subr.bf16.mxu0 0
        %1310 = vmatpush1.bf16.msra.mxu0 0
        %1311 = vmatprep.subr.bf16.mxu0 0
        %1312 = vmatpush1.bf16.msra.mxu0 0
        %1313 = vmatprep.subr.bf16.mxu0 0
        %1314 = vmatpush1.bf16.msra.mxu0 0
        %1315 = vmatprep.subr.bf16.mxu0 0
        %1316 = vmatpush1.bf16.msra.mxu0 0
        %1317 = vmatprep.subr.bf16.mxu0 0
        %1318 = vmatpush1.bf16.msra.mxu0 0
        %1319 = vmatprep.subr.bf16.mxu0 0
        %1320 = vmatpush1.bf16.msra.mxu0 0
        %1321 = vmatprep.subr.bf16.mxu0 0
        %1322 = vmatpush1.bf16.msra.mxu0 0
        %1323 = vmatprep.subr.bf16.mxu0 0
        %1324 = vmatpush1.bf16.msra.mxu0 0
        %1325 = vmatprep.subr.bf16.mxu0 0
        %1326 = vmatpush1.bf16.msra.mxu0 0
        %1327 = vmatprep.subr.bf16.mxu0 0
        %1328 = vmatpush1.bf16.msra.mxu0 0
        %1329 = vmatprep.subr.bf16.mxu0 0
        %1330 = vmatpush1.bf16.msra.mxu0 0
        %1331 = vmatprep.subr.bf16.mxu0 0
        %1332 = vmatpush1.bf16.msra.mxu0 0
        %1333 = vmatprep.mubr.bf16.mxu0 0
        %1334 = vmatmul.mubr.bf16.gmra.mrb[0].mxu0 %v1296
        %v1335 = vpop.f32.mrb[0].mxu0
        %v1336 = vadd.f32 0.0, %v1335
        %v1337 = vpop.f32.mrb[0].mxu0
        %v1338 = vpop.f32.mrb[0].mxu0
        %v1339 = vadd.f32 0.0, %v1338
        %v1340 = vpop.f32.mrb[0].mxu0
        %1341 = vdwg.mxu0
        %v1342 = vadd.f32 %v1221, %v1287
        %v1343 = vadd.f32 %v1222, %v1290
        %v1344 = vadd.f32 %v1223, %v1336
        %v1345 = vadd.f32 %v1224, %v1339
        %v1346 = vrot.slane %v1082, 4
        %1347 = vrot.lane.b32.xlu0 %v1346, 96
        %v1348 = vpop.permute.xlu0 %1347
        %v1350 = vsel %vm1087, %v1348, 0
        %1352 = vmatprep.subr.bf16.mxu0 0
        %1353 = vmatpush1.bf16.xpose.msra.mxu0 %v1350
        %1354 = vmatprep.subr.bf16.mxu0 0
        %1355 = vmatpush1.bf16.xpose.msra.mxu0 0
        %1356 = vmatprep.subr.bf16.mxu0 0
        %1357 = vmatpush1.bf16.xpose.msra.mxu0 0
        %1358 = vmatprep.subr.bf16.mxu0 0
        %1359 = vmatpush1.bf16.xpose.msra.mxu0 0
        %1360 = vmatprep.subr.bf16.mxu0 0
        %1361 = vmatpush1.bf16.xpose.msra.mxu0 0
        %1362 = vmatprep.subr.bf16.mxu0 0
        %1363 = vmatpush1.bf16.xpose.msra.mxu0 0
        %1364 = vmatprep.subr.bf16.mxu0 0
        %1365 = vmatpush1.bf16.xpose.msra.mxu0 0
        %1366 = vmatprep.subr.bf16.mxu0 0
        %1367 = vmatpush1.bf16.xpose.msra.mxu0 0
        %1368 = vmatprep.subr.bf16.mxu0 0
        %1369 = vmatpush1.bf16.xpose.msra.mxu0 0
        %1370 = vmatprep.subr.bf16.mxu0 0
        %1371 = vmatpush1.bf16.xpose.msra.mxu0 0
        %1372 = vmatprep.subr.bf16.mxu0 0
        %1373 = vmatpush1.bf16.xpose.msra.mxu0 0
        %1374 = vmatprep.subr.bf16.mxu0 0
        %1375 = vmatpush1.bf16.xpose.msra.mxu0 0
        %1376 = vmatprep.subr.bf16.mxu0 0
        %1377 = vmatpush1.bf16.xpose.msra.mxu0 0
        %1378 = vmatprep.subr.bf16.mxu0 0
        %1379 = vmatpush1.bf16.xpose.msra.mxu0 0
        %1380 = vmatprep.subr.bf16.mxu0 0
        %1381 = vmatpush1.bf16.xpose.msra.mxu0 0
        %1382 = vmatprep.subr.bf16.mxu0 0
        %1383 = vmatpush1.bf16.xpose.msra.mxu0 0
        %1384 = vmatprep.mubr.bf16.mxu0 0
        %1385 = vmatmul.mubr.bf16.gmra.mrb[0].mxu0 %v1089
        %v1386 = vpop.f32.mrb[0].mxu0
        %v1387 = vadd.f32 0.0, %v1386
        %v1388 = vpop.f32.mrb[0].mxu0
        %v1389 = vpop.f32.mrb[0].mxu0
        %v1390 = vadd.f32 0.0, %v1389
        %v1391 = vpop.f32.mrb[0].mxu0
        %1392 = vdwg.mxu0
        %v1393 = vrot.slane %v1083, 4
        %1394 = vrot.lane.b32.xlu0 %v1393, 96
        %v1395 = vpop.permute.xlu0 %1394
        %v1397 = vsel %vm1087, %v1395, 0
        %1399 = vmatprep.subr.bf16.mxu0 0
        %1400 = vmatpush1.bf16.xpose.msra.mxu0 %v1397
        %1401 = vmatprep.subr.bf16.mxu0 0
        %1402 = vmatpush1.bf16.xpose.msra.mxu0 0
        %1403 = vmatprep.subr.bf16.mxu0 0
        %1404 = vmatpush1.bf16.xpose.msra.mxu0 0
        %1405 = vmatprep.subr.bf16.mxu0 0
        %1406 = vmatpush1.bf16.xpose.msra.mxu0 0
        %1407 = vmatprep.subr.bf16.mxu0 0
        %1408 = vmatpush1.bf16.xpose.msra.mxu0 0
        %1409 = vmatprep.subr.bf16.mxu0 0
        %1410 = vmatpush1.bf16.xpose.msra.mxu0 0
        %1411 = vmatprep.subr.bf16.mxu0 0
        %1412 = vmatpush1.bf16.xpose.msra.mxu0 0
        %1413 = vmatprep.subr.bf16.mxu0 0
        %1414 = vmatpush1.bf16.xpose.msra.mxu0 0
        %1415 = vmatprep.subr.bf16.mxu0 0
        %1416 = vmatpush1.bf16.xpose.msra.mxu0 0
        %1417 = vmatprep.subr.bf16.mxu0 0
        %1418 = vmatpush1.bf16.xpose.msra.mxu0 0
        %1419 = vmatprep.subr.bf16.mxu0 0
        %1420 = vmatpush1.bf16.xpose.msra.mxu0 0
        %1421 = vmatprep.subr.bf16.mxu0 0
        %1422 = vmatpush1.bf16.xpose.msra.mxu0 0
        %1423 = vmatprep.subr.bf16.mxu0 0
        %1424 = vmatpush1.bf16.xpose.msra.mxu0 0
        %1425 = vmatprep.subr.bf16.mxu0 0
        %1426 = vmatpush1.bf16.xpose.msra.mxu0 0
        %1427 = vmatprep.subr.bf16.mxu0 0
        %1428 = vmatpush1.bf16.xpose.msra.mxu0 0
        %1429 = vmatprep.subr.bf16.mxu0 0
        %1430 = vmatpush1.bf16.xpose.msra.mxu0 0
        %1431 = vmatprep.mubr.bf16.mxu0 0
        %1432 = vmatmul.mubr.bf16.gmra.mrb[0].mxu0 %v1139
        %v1433 = vpop.f32.mrb[0].mxu0
        %v1434 = vadd.f32 0.0, %v1433
        %v1435 = vpop.f32.mrb[0].mxu0
        %v1436 = vpop.f32.mrb[0].mxu0
        %v1437 = vadd.f32 0.0, %v1436
        %v1438 = vpop.f32.mrb[0].mxu0
        %1439 = vdwg.mxu0
        %v1440 = vsel %vm1087, %v1387, -inf
        %1441 = vmax.xlane.f32.xlu0 %v1440
        %v1442 = vpop.xlane.xlu0 %1441
        %v1443 = vsel %vm1087, %v1390, -inf
        %1444 = vmax.xlane.f32.xlu0 %v1443
        %v1445 = vpop.xlane.xlu0 %1444
        %v1446 = vsel %vm1087, %v1434, -inf
        %1447 = vmax.xlane.f32.xlu0 %v1446
        %v1448 = vpop.xlane.xlu0 %1447
        %v1449 = vsel %vm1087, %v1437, -inf
        %1450 = vmax.xlane.f32.xlu0 %v1449
        %v1451 = vpop.xlane.xlu0 %1450
        %v1452 = vmax.f32 %v1187, %v1442
        %v1453 = vmax.f32 %v1190, %v1445
        %v1454 = vmax.f32 %v1193, %v1448
        %v1455 = vmax.f32 %v1196, %v1451
        %v1456 = vsub.f32 %v1187, %v1452
        %v1457 = vsub.f32 %v1190, %v1453
        %v1458 = vsub.f32 %v1193, %v1454
        %v1459 = vsub.f32 %v1196, %v1455
        %v1460 = vmul.f32 %v1456, 1.442695
        %v1461 = vpow.pop %v1460
        %v1462 = vmul.f32 %v1457, 1.442695
        %v1463 = vpow.pop %v1462
        %v1464 = vmul.f32 %v1458, 1.442695
        %v1465 = vpow.pop %v1464
        %v1466 = vmul.f32 %v1459, 1.442695
        %v1467 = vpow.pop %v1466
        %v1468 = vsub.f32 %v1387, %v1452
        %v1469 = vsub.f32 %v1390, %v1453
        %v1470 = vsub.f32 %v1434, %v1454
        %v1471 = vsub.f32 %v1437, %v1455
        %v1472 = vmul.f32 %v1468, 1.442695
        %v1473 = vpow.pop %v1472
        %v1474 = vmul.f32 %v1469, 1.442695
        %v1475 = vpow.pop %v1474
        %v1476 = vmul.f32 %v1470, 1.442695
        %v1477 = vpow.pop %v1476
        %v1478 = vmul.f32 %v1471, 1.442695
        %v1479 = vpow.pop %v1478
        %v1480 = vmul.f32 %v1461, %v1237
        %v1481 = vmul.f32 %v1463, %v1238
        %v1482 = vmul.f32 %v1465, %v1239
        %v1483 = vmul.f32 %v1467, %v1240
        %v1484 = vsel %vm1087, %v1473, 0.0
        %1485 = vadd.xlane.f32.xlu0 %v1484
        %v1486 = vpop.xlane.xlu0 %1485
        %v1487 = vsel %vm1087, %v1475, 0.0
        %1488 = vadd.xlane.f32.xlu0 %v1487
        %v1489 = vpop.xlane.xlu0 %1488
        %v1490 = vsel %vm1087, %v1477, 0.0
        %1491 = vadd.xlane.f32.xlu0 %v1490
        %v1492 = vpop.xlane.xlu0 %1491
        %v1493 = vsel %vm1087, %v1479, 0.0
        %1494 = vadd.xlane.f32.xlu0 %v1493
        %v1495 = vpop.xlane.xlu0 %1494
        %v1496 = vadd.f32 %v1480, %v1486
        %v1497 = vadd.f32 %v1481, %v1489
        %v1498 = vadd.f32 %v1482, %v1492
        %v1499 = vadd.f32 %v1483, %v1495
        %v1500 = vmul.f32 %v1461, %v1342
        %v1501 = vmul.f32 %v1463, %v1343
        %v1502 = vmul.f32 %v1465, %v1344
        %v1503 = vmul.f32 %v1467, %v1345
        %v1504 = vpack.c.bf16 %v1475, %v1473
        %v1505 = vpack.c.bf16 %v1479, %v1477
        %1506 = vrot.lane.b32.xlu0 %v1346, 64
        %v1507 = vpop.permute.xlu0 %1506
        %v1509 = vsel %vm1087, %v1504, 0
        %v1512 = vsel %vm1248, %v1507, 0
        %1514 = vmatprep.subr.bf16.mxu0 0
        %1515 = vmatpush1.bf16.msra.mxu0 %v1512
        %1516 = vmatprep.subr.bf16.mxu0 0
        %1517 = vmatpush1.bf16.msra.mxu0 0
        %1518 = vmatprep.subr.bf16.mxu0 0
        %1519 = vmatpush1.bf16.msra.mxu0 0
        %1520 = vmatprep.subr.bf16.mxu0 0
        %1521 = vmatpush1.bf16.msra.mxu0 0
        %1522 = vmatprep.subr.bf16.mxu0 0
        %1523 = vmatpush1.bf16.msra.mxu0 0
        %1524 = vmatprep.subr.bf16.mxu0 0
        %1525 = vmatpush1.bf16.msra.mxu0 0
        %1526 = vmatprep.subr.bf16.mxu0 0
        %1527 = vmatpush1.bf16.msra.mxu0 0
        %1528 = vmatprep.subr.bf16.mxu0 0
        %1529 = vmatpush1.bf16.msra.mxu0 0
        %1530 = vmatprep.subr.bf16.mxu0 0
        %1531 = vmatpush1.bf16.msra.mxu0 0
        %1532 = vmatprep.subr.bf16.mxu0 0
        %1533 = vmatpush1.bf16.msra.mxu0 0
        %1534 = vmatprep.subr.bf16.mxu0 0
        %1535 = vmatpush1.bf16.msra.mxu0 0
        %1536 = vmatprep.subr.bf16.mxu0 0
        %1537 = vmatpush1.bf16.msra.mxu0 0
        %1538 = vmatprep.subr.bf16.mxu0 0
        %1539 = vmatpush1.bf16.msra.mxu0 0
        %1540 = vmatprep.subr.bf16.mxu0 0
        %1541 = vmatpush1.bf16.msra.mxu0 0
        %1542 = vmatprep.subr.bf16.mxu0 0
        %1543 = vmatpush1.bf16.msra.mxu0 0
        %1544 = vmatprep.subr.bf16.mxu0 0
        %1545 = vmatpush1.bf16.msra.mxu0 0
        %1546 = vmatprep.mubr.bf16.mxu0 0
        %1547 = vmatmul.mubr.bf16.gmra.mrb[0].mxu0 %v1509
        %v1548 = vpop.f32.mrb[0].mxu0
        %v1549 = vadd.f32 0.0, %v1548
        %v1550 = vpop.f32.mrb[0].mxu0
        %v1551 = vpop.f32.mrb[0].mxu0
        %v1552 = vadd.f32 0.0, %v1551
        %v1553 = vpop.f32.mrb[0].mxu0
        %1554 = vdwg.mxu0
        %1555 = vrot.lane.b32.xlu0 %v1393, 64
        %v1556 = vpop.permute.xlu0 %1555
        %v1558 = vsel %vm1087, %v1505, 0
        %v1561 = vsel %vm1248, %v1556, 0
        %1563 = vmatprep.subr.bf16.mxu0 0
        %1564 = vmatpush1.bf16.msra.mxu0 %v1561
        %1565 = vmatprep.subr.bf16.mxu0 0
        %1566 = vmatpush1.bf16.msra.mxu0 0
        %1567 = vmatprep.subr.bf16.mxu0 0
        %1568 = vmatpush1.bf16.msra.mxu0 0
        %1569 = vmatprep.subr.bf16.mxu0 0
        %1570 = vmatpush1.bf16.msra.mxu0 0
        %1571 = vmatprep.subr.bf16.mxu0 0
        %1572 = vmatpush1.bf16.msra.mxu0 0
        %1573 = vmatprep.subr.bf16.mxu0 0
        %1574 = vmatpush1.bf16.msra.mxu0 0
        %1575 = vmatprep.subr.bf16.mxu0 0
        %1576 = vmatpush1.bf16.msra.mxu0 0
        %1577 = vmatprep.subr.bf16.mxu0 0
        %1578 = vmatpush1.bf16.msra.mxu0 0
        %1579 = vmatprep.subr.bf16.mxu0 0
        %1580 = vmatpush1.bf16.msra.mxu0 0
        %1581 = vmatprep.subr.bf16.mxu0 0
        %1582 = vmatpush1.bf16.msra.mxu0 0
        %1583 = vmatprep.subr.bf16.mxu0 0
        %1584 = vmatpush1.bf16.msra.mxu0 0
        %1585 = vmatprep.subr.bf16.mxu0 0
        %1586 = vmatpush1.bf16.msra.mxu0 0
        %1587 = vmatprep.subr.bf16.mxu0 0
        %1588 = vmatpush1.bf16.msra.mxu0 0
        %1589 = vmatprep.subr.bf16.mxu0 0
        %1590 = vmatpush1.bf16.msra.mxu0 0
        %1591 = vmatprep.subr.bf16.mxu0 0
        %1592 = vmatpush1.bf16.msra.mxu0 0
        %1593 = vmatprep.subr.bf16.mxu0 0
        %1594 = vmatpush1.bf16.msra.mxu0 0
        %1595 = vmatprep.mubr.bf16.mxu0 0
        %1596 = vmatmul.mubr.bf16.gmra.mrb[0].mxu0 %v1558
        %v1597 = vpop.f32.mrb[0].mxu0
        %v1598 = vadd.f32 0.0, %v1597
        %v1599 = vpop.f32.mrb[0].mxu0
        %v1600 = vpop.f32.mrb[0].mxu0
        %v1601 = vadd.f32 0.0, %v1600
        %v1602 = vpop.f32.mrb[0].mxu0
        %1603 = vdwg.mxu0
        %v1604 = vadd.f32 %v1500, %v1549
        %v1605 = vadd.f32 %v1501, %v1552
        %v1606 = vadd.f32 %v1502, %v1598
        %v1607 = vadd.f32 %v1503, %v1601
        %v1608 = vrcp.pop %v1496
        %v1609 = vrcp.pop %v1497
        %v1610 = vrcp.pop %v1498
        %v1611 = vrcp.pop %v1499
        %v1612 = vmul.f32 %v1604, %v1608
        %v1613 = vmul.f32 %v1605, %v1609
        %v1614 = vmul.f32 %v1606, %v1610
        %v1615 = vmul.f32 %v1607, %v1611
        %v1616 = vpack.c.bf16 %v1613, %v1612
        %v1617 = vpack.c.bf16 %v1615, %v1614
        %1618 = vst.msk [vmem:[#allocation3] sm:$0xff] %vm1087, %v1616
        %1619 = vst.msk [vmem:[#allocation3 + $0x8] sm:$0xff] %vm1087, %v1617
        %1620 = vrot.lane.b32.xlu0 %v1082, 120
        %v1621 = vpop.permute.xlu0 %1620
        %1622 = vrot.lane.b32.xlu0 %v1082, 88
        %v1623 = vpop.permute.xlu0 %1622
        %v1625 = vsel %vm1087, %v1621, 0
        %v1628 = vsel %vm1087, %v1623, 0
        %1630 = vmatprep.subr.bf16.mxu0 0
        %1631 = vmatpush1.bf16.xpose.msra.mxu0 %v1628
        %1632 = vmatprep.subr.bf16.mxu0 0
        %1633 = vmatpush1.bf16.xpose.msra.mxu0 0
        %1634 = vmatprep.subr.bf16.mxu0 0
        %1635 = vmatpush1.bf16.xpose.msra.mxu0 0
        %1636 = vmatprep.subr.bf16.mxu0 0
        %1637 = vmatpush1.bf16.xpose.msra.mxu0 0
        %1638 = vmatprep.subr.bf16.mxu0 0
        %1639 = vmatpush1.bf16.xpose.msra.mxu0 0
        %1640 = vmatprep.subr.bf16.mxu0 0
        %1641 = vmatpush1.bf16.xpose.msra.mxu0 0
        %1642 = vmatprep.subr.bf16.mxu0 0
        %1643 = vmatpush1.bf16.xpose.msra.mxu0 0
        %1644 = vmatprep.subr.bf16.mxu0 0
        %1645 = vmatpush1.bf16.xpose.msra.mxu0 0
        %1646 = vmatprep.subr.bf16.mxu0 0
        %1647 = vmatpush1.bf16.xpose.msra.mxu0 0
        %1648 = vmatprep.subr.bf16.mxu0 0
        %1649 = vmatpush1.bf16.xpose.msra.mxu0 0
        %1650 = vmatprep.subr.bf16.mxu0 0
        %1651 = vmatpush1.bf16.xpose.msra.mxu0 0
        %1652 = vmatprep.subr.bf16.mxu0 0
        %1653 = vmatpush1.bf16.xpose.msra.mxu0 0
        %1654 = vmatprep.subr.bf16.mxu0 0
        %1655 = vmatpush1.bf16.xpose.msra.mxu0 0
        %1656 = vmatprep.subr.bf16.mxu0 0
        %1657 = vmatpush1.bf16.xpose.msra.mxu0 0
        %1658 = vmatprep.subr.bf16.mxu0 0
        %1659 = vmatpush1.bf16.xpose.msra.mxu0 0
        %1660 = vmatprep.subr.bf16.mxu0 0
        %1661 = vmatpush1.bf16.xpose.msra.mxu0 0
        %1662 = vmatprep.mubr.bf16.mxu0 0
        %1663 = vmatmul.mubr.bf16.gmra.mrb[0].mxu0 %v1625
        %v1664 = vpop.f32.mrb[0].mxu0
        %v1665 = vadd.f32 0.0, %v1664
        %v1666 = vpop.f32.mrb[0].mxu0
        %v1667 = vpop.f32.mrb[0].mxu0
        %v1668 = vadd.f32 0.0, %v1667
        %v1669 = vpop.f32.mrb[0].mxu0
        %1670 = vdwg.mxu0
        %1671 = vrot.lane.b32.xlu0 %v1083, 120
        %v1672 = vpop.permute.xlu0 %1671
        %1673 = vrot.lane.b32.xlu0 %v1083, 88
        %v1674 = vpop.permute.xlu0 %1673
        %v1676 = vsel %vm1087, %v1672, 0
        %v1679 = vsel %vm1087, %v1674, 0
        %1681 = vmatprep.subr.bf16.mxu0 0
        %1682 = vmatpush1.bf16.xpose.msra.mxu0 %v1679
        %1683 = vmatprep.subr.bf16.mxu0 0
        %1684 = vmatpush1.bf16.xpose.msra.mxu0 0
        %1685 = vmatprep.subr.bf16.mxu0 0
        %1686 = vmatpush1.bf16.xpose.msra.mxu0 0
        %1687 = vmatprep.subr.bf16.mxu0 0
        %1688 = vmatpush1.bf16.xpose.msra.mxu0 0
        %1689 = vmatprep.subr.bf16.mxu0 0
        %1690 = vmatpush1.bf16.xpose.msra.mxu0 0
        %1691 = vmatprep.subr.bf16.mxu0 0
        %1692 = vmatpush1.bf16.xpose.msra.mxu0 0
        %1693 = vmatprep.subr.bf16.mxu0 0
        %1694 = vmatpush1.bf16.xpose.msra.mxu0 0
        %1695 = vmatprep.subr.bf16.mxu0 0
        %1696 = vmatpush1.bf16.xpose.msra.mxu0 0
        %1697 = vmatprep.subr.bf16.mxu0 0
        %1698 = vmatpush1.bf16.xpose.msra.mxu0 0
        %1699 = vmatprep.subr.bf16.mxu0 0
        %1700 = vmatpush1.bf16.xpose.msra.mxu0 0
        %1701 = vmatprep.subr.bf16.mxu0 0
        %1702 = vmatpush1.bf16.xpose.msra.mxu0 0
        %1703 = vmatprep.subr.bf16.mxu0 0
        %1704 = vmatpush1.bf16.xpose.msra.mxu0 0
        %1705 = vmatprep.subr.bf16.mxu0 0
        %1706 = vmatpush1.bf16.xpose.msra.mxu0 0
        %1707 = vmatprep.subr.bf16.mxu0 0
        %1708 = vmatpush1.bf16.xpose.msra.mxu0 0
        %1709 = vmatprep.subr.bf16.mxu0 0
        %1710 = vmatpush1.bf16.xpose.msra.mxu0 0
        %1711 = vmatprep.subr.bf16.mxu0 0
        %1712 = vmatpush1.bf16.xpose.msra.mxu0 0
        %1713 = vmatprep.mubr.bf16.mxu0 0
        %1714 = vmatmul.mubr.bf16.gmra.mrb[0].mxu0 %v1676
        %v1715 = vpop.f32.mrb[0].mxu0
        %v1716 = vadd.f32 0.0, %v1715
        %v1717 = vpop.f32.mrb[0].mxu0
        %v1718 = vpop.f32.mrb[0].mxu0
        %v1719 = vadd.f32 0.0, %v1718
        %v1720 = vpop.f32.mrb[0].mxu0
        %1721 = vdwg.mxu0
        %v1722 = vsel %vm1087, %v1665, -inf
        %1723 = vmax.xlane.f32.xlu0 %v1722
        %v1724 = vpop.xlane.xlu0 %1723
        %v1725 = vsel %vm1087, %v1668, -inf
        %1726 = vmax.xlane.f32.xlu0 %v1725
        %v1727 = vpop.xlane.xlu0 %1726
        %v1728 = vsel %vm1087, %v1716, -inf
        %1729 = vmax.xlane.f32.xlu0 %v1728
        %v1730 = vpop.xlane.xlu0 %1729
        %v1731 = vsel %vm1087, %v1719, -inf
        %1732 = vmax.xlane.f32.xlu0 %v1731
        %v1733 = vpop.xlane.xlu0 %1732
        %v1734 = vsub.f32 -inf, %v1724
        %v1735 = vsub.f32 -inf, %v1727
        %v1736 = vsub.f32 -inf, %v1730
        %v1737 = vsub.f32 -inf, %v1733
        %v1738 = vmul.f32 %v1734, 1.442695
        %v1739 = vpow.pop %v1738
        %v1740 = vmul.f32 %v1735, 1.442695
        %v1741 = vpow.pop %v1740
        %v1742 = vmul.f32 %v1736, 1.442695
        %v1743 = vpow.pop %v1742
        %v1744 = vmul.f32 %v1737, 1.442695
        %v1745 = vpow.pop %v1744
        %v1746 = vsub.f32 %v1665, %v1724
        %v1747 = vsub.f32 %v1668, %v1727
        %v1748 = vsub.f32 %v1716, %v1730
        %v1749 = vsub.f32 %v1719, %v1733
        %v1750 = vmul.f32 %v1746, 1.442695
        %v1751 = vpow.pop %v1750
        %v1752 = vmul.f32 %v1747, 1.442695
        %v1753 = vpow.pop %v1752
        %v1754 = vmul.f32 %v1748, 1.442695
        %v1755 = vpow.pop %v1754
        %v1756 = vmul.f32 %v1749, 1.442695
        %v1757 = vpow.pop %v1756
        %v1758 = vmul.f32 %v1739, 0.0
        %v1759 = vmul.f32 %v1741, 0.0
        %v1760 = vmul.f32 %v1743, 0.0
        %v1761 = vmul.f32 %v1745, 0.0
        %v1762 = vsel %vm1087, %v1751, 0.0
        %1763 = vadd.xlane.f32.xlu0 %v1762
        %v1764 = vpop.xlane.xlu0 %1763
        %v1765 = vsel %vm1087, %v1753, 0.0
        %1766 = vadd.xlane.f32.xlu0 %v1765
        %v1767 = vpop.xlane.xlu0 %1766
        %v1768 = vsel %vm1087, %v1755, 0.0
        %1769 = vadd.xlane.f32.xlu0 %v1768
        %v1770 = vpop.xlane.xlu0 %1769
        %v1771 = vsel %vm1087, %v1757, 0.0
        %1772 = vadd.xlane.f32.xlu0 %v1771
        %v1773 = vpop.xlane.xlu0 %1772
        %v1774 = vadd.f32 %v1758, %v1764
        %v1775 = vadd.f32 %v1759, %v1767
        %v1776 = vadd.f32 %v1760, %v1770
        %v1777 = vadd.f32 %v1761, %v1773
        %v1778 = vpack.c.bf16 %v1753, %v1751
        %v1779 = vpack.c.bf16 %v1757, %v1755
        %1780 = vrot.lane.b32.xlu0 %v1082, 56
        %v1781 = vpop.permute.xlu0 %1780
        %v1783 = vsel %vm1087, %v1778, 0
        %v1786 = vsel %vm1248, %v1781, 0
        %1788 = vmatprep.subr.bf16.mxu0 0
        %1789 = vmatpush1.bf16.msra.mxu0 %v1786
        %1790 = vmatprep.subr.bf16.mxu0 0
        %1791 = vmatpush1.bf16.msra.mxu0 0
        %1792 = vmatprep.subr.bf16.mxu0 0
        %1793 = vmatpush1.bf16.msra.mxu0 0
        %1794 = vmatprep.subr.bf16.mxu0 0
        %1795 = vmatpush1.bf16.msra.mxu0 0
        %1796 = vmatprep.subr.bf16.mxu0 0
        %1797 = vmatpush1.bf16.msra.mxu0 0
        %1798 = vmatprep.subr.bf16.mxu0 0
        %1799 = vmatpush1.bf16.msra.mxu0 0
        %1800 = vmatprep.subr.bf16.mxu0 0
        %1801 = vmatpush1.bf16.msra.mxu0 0
        %1802 = vmatprep.subr.bf16.mxu0 0
        %1803 = vmatpush1.bf16.msra.mxu0 0
        %1804 = vmatprep.subr.bf16.mxu0 0
        %1805 = vmatpush1.bf16.msra.mxu0 0
        %1806 = vmatprep.subr.bf16.mxu0 0
        %1807 = vmatpush1.bf16.msra.mxu0 0
        %1808 = vmatprep.subr.bf16.mxu0 0
        %1809 = vmatpush1.bf16.msra.mxu0 0
        %1810 = vmatprep.subr.bf16.mxu0 0
        %1811 = vmatpush1.bf16.msra.mxu0 0
        %1812 = vmatprep.subr.bf16.mxu0 0
        %1813 = vmatpush1.bf16.msra.mxu0 0
        %1814 = vmatprep.subr.bf16.mxu0 0
        %1815 = vmatpush1.bf16.msra.mxu0 0
        %1816 = vmatprep.subr.bf16.mxu0 0
        %1817 = vmatpush1.bf16.msra.mxu0 0
        %1818 = vmatprep.subr.bf16.mxu0 0
        %1819 = vmatpush1.bf16.msra.mxu0 0
        %1820 = vmatprep.mubr.bf16.mxu0 0
        %1821 = vmatmul.mubr.bf16.gmra.mrb[0].mxu0 %v1783
        %v1822 = vpop.f32.mrb[0].mxu0
        %v1823 = vadd.f32 0.0, %v1822
        %v1824 = vpop.f32.mrb[0].mxu0
        %v1825 = vpop.f32.mrb[0].mxu0
        %v1826 = vadd.f32 0.0, %v1825
        %v1827 = vpop.f32.mrb[0].mxu0
        %1828 = vdwg.mxu0
        %1829 = vrot.lane.b32.xlu0 %v1083, 56
        %v1830 = vpop.permute.xlu0 %1829
        %v1832 = vsel %vm1087, %v1779, 0
        %v1835 = vsel %vm1248, %v1830, 0
        %1837 = vmatprep.subr.bf16.mxu0 0
        %1838 = vmatpush1.bf16.msra.mxu0 %v1835
        %1839 = vmatprep.subr.bf16.mxu0 0
        %1840 = vmatpush1.bf16.msra.mxu0 0
        %1841 = vmatprep.subr.bf16.mxu0 0
        %1842 = vmatpush1.bf16.msra.mxu0 0
        %1843 = vmatprep.subr.bf16.mxu0 0
        %1844 = vmatpush1.bf16.msra.mxu0 0
        %1845 = vmatprep.subr.bf16.mxu0 0
        %1846 = vmatpush1.bf16.msra.mxu0 0
        %1847 = vmatprep.subr.bf16.mxu0 0
        %1848 = vmatpush1.bf16.msra.mxu0 0
        %1849 = vmatprep.subr.bf16.mxu0 0
        %1850 = vmatpush1.bf16.msra.mxu0 0
        %1851 = vmatprep.subr.bf16.mxu0 0
        %1852 = vmatpush1.bf16.msra.mxu0 0
        %1853 = vmatprep.subr.bf16.mxu0 0
        %1854 = vmatpush1.bf16.msra.mxu0 0
        %1855 = vmatprep.subr.bf16.mxu0 0
        %1856 = vmatpush1.bf16.msra.mxu0 0
        %1857 = vmatprep.subr.bf16.mxu0 0
        %1858 = vmatpush1.bf16.msra.mxu0 0
        %1859 = vmatprep.subr.bf16.mxu0 0
        %1860 = vmatpush1.bf16.msra.mxu0 0
        %1861 = vmatprep.subr.bf16.mxu0 0
        %1862 = vmatpush1.bf16.msra.mxu0 0
        %1863 = vmatprep.subr.bf16.mxu0 0
        %1864 = vmatpush1.bf16.msra.mxu0 0
        %1865 = vmatprep.subr.bf16.mxu0 0
        %1866 = vmatpush1.bf16.msra.mxu0 0
        %1867 = vmatprep.subr.bf16.mxu0 0
        %1868 = vmatpush1.bf16.msra.mxu0 0
        %1869 = vmatprep.mubr.bf16.mxu0 0
        %1870 = vmatmul.mubr.bf16.gmra.mrb[0].mxu0 %v1832
        %v1871 = vpop.f32.mrb[0].mxu0
        %v1872 = vadd.f32 0.0, %v1871
        %v1873 = vpop.f32.mrb[0].mxu0
        %v1874 = vpop.f32.mrb[0].mxu0
        %v1875 = vadd.f32 0.0, %v1874
        %v1876 = vpop.f32.mrb[0].mxu0
        %1877 = vdwg.mxu0
        %v1878 = vadd.f32 %v1758, %v1823
        %v1879 = vadd.f32 %v1759, %v1826
        %v1880 = vadd.f32 %v1760, %v1872
        %v1881 = vadd.f32 %v1761, %v1875
        %1882 = vrot.lane.b32.xlu0 %v1346, 88
        %v1883 = vpop.permute.xlu0 %1882
        %v1885 = vsel %vm1087, %v1883, 0
        %1887 = vmatprep.subr.bf16.mxu0 0
        %1888 = vmatpush1.bf16.xpose.msra.mxu0 %v1885
        %1889 = vmatprep.subr.bf16.mxu0 0
        %1890 = vmatpush1.bf16.xpose.msra.mxu0 0
        %1891 = vmatprep.subr.bf16.mxu0 0
        %1892 = vmatpush1.bf16.xpose.msra.mxu0 0
        %1893 = vmatprep.subr.bf16.mxu0 0
        %1894 = vmatpush1.bf16.xpose.msra.mxu0 0
        %1895 = vmatprep.subr.bf16.mxu0 0
        %1896 = vmatpush1.bf16.xpose.msra.mxu0 0
        %1897 = vmatprep.subr.bf16.mxu0 0
        %1898 = vmatpush1.bf16.xpose.msra.mxu0 0
        %1899 = vmatprep.subr.bf16.mxu0 0
        %1900 = vmatpush1.bf16.xpose.msra.mxu0 0
        %1901 = vmatprep.subr.bf16.mxu0 0
        %1902 = vmatpush1.bf16.xpose.msra.mxu0 0
        %1903 = vmatprep.subr.bf16.mxu0 0
        %1904 = vmatpush1.bf16.xpose.msra.mxu0 0
        %1905 = vmatprep.subr.bf16.mxu0 0
        %1906 = vmatpush1.bf16.xpose.msra.mxu0 0
        %1907 = vmatprep.subr.bf16.mxu0 0
        %1908 = vmatpush1.bf16.xpose.msra.mxu0 0
        %1909 = vmatprep.subr.bf16.mxu0 0
        %1910 = vmatpush1.bf16.xpose.msra.mxu0 0
        %1911 = vmatprep.subr.bf16.mxu0 0
        %1912 = vmatpush1.bf16.xpose.msra.mxu0 0
        %1913 = vmatprep.subr.bf16.mxu0 0
        %1914 = vmatpush1.bf16.xpose.msra.mxu0 0
        %1915 = vmatprep.subr.bf16.mxu0 0
        %1916 = vmatpush1.bf16.xpose.msra.mxu0 0
        %1917 = vmatprep.subr.bf16.mxu0 0
        %1918 = vmatpush1.bf16.xpose.msra.mxu0 0
        %1919 = vmatprep.mubr.bf16.mxu0 0
        %1920 = vmatmul.mubr.bf16.gmra.mrb[0].mxu0 %v1625
        %v1921 = vpop.f32.mrb[0].mxu0
        %v1922 = vadd.f32 0.0, %v1921
        %v1923 = vpop.f32.mrb[0].mxu0
        %v1924 = vpop.f32.mrb[0].mxu0
        %v1925 = vadd.f32 0.0, %v1924
        %v1926 = vpop.f32.mrb[0].mxu0
        %1927 = vdwg.mxu0
        %1928 = vrot.lane.b32.xlu0 %v1393, 88
        %v1929 = vpop.permute.xlu0 %1928
        %v1931 = vsel %vm1087, %v1929, 0
        %1933 = vmatprep.subr.bf16.mxu0 0
        %1934 = vmatpush1.bf16.xpose.msra.mxu0 %v1931
        %1935 = vmatprep.subr.bf16.mxu0 0
        %1936 = vmatpush1.bf16.xpose.msra.mxu0 0
        %1937 = vmatprep.subr.bf16.mxu0 0
        %1938 = vmatpush1.bf16.xpose.msra.mxu0 0
        %1939 = vmatprep.subr.bf16.mxu0 0
        %1940 = vmatpush1.bf16.xpose.msra.mxu0 0
        %1941 = vmatprep.subr.bf16.mxu0 0
        %1942 = vmatpush1.bf16.xpose.msra.mxu0 0
        %1943 = vmatprep.subr.bf16.mxu0 0
        %1944 = vmatpush1.bf16.xpose.msra.mxu0 0
        %1945 = vmatprep.subr.bf16.mxu0 0
        %1946 = vmatpush1.bf16.xpose.msra.mxu0 0
        %1947 = vmatprep.subr.bf16.mxu0 0
        %1948 = vmatpush1.bf16.xpose.msra.mxu0 0
        %1949 = vmatprep.subr.bf16.mxu0 0
        %1950 = vmatpush1.bf16.xpose.msra.mxu0 0
        %1951 = vmatprep.subr.bf16.mxu0 0
        %1952 = vmatpush1.bf16.xpose.msra.mxu0 0
        %1953 = vmatprep.subr.bf16.mxu0 0
        %1954 = vmatpush1.bf16.xpose.msra.mxu0 0
        %1955 = vmatprep.subr.bf16.mxu0 0
        %1956 = vmatpush1.bf16.xpose.msra.mxu0 0
        %1957 = vmatprep.subr.bf16.mxu0 0
        %1958 = vmatpush1.bf16.xpose.msra.mxu0 0
        %1959 = vmatprep.subr.bf16.mxu0 0
        %1960 = vmatpush1.bf16.xpose.msra.mxu0 0
        %1961 = vmatprep.subr.bf16.mxu0 0
        %1962 = vmatpush1.bf16.xpose.msra.mxu0 0
        %1963 = vmatprep.subr.bf16.mxu0 0
        %1964 = vmatpush1.bf16.xpose.msra.mxu0 0
        %1965 = vmatprep.mubr.bf16.mxu0 0
        %1966 = vmatmul.mubr.bf16.gmra.mrb[0].mxu0 %v1676
        %v1967 = vpop.f32.mrb[0].mxu0
        %v1968 = vadd.f32 0.0, %v1967
        %v1969 = vpop.f32.mrb[0].mxu0
        %v1970 = vpop.f32.mrb[0].mxu0
        %v1971 = vadd.f32 0.0, %v1970
        %v1972 = vpop.f32.mrb[0].mxu0
        %1973 = vdwg.mxu0
        %v1974 = vsel %vm1087, %v1922, -inf
        %1975 = vmax.xlane.f32.xlu0 %v1974
        %v1976 = vpop.xlane.xlu0 %1975
        %v1977 = vsel %vm1087, %v1925, -inf
        %1978 = vmax.xlane.f32.xlu0 %v1977
        %v1979 = vpop.xlane.xlu0 %1978
        %v1980 = vsel %vm1087, %v1968, -inf
        %1981 = vmax.xlane.f32.xlu0 %v1980
        %v1982 = vpop.xlane.xlu0 %1981
        %v1983 = vsel %vm1087, %v1971, -inf
        %1984 = vmax.xlane.f32.xlu0 %v1983
        %v1985 = vpop.xlane.xlu0 %1984
        %v1986 = vmax.f32 %v1724, %v1976
        %v1987 = vmax.f32 %v1727, %v1979
        %v1988 = vmax.f32 %v1730, %v1982
        %v1989 = vmax.f32 %v1733, %v1985
        %v1990 = vsub.f32 %v1724, %v1986
        %v1991 = vsub.f32 %v1727, %v1987
        %v1992 = vsub.f32 %v1730, %v1988
        %v1993 = vsub.f32 %v1733, %v1989
        %v1994 = vmul.f32 %v1990, 1.442695
        %v1995 = vpow.pop %v1994
        %v1996 = vmul.f32 %v1991, 1.442695
        %v1997 = vpow.pop %v1996
        %v1998 = vmul.f32 %v1992, 1.442695
        %v1999 = vpow.pop %v1998
        %v2000 = vmul.f32 %v1993, 1.442695
        %v2001 = vpow.pop %v2000
        %v2002 = vsub.f32 %v1922, %v1986
        %v2003 = vsub.f32 %v1925, %v1987
        %v2004 = vsub.f32 %v1968, %v1988
        %v2005 = vsub.f32 %v1971, %v1989
        %v2006 = vmul.f32 %v2002, 1.442695
        %v2007 = vpow.pop %v2006
        %v2008 = vmul.f32 %v2003, 1.442695
        %v2009 = vpow.pop %v2008
        %v2010 = vmul.f32 %v2004, 1.442695
        %v2011 = vpow.pop %v2010
        %v2012 = vmul.f32 %v2005, 1.442695
        %v2013 = vpow.pop %v2012
        %v2014 = vmul.f32 %v1995, %v1774
        %v2015 = vmul.f32 %v1997, %v1775
        %v2016 = vmul.f32 %v1999, %v1776
        %v2017 = vmul.f32 %v2001, %v1777
        %v2018 = vsel %vm1087, %v2007, 0.0
        %2019 = vadd.xlane.f32.xlu0 %v2018
        %v2020 = vpop.xlane.xlu0 %2019
        %v2021 = vsel %vm1087, %v2009, 0.0
        %2022 = vadd.xlane.f32.xlu0 %v2021
        %v2023 = vpop.xlane.xlu0 %2022
        %v2024 = vsel %vm1087, %v2011, 0.0
        %2025 = vadd.xlane.f32.xlu0 %v2024
        %v2026 = vpop.xlane.xlu0 %2025
        %v2027 = vsel %vm1087, %v2013, 0.0
        %2028 = vadd.xlane.f32.xlu0 %v2027
        %v2029 = vpop.xlane.xlu0 %2028
        %v2030 = vadd.f32 %v2014, %v2020
        %v2031 = vadd.f32 %v2015, %v2023
        %v2032 = vadd.f32 %v2016, %v2026
        %v2033 = vadd.f32 %v2017, %v2029
        %v2034 = vmul.f32 %v1995, %v1878
        %v2035 = vmul.f32 %v1997, %v1879
        %v2036 = vmul.f32 %v1999, %v1880
        %v2037 = vmul.f32 %v2001, %v1881
        %v2038 = vpack.c.bf16 %v2009, %v2007
        %v2039 = vpack.c.bf16 %v2013, %v2011
        %2040 = vrot.lane.b32.xlu0 %v1346, 56
        %v2041 = vpop.permute.xlu0 %2040
        %v2043 = vsel %vm1087, %v2038, 0
        %v2046 = vsel %vm1248, %v2041, 0
        %2048 = vmatprep.subr.bf16.mxu0 0
        %2049 = vmatpush1.bf16.msra.mxu0 %v2046
        %2050 = vmatprep.subr.bf16.mxu0 0
        %2051 = vmatpush1.bf16.msra.mxu0 0
        %2052 = vmatprep.subr.bf16.mxu0 0
        %2053 = vmatpush1.bf16.msra.mxu0 0
        %2054 = vmatprep.subr.bf16.mxu0 0
        %2055 = vmatpush1.bf16.msra.mxu0 0
        %2056 = vmatprep.subr.bf16.mxu0 0
        %2057 = vmatpush1.bf16.msra.mxu0 0
        %2058 = vmatprep.subr.bf16.mxu0 0
        %2059 = vmatpush1.bf16.msra.mxu0 0
        %2060 = vmatprep.subr.bf16.mxu0 0
        %2061 = vmatpush1.bf16.msra.mxu0 0
        %2062 = vmatprep.subr.bf16.mxu0 0
        %2063 = vmatpush1.bf16.msra.mxu0 0
        %2064 = vmatprep.subr.bf16.mxu0 0
        %2065 = vmatpush1.bf16.msra.mxu0 0
        %2066 = vmatprep.subr.bf16.mxu0 0
        %2067 = vmatpush1.bf16.msra.mxu0 0
        %2068 = vmatprep.subr.bf16.mxu0 0
        %2069 = vmatpush1.bf16.msra.mxu0 0
        %2070 = vmatprep.subr.bf16.mxu0 0
        %2071 = vmatpush1.bf16.msra.mxu0 0
        %2072 = vmatprep.subr.bf16.mxu0 0
        %2073 = vmatpush1.bf16.msra.mxu0 0
        %2074 = vmatprep.subr.bf16.mxu0 0
        %2075 = vmatpush1.bf16.msra.mxu0 0
        %2076 = vmatprep.subr.bf16.mxu0 0
        %2077 = vmatpush1.bf16.msra.mxu0 0
        %2078 = vmatprep.subr.bf16.mxu0 0
        %2079 = vmatpush1.bf16.msra.mxu0 0
        %2080 = vmatprep.mubr.bf16.mxu0 0
        %2081 = vmatmul.mubr.bf16.gmra.mrb[0].mxu0 %v2043
        %v2082 = vpop.f32.mrb[0].mxu0
        %v2083 = vadd.f32 0.0, %v2082
        %v2084 = vpop.f32.mrb[0].mxu0
        %v2085 = vpop.f32.mrb[0].mxu0
        %v2086 = vadd.f32 0.0, %v2085
        %v2087 = vpop.f32.mrb[0].mxu0
        %2088 = vdwg.mxu0
        %2089 = vrot.lane.b32.xlu0 %v1393, 56
        %v2090 = vpop.permute.xlu0 %2089
        %v2092 = vsel %vm1087, %v2039, 0
        %v2095 = vsel %vm1248, %v2090, 0
        %2097 = vmatprep.subr.bf16.mxu0 0
        %2098 = vmatpush1.bf16.msra.mxu0 %v2095
        %2099 = vmatprep.subr.bf16.mxu0 0
        %2100 = vmatpush1.bf16.msra.mxu0 0
        %2101 = vmatprep.subr.bf16.mxu0 0
        %2102 = vmatpush1.bf16.msra.mxu0 0
        %2103 = vmatprep.subr.bf16.mxu0 0
        %2104 = vmatpush1.bf16.msra.mxu0 0
        %2105 = vmatprep.subr.bf16.mxu0 0
        %2106 = vmatpush1.bf16.msra.mxu0 0
        %2107 = vmatprep.subr.bf16.mxu0 0
        %2108 = vmatpush1.bf16.msra.mxu0 0
        %2109 = vmatprep.subr.bf16.mxu0 0
        %2110 = vmatpush1.bf16.msra.mxu0 0
        %2111 = vmatprep.subr.bf16.mxu0 0
        %2112 = vmatpush1.bf16.msra.mxu0 0
        %2113 = vmatprep.subr.bf16.mxu0 0
        %2114 = vmatpush1.bf16.msra.mxu0 0
        %2115 = vmatprep.subr.bf16.mxu0 0
        %2116 = vmatpush1.bf16.msra.mxu0 0
        %2117 = vmatprep.subr.bf16.mxu0 0
        %2118 = vmatpush1.bf16.msra.mxu0 0
        %2119 = vmatprep.subr.bf16.mxu0 0
        %2120 = vmatpush1.bf16.msra.mxu0 0
        %2121 = vmatprep.subr.bf16.mxu0 0
        %2122 = vmatpush1.bf16.msra.mxu0 0
        %2123 = vmatprep.subr.bf16.mxu0 0
        %2124 = vmatpush1.bf16.msra.mxu0 0
        %2125 = vmatprep.subr.bf16.mxu0 0
        %2126 = vmatpush1.bf16.msra.mxu0 0
        %2127 = vmatprep.subr.bf16.mxu0 0
        %2128 = vmatpush1.bf16.msra.mxu0 0
        %2129 = vmatprep.mubr.bf16.mxu0 0
        %2130 = vmatmul.mubr.bf16.gmra.mrb[0].mxu0 %v2092
        %v2131 = vpop.f32.mrb[0].mxu0
        %v2132 = vadd.f32 0.0, %v2131
        %v2133 = vpop.f32.mrb[0].mxu0
        %v2134 = vpop.f32.mrb[0].mxu0
        %v2135 = vadd.f32 0.0, %v2134
        %v2136 = vpop.f32.mrb[0].mxu0
        %2137 = vdwg.mxu0
        %v2138 = vadd.f32 %v2034, %v2083
        %v2139 = vadd.f32 %v2035, %v2086
        %v2140 = vadd.f32 %v2036, %v2132
        %v2141 = vadd.f32 %v2037, %v2135
        %v2142 = vrcp.pop %v2030
        %v2143 = vrcp.pop %v2031
        %v2144 = vrcp.pop %v2032
        %v2145 = vrcp.pop %v2033
        %v2146 = vmul.f32 %v2138, %v2142
        %v2147 = vmul.f32 %v2139, %v2143
        %v2148 = vmul.f32 %v2140, %v2144
        %v2149 = vmul.f32 %v2141, %v2145
        %v2150 = vpack.c.bf16 %v2147, %v2146
        %v2151 = vpack.c.bf16 %v2149, %v2148
        %2154 = vrot.lane.b32.xlu0 %v2150, 8
        %v2155 = vpop.permute.xlu0 %2154
        %2156 = vrot.lane.b32.xlu0 %v2151, 8
        %v2157 = vpop.permute.xlu0 %2156
        %vm2160 = vcmask 130112
        %2161 = vst.msk [vmem:[#allocation3] sm:$0xff] %vm2160, %v2155
        %2162 = vst.msk [vmem:[#allocation3 + $0x8] sm:$0xff] %vm2160, %v2157
        %2163 = vrot.lane.b32.xlu0 %v1082, 112
        %v2164 = vpop.permute.xlu0 %2163
        %2165 = vrot.lane.b32.xlu0 %v1082, 80
        %v2166 = vpop.permute.xlu0 %2165
        %v2168 = vsel %vm1087, %v2164, 0
        %v2171 = vsel %vm1087, %v2166, 0
        %2173 = vmatprep.subr.bf16.mxu0 0
        %2174 = vmatpush1.bf16.xpose.msra.mxu0 %v2171
        %2175 = vmatprep.subr.bf16.mxu0 0
        %2176 = vmatpush1.bf16.xpose.msra.mxu0 0
        %2177 = vmatprep.subr.bf16.mxu0 0
        %2178 = vmatpush1.bf16.xpose.msra.mxu0 0
        %2179 = vmatprep.subr.bf16.mxu0 0
        %2180 = vmatpush1.bf16.xpose.msra.mxu0 0
        %2181 = vmatprep.subr.bf16.mxu0 0
        %2182 = vmatpush1.bf16.xpose.msra.mxu0 0
        %2183 = vmatprep.subr.bf16.mxu0 0
        %2184 = vmatpush1.bf16.xpose.msra.mxu0 0
        %2185 = vmatprep.subr.bf16.mxu0 0
        %2186 = vmatpush1.bf16.xpose.msra.mxu0 0
        %2187 = vmatprep.subr.bf16.mxu0 0
        %2188 = vmatpush1.bf16.xpose.msra.mxu0 0
        %2189 = vmatprep.subr.bf16.mxu0 0
        %2190 = vmatpush1.bf16.xpose.msra.mxu0 0
        %2191 = vmatprep.subr.bf16.mxu0 0
        %2192 = vmatpush1.bf16.xpose.msra.mxu0 0
        %2193 = vmatprep.subr.bf16.mxu0 0
        %2194 = vmatpush1.bf16.xpose.msra.mxu0 0
        %2195 = vmatprep.subr.bf16.mxu0 0
        %2196 = vmatpush1.bf16.xpose.msra.mxu0 0
        %2197 = vmatprep.subr.bf16.mxu0 0
        %2198 = vmatpush1.bf16.xpose.msra.mxu0 0
        %2199 = vmatprep.subr.bf16.mxu0 0
        %2200 = vmatpush1.bf16.xpose.msra.mxu0 0
        %2201 = vmatprep.subr.bf16.mxu0 0
        %2202 = vmatpush1.bf16.xpose.msra.mxu0 0
        %2203 = vmatprep.subr.bf16.mxu0 0
        %2204 = vmatpush1.bf16.xpose.msra.mxu0 0
        %2205 = vmatprep.mubr.bf16.mxu0 0
        %2206 = vmatmul.mubr.bf16.gmra.mrb[0].mxu0 %v2168
        %v2207 = vpop.f32.mrb[0].mxu0
        %v2208 = vadd.f32 0.0, %v2207
        %v2209 = vpop.f32.mrb[0].mxu0
        %v2210 = vpop.f32.mrb[0].mxu0
        %v2211 = vadd.f32 0.0, %v2210
        %v2212 = vpop.f32.mrb[0].mxu0
        %2213 = vdwg.mxu0
        %2214 = vrot.lane.b32.xlu0 %v1083, 112
        %v2215 = vpop.permute.xlu0 %2214
        %2216 = vrot.lane.b32.xlu0 %v1083, 80
        %v2217 = vpop.permute.xlu0 %2216
        %v2219 = vsel %vm1087, %v2215, 0
        %v2222 = vsel %vm1087, %v2217, 0
        %2224 = vmatprep.subr.bf16.mxu0 0
        %2225 = vmatpush1.bf16.xpose.msra.mxu0 %v2222
        %2226 = vmatprep.subr.bf16.mxu0 0
        %2227 = vmatpush1.bf16.xpose.msra.mxu0 0
        %2228 = vmatprep.subr.bf16.mxu0 0
        %2229 = vmatpush1.bf16.xpose.msra.mxu0 0
        %2230 = vmatprep.subr.bf16.mxu0 0
        %2231 = vmatpush1.bf16.xpose.msra.mxu0 0
        %2232 = vmatprep.subr.bf16.mxu0 0
        %2233 = vmatpush1.bf16.xpose.msra.mxu0 0
        %2234 = vmatprep.subr.bf16.mxu0 0
        %2235 = vmatpush1.bf16.xpose.msra.mxu0 0
        %2236 = vmatprep.subr.bf16.mxu0 0
        %2237 = vmatpush1.bf16.xpose.msra.mxu0 0
        %2238 = vmatprep.subr.bf16.mxu0 0
        %2239 = vmatpush1.bf16.xpose.msra.mxu0 0
        %2240 = vmatprep.subr.bf16.mxu0 0
        %2241 = vmatpush1.bf16.xpose.msra.mxu0 0
        %2242 = vmatprep.subr.bf16.mxu0 0
        %2243 = vmatpush1.bf16.xpose.msra.mxu0 0
        %2244 = vmatprep.subr.bf16.mxu0 0
        %2245 = vmatpush1.bf16.xpose.msra.mxu0 0
        %2246 = vmatprep.subr.bf16.mxu0 0
        %2247 = vmatpush1.bf16.xpose.msra.mxu0 0
        %2248 = vmatprep.subr.bf16.mxu0 0
        %2249 = vmatpush1.bf16.xpose.msra.mxu0 0
        %2250 = vmatprep.subr.bf16.mxu0 0
        %2251 = vmatpush1.bf16.xpose.msra.mxu0 0
        %2252 = vmatprep.subr.bf16.mxu0 0
        %2253 = vmatpush1.bf16.xpose.msra.mxu0 0
        %2254 = vmatprep.subr.bf16.mxu0 0
        %2255 = vmatpush1.bf16.xpose.msra.mxu0 0
        %2256 = vmatprep.mubr.bf16.mxu0 0
        %2257 = vmatmul.mubr.bf16.gmra.mrb[0].mxu0 %v2219
        %v2258 = vpop.f32.mrb[0].mxu0
        %v2259 = vadd.f32 0.0, %v2258
        %v2260 = vpop.f32.mrb[0].mxu0
        %v2261 = vpop.f32.mrb[0].mxu0
        %v2262 = vadd.f32 0.0, %v2261
        %v2263 = vpop.f32.mrb[0].mxu0
        %2264 = vdwg.mxu0
        %v2265 = vsel %vm1087, %v2208, -inf
        %2266 = vmax.xlane.f32.xlu0 %v2265
        %v2267 = vpop.xlane.xlu0 %2266
        %v2268 = vsel %vm1087, %v2211, -inf
        %2269 = vmax.xlane.f32.xlu0 %v2268
        %v2270 = vpop.xlane.xlu0 %2269
        %v2271 = vsel %vm1087, %v2259, -inf
        %2272 = vmax.xlane.f32.xlu0 %v2271
        %v2273 = vpop.xlane.xlu0 %2272
        %v2274 = vsel %vm1087, %v2262, -inf
        %2275 = vmax.xlane.f32.xlu0 %v2274
        %v2276 = vpop.xlane.xlu0 %2275
        %v2277 = vsub.f32 -inf, %v2267
        %v2278 = vsub.f32 -inf, %v2270
        %v2279 = vsub.f32 -inf, %v2273
        %v2280 = vsub.f32 -inf, %v2276
        %v2281 = vmul.f32 %v2277, 1.442695
        %v2282 = vpow.pop %v2281
        %v2283 = vmul.f32 %v2278, 1.442695
        %v2284 = vpow.pop %v2283
        %v2285 = vmul.f32 %v2279, 1.442695
        %v2286 = vpow.pop %v2285
        %v2287 = vmul.f32 %v2280, 1.442695
        %v2288 = vpow.pop %v2287
        %v2289 = vsub.f32 %v2208, %v2267
        %v2290 = vsub.f32 %v2211, %v2270
        %v2291 = vsub.f32 %v2259, %v2273
        %v2292 = vsub.f32 %v2262, %v2276
        %v2293 = vmul.f32 %v2289, 1.442695
        %v2294 = vpow.pop %v2293
        %v2295 = vmul.f32 %v2290, 1.442695
        %v2296 = vpow.pop %v2295
        %v2297 = vmul.f32 %v2291, 1.442695
        %v2298 = vpow.pop %v2297
        %v2299 = vmul.f32 %v2292, 1.442695
        %v2300 = vpow.pop %v2299
        %v2301 = vmul.f32 %v2282, 0.0
        %v2302 = vmul.f32 %v2284, 0.0
        %v2303 = vmul.f32 %v2286, 0.0
        %v2304 = vmul.f32 %v2288, 0.0
        %v2305 = vsel %vm1087, %v2294, 0.0
        %2306 = vadd.xlane.f32.xlu0 %v2305
        %v2307 = vpop.xlane.xlu0 %2306
        %v2308 = vsel %vm1087, %v2296, 0.0
        %2309 = vadd.xlane.f32.xlu0 %v2308
        %v2310 = vpop.xlane.xlu0 %2309
        %v2311 = vsel %vm1087, %v2298, 0.0
        %2312 = vadd.xlane.f32.xlu0 %v2311
        %v2313 = vpop.xlane.xlu0 %2312
        %v2314 = vsel %vm1087, %v2300, 0.0
        %2315 = vadd.xlane.f32.xlu0 %v2314
        %v2316 = vpop.xlane.xlu0 %2315
        %v2317 = vadd.f32 %v2301, %v2307
        %v2318 = vadd.f32 %v2302, %v2310
        %v2319 = vadd.f32 %v2303, %v2313
        %v2320 = vadd.f32 %v2304, %v2316
        %v2321 = vpack.c.bf16 %v2296, %v2294
        %v2322 = vpack.c.bf16 %v2300, %v2298
        %2323 = vrot.lane.b32.xlu0 %v1082, 48
        %v2324 = vpop.permute.xlu0 %2323
        %v2326 = vsel %vm1087, %v2321, 0
        %v2329 = vsel %vm1248, %v2324, 0
        %2331 = vmatprep.subr.bf16.mxu0 0
        %2332 = vmatpush1.bf16.msra.mxu0 %v2329
        %2333 = vmatprep.subr.bf16.mxu0 0
        %2334 = vmatpush1.bf16.msra.mxu0 0
        %2335 = vmatprep.subr.bf16.mxu0 0
        %2336 = vmatpush1.bf16.msra.mxu0 0
        %2337 = vmatprep.subr.bf16.mxu0 0
        %2338 = vmatpush1.bf16.msra.mxu0 0
        %2339 = vmatprep.subr.bf16.mxu0 0
        %2340 = vmatpush1.bf16.msra.mxu0 0
        %2341 = vmatprep.subr.bf16.mxu0 0
        %2342 = vmatpush1.bf16.msra.mxu0 0
        %2343 = vmatprep.subr.bf16.mxu0 0
        %2344 = vmatpush1.bf16.msra.mxu0 0
        %2345 = vmatprep.subr.bf16.mxu0 0
        %2346 = vmatpush1.bf16.msra.mxu0 0
        %2347 = vmatprep.subr.bf16.mxu0 0
        %2348 = vmatpush1.bf16.msra.mxu0 0
        %2349 = vmatprep.subr.bf16.mxu0 0
        %2350 = vmatpush1.bf16.msra.mxu0 0
        %2351 = vmatprep.subr.bf16.mxu0 0
        %2352 = vmatpush1.bf16.msra.mxu0 0
        %2353 = vmatprep.subr.bf16.mxu0 0
        %2354 = vmatpush1.bf16.msra.mxu0 0
        %2355 = vmatprep.subr.bf16.mxu0 0
        %2356 = vmatpush1.bf16.msra.mxu0 0
        %2357 = vmatprep.subr.bf16.mxu0 0
        %2358 = vmatpush1.bf16.msra.mxu0 0
        %2359 = vmatprep.subr.bf16.mxu0 0
        %2360 = vmatpush1.bf16.msra.mxu0 0
        %2361 = vmatprep.subr.bf16.mxu0 0
        %2362 = vmatpush1.bf16.msra.mxu0 0
        %2363 = vmatprep.mubr.bf16.mxu0 0
        %2364 = vmatmul.mubr.bf16.gmra.mrb[0].mxu0 %v2326
        %v2365 = vpop.f32.mrb[0].mxu0
        %v2366 = vadd.f32 0.0, %v2365
        %v2367 = vpop.f32.mrb[0].mxu0
        %v2368 = vpop.f32.mrb[0].mxu0
        %v2369 = vadd.f32 0.0, %v2368
        %v2370 = vpop.f32.mrb[0].mxu0
        %2371 = vdwg.mxu0
        %2372 = vrot.lane.b32.xlu0 %v1083, 48
        %v2373 = vpop.permute.xlu0 %2372
        %v2375 = vsel %vm1087, %v2322, 0
        %v2378 = vsel %vm1248, %v2373, 0
        %2380 = vmatprep.subr.bf16.mxu0 0
        %2381 = vmatpush1.bf16.msra.mxu0 %v2378
        %2382 = vmatprep.subr.bf16.mxu0 0
        %2383 = vmatpush1.bf16.msra.mxu0 0
        %2384 = vmatprep.subr.bf16.mxu0 0
        %2385 = vmatpush1.bf16.msra.mxu0 0
        %2386 = vmatprep.subr.bf16.mxu0 0
        %2387 = vmatpush1.bf16.msra.mxu0 0
        %2388 = vmatprep.subr.bf16.mxu0 0
        %2389 = vmatpush1.bf16.msra.mxu0 0
        %2390 = vmatprep.subr.bf16.mxu0 0
        %2391 = vmatpush1.bf16.msra.mxu0 0
        %2392 = vmatprep.subr.bf16.mxu0 0
        %2393 = vmatpush1.bf16.msra.mxu0 0
        %2394 = vmatprep.subr.bf16.mxu0 0
        %2395 = vmatpush1.bf16.msra.mxu0 0
        %2396 = vmatprep.subr.bf16.mxu0 0
        %2397 = vmatpush1.bf16.msra.mxu0 0
        %2398 = vmatprep.subr.bf16.mxu0 0
        %2399 = vmatpush1.bf16.msra.mxu0 0
        %2400 = vmatprep.subr.bf16.mxu0 0
        %2401 = vmatpush1.bf16.msra.mxu0 0
        %2402 = vmatprep.subr.bf16.mxu0 0
        %2403 = vmatpush1.bf16.msra.mxu0 0
        %2404 = vmatprep.subr.bf16.mxu0 0
        %2405 = vmatpush1.bf16.msra.mxu0 0
        %2406 = vmatprep.subr.bf16.mxu0 0
        %2407 = vmatpush1.bf16.msra.mxu0 0
        %2408 = vmatprep.subr.bf16.mxu0 0
        %2409 = vmatpush1.bf16.msra.mxu0 0
        %2410 = vmatprep.subr.bf16.mxu0 0
        %2411 = vmatpush1.bf16.msra.mxu0 0
        %2412 = vmatprep.mubr.bf16.mxu0 0
        %2413 = vmatmul.mubr.bf16.gmra.mrb[0].mxu0 %v2375
        %v2414 = vpop.f32.mrb[0].mxu0
        %v2415 = vadd.f32 0.0, %v2414
        %v2416 = vpop.f32.mrb[0].mxu0
        %v2417 = vpop.f32.mrb[0].mxu0
        %v2418 = vadd.f32 0.0, %v2417
        %v2419 = vpop.f32.mrb[0].mxu0
        %2420 = vdwg.mxu0
        %v2421 = vadd.f32 %v2301, %v2366
        %v2422 = vadd.f32 %v2302, %v2369
        %v2423 = vadd.f32 %v2303, %v2415
        %v2424 = vadd.f32 %v2304, %v2418
        %2425 = vrot.lane.b32.xlu0 %v1346, 80
        %v2426 = vpop.permute.xlu0 %2425
        %v2428 = vsel %vm1087, %v2426, 0
        %2430 = vmatprep.subr.bf16.mxu0 0
        %2431 = vmatpush1.bf16.xpose.msra.mxu0 %v2428
        %2432 = vmatprep.subr.bf16.mxu0 0
        %2433 = vmatpush1.bf16.xpose.msra.mxu0 0
        %2434 = vmatprep.subr.bf16.mxu0 0
        %2435 = vmatpush1.bf16.xpose.msra.mxu0 0
        %2436 = vmatprep.subr.bf16.mxu0 0
        %2437 = vmatpush1.bf16.xpose.msra.mxu0 0
        %2438 = vmatprep.subr.bf16.mxu0 0
        %2439 = vmatpush1.bf16.xpose.msra.mxu0 0
        %2440 = vmatprep.subr.bf16.mxu0 0
        %2441 = vmatpush1.bf16.xpose.msra.mxu0 0
        %2442 = vmatprep.subr.bf16.mxu0 0
        %2443 = vmatpush1.bf16.xpose.msra.mxu0 0
        %2444 = vmatprep.subr.bf16.mxu0 0
        %2445 = vmatpush1.bf16.xpose.msra.mxu0 0
        %2446 = vmatprep.subr.bf16.mxu0 0
        %2447 = vmatpush1.bf16.xpose.msra.mxu0 0
        %2448 = vmatprep.subr.bf16.mxu0 0
        %2449 = vmatpush1.bf16.xpose.msra.mxu0 0
        %2450 = vmatprep.subr.bf16.mxu0 0
        %2451 = vmatpush1.bf16.xpose.msra.mxu0 0
        %2452 = vmatprep.subr.bf16.mxu0 0
        %2453 = vmatpush1.bf16.xpose.msra.mxu0 0
        %2454 = vmatprep.subr.bf16.mxu0 0
        %2455 = vmatpush1.bf16.xpose.msra.mxu0 0
        %2456 = vmatprep.subr.bf16.mxu0 0
        %2457 = vmatpush1.bf16.xpose.msra.mxu0 0
        %2458 = vmatprep.subr.bf16.mxu0 0
        %2459 = vmatpush1.bf16.xpose.msra.mxu0 0
        %2460 = vmatprep.subr.bf16.mxu0 0
        %2461 = vmatpush1.bf16.xpose.msra.mxu0 0
        %2462 = vmatprep.mubr.bf16.mxu0 0
        %2463 = vmatmul.mubr.bf16.gmra.mrb[0].mxu0 %v2168
        %v2464 = vpop.f32.mrb[0].mxu0
        %v2465 = vadd.f32 0.0, %v2464
        %v2466 = vpop.f32.mrb[0].mxu0
        %v2467 = vpop.f32.mrb[0].mxu0
        %v2468 = vadd.f32 0.0, %v2467
        %v2469 = vpop.f32.mrb[0].mxu0
        %2470 = vdwg.mxu0
        %2471 = vrot.lane.b32.xlu0 %v1393, 80
        %v2472 = vpop.permute.xlu0 %2471
        %v2474 = vsel %vm1087, %v2472, 0
        %2476 = vmatprep.subr.bf16.mxu0 0
        %2477 = vmatpush1.bf16.xpose.msra.mxu0 %v2474
        %2478 = vmatprep.subr.bf16.mxu0 0
        %2479 = vmatpush1.bf16.xpose.msra.mxu0 0
        %2480 = vmatprep.subr.bf16.mxu0 0
        %2481 = vmatpush1.bf16.xpose.msra.mxu0 0
        %2482 = vmatprep.subr.bf16.mxu0 0
        %2483 = vmatpush1.bf16.xpose.msra.mxu0 0
        %2484 = vmatprep.subr.bf16.mxu0 0
        %2485 = vmatpush1.bf16.xpose.msra.mxu0 0
        %2486 = vmatprep.subr.bf16.mxu0 0
        %2487 = vmatpush1.bf16.xpose.msra.mxu0 0
        %2488 = vmatprep.subr.bf16.mxu0 0
        %2489 = vmatpush1.bf16.xpose.msra.mxu0 0
        %2490 = vmatprep.subr.bf16.mxu0 0
        %2491 = vmatpush1.bf16.xpose.msra.mxu0 0
        %2492 = vmatprep.subr.bf16.mxu0 0
        %2493 = vmatpush1.bf16.xpose.msra.mxu0 0
        %2494 = vmatprep.subr.bf16.mxu0 0
        %2495 = vmatpush1.bf16.xpose.msra.mxu0 0
        %2496 = vmatprep.subr.bf16.mxu0 0
        %2497 = vmatpush1.bf16.xpose.msra.mxu0 0
        %2498 = vmatprep.subr.bf16.mxu0 0
        %2499 = vmatpush1.bf16.xpose.msra.mxu0 0
        %2500 = vmatprep.subr.bf16.mxu0 0
        %2501 = vmatpush1.bf16.xpose.msra.mxu0 0
        %2502 = vmatprep.subr.bf16.mxu0 0
        %2503 = vmatpush1.bf16.xpose.msra.mxu0 0
        %2504 = vmatprep.subr.bf16.mxu0 0
        %2505 = vmatpush1.bf16.xpose.msra.mxu0 0
        %2506 = vmatprep.subr.bf16.mxu0 0
        %2507 = vmatpush1.bf16.xpose.msra.mxu0 0
        %2508 = vmatprep.mubr.bf16.mxu0 0
        %2509 = vmatmul.mubr.bf16.gmra.mrb[0].mxu0 %v2219
        %v2510 = vpop.f32.mrb[0].mxu0
        %v2511 = vadd.f32 0.0, %v2510
        %v2512 = vpop.f32.mrb[0].mxu0
        %v2513 = vpop.f32.mrb[0].mxu0
        %v2514 = vadd.f32 0.0, %v2513
        %v2515 = vpop.f32.mrb[0].mxu0
        %2516 = vdwg.mxu0
        %v2517 = vsel %vm1087, %v2465, -inf
        %2518 = vmax.xlane.f32.xlu0 %v2517
        %v2519 = vpop.xlane.xlu0 %2518
        %v2520 = vsel %vm1087, %v2468, -inf
        %2521 = vmax.xlane.f32.xlu0 %v2520
        %v2522 = vpop.xlane.xlu0 %2521
        %v2523 = vsel %vm1087, %v2511, -inf
        %2524 = vmax.xlane.f32.xlu0 %v2523
        %v2525 = vpop.xlane.xlu0 %2524
        %v2526 = vsel %vm1087, %v2514, -inf
        %2527 = vmax.xlane.f32.xlu0 %v2526
        %v2528 = vpop.xlane.xlu0 %2527
        %v2529 = vmax.f32 %v2267, %v2519
        %v2530 = vmax.f32 %v2270, %v2522
        %v2531 = vmax.f32 %v2273, %v2525
        %v2532 = vmax.f32 %v2276, %v2528
        %v2533 = vsub.f32 %v2267, %v2529
        %v2534 = vsub.f32 %v2270, %v2530
        %v2535 = vsub.f32 %v2273, %v2531
        %v2536 = vsub.f32 %v2276, %v2532
        %v2537 = vmul.f32 %v2533, 1.442695
        %v2538 = vpow.pop %v2537
        %v2539 = vmul.f32 %v2534, 1.442695
        %v2540 = vpow.pop %v2539
        %v2541 = vmul.f32 %v2535, 1.442695
        %v2542 = vpow.pop %v2541
        %v2543 = vmul.f32 %v2536, 1.442695
        %v2544 = vpow.pop %v2543
        %v2545 = vsub.f32 %v2465, %v2529
        %v2546 = vsub.f32 %v2468, %v2530
        %v2547 = vsub.f32 %v2511, %v2531
        %v2548 = vsub.f32 %v2514, %v2532
        %v2549 = vmul.f32 %v2545, 1.442695
        %v2550 = vpow.pop %v2549
        %v2551 = vmul.f32 %v2546, 1.442695
        %v2552 = vpow.pop %v2551
        %v2553 = vmul.f32 %v2547, 1.442695
        %v2554 = vpow.pop %v2553
        %v2555 = vmul.f32 %v2548, 1.442695
        %v2556 = vpow.pop %v2555
        %v2557 = vmul.f32 %v2538, %v2317
        %v2558 = vmul.f32 %v2540, %v2318
        %v2559 = vmul.f32 %v2542, %v2319
        %v2560 = vmul.f32 %v2544, %v2320
        %v2561 = vsel %vm1087, %v2550, 0.0
        %2562 = vadd.xlane.f32.xlu0 %v2561
        %v2563 = vpop.xlane.xlu0 %2562
        %v2564 = vsel %vm1087, %v2552, 0.0
        %2565 = vadd.xlane.f32.xlu0 %v2564
        %v2566 = vpop.xlane.xlu0 %2565
        %v2567 = vsel %vm1087, %v2554, 0.0
        %2568 = vadd.xlane.f32.xlu0 %v2567
        %v2569 = vpop.xlane.xlu0 %2568
        %v2570 = vsel %vm1087, %v2556, 0.0
        %2571 = vadd.xlane.f32.xlu0 %v2570
        %v2572 = vpop.xlane.xlu0 %2571
        %v2573 = vadd.f32 %v2557, %v2563
        %v2574 = vadd.f32 %v2558, %v2566
        %v2575 = vadd.f32 %v2559, %v2569
        %v2576 = vadd.f32 %v2560, %v2572
        %v2577 = vmul.f32 %v2538, %v2421
        %v2578 = vmul.f32 %v2540, %v2422
        %v2579 = vmul.f32 %v2542, %v2423
        %v2580 = vmul.f32 %v2544, %v2424
        %v2581 = vpack.c.bf16 %v2552, %v2550
        %v2582 = vpack.c.bf16 %v2556, %v2554
        %2583 = vrot.lane.b32.xlu0 %v1346, 48
        %v2584 = vpop.permute.xlu0 %2583
        %v2586 = vsel %vm1087, %v2581, 0
        %v2589 = vsel %vm1248, %v2584, 0
        %2591 = vmatprep.subr.bf16.mxu0 0
        %2592 = vmatpush1.bf16.msra.mxu0 %v2589
        %2593 = vmatprep.subr.bf16.mxu0 0
        %2594 = vmatpush1.bf16.msra.mxu0 0
        %2595 = vmatprep.subr.bf16.mxu0 0
        %2596 = vmatpush1.bf16.msra.mxu0 0
        %2597 = vmatprep.subr.bf16.mxu0 0
        %2598 = vmatpush1.bf16.msra.mxu0 0
        %2599 = vmatprep.subr.bf16.mxu0 0
        %2600 = vmatpush1.bf16.msra.mxu0 0
        %2601 = vmatprep.subr.bf16.mxu0 0
        %2602 = vmatpush1.bf16.msra.mxu0 0
        %2603 = vmatprep.subr.bf16.mxu0 0
        %2604 = vmatpush1.bf16.msra.mxu0 0
        %2605 = vmatprep.subr.bf16.mxu0 0
        %2606 = vmatpush1.bf16.msra.mxu0 0
        %2607 = vmatprep.subr.bf16.mxu0 0
        %2608 = vmatpush1.bf16.msra.mxu0 0
        %2609 = vmatprep.subr.bf16.mxu0 0
        %2610 = vmatpush1.bf16.msra.mxu0 0
        %2611 = vmatprep.subr.bf16.mxu0 0
        %2612 = vmatpush1.bf16.msra.mxu0 0
        %2613 = vmatprep.subr.bf16.mxu0 0
        %2614 = vmatpush1.bf16.msra.mxu0 0
        %2615 = vmatprep.subr.bf16.mxu0 0
        %2616 = vmatpush1.bf16.msra.mxu0 0
        %2617 = vmatprep.subr.bf16.mxu0 0
        %2618 = vmatpush1.bf16.msra.mxu0 0
        %2619 = vmatprep.subr.bf16.mxu0 0
        %2620 = vmatpush1.bf16.msra.mxu0 0
        %2621 = vmatprep.subr.bf16.mxu0 0
        %2622 = vmatpush1.bf16.msra.mxu0 0
        %2623 = vmatprep.mubr.bf16.mxu0 0
        %2624 = vmatmul.mubr.bf16.gmra.mrb[0].mxu0 %v2586
        %v2625 = vpop.f32.mrb[0].mxu0
        %v2626 = vadd.f32 0.0, %v2625
        %v2627 = vpop.f32.mrb[0].mxu0
        %v2628 = vpop.f32.mrb[0].mxu0
        %v2629 = vadd.f32 0.0, %v2628
        %v2630 = vpop.f32.mrb[0].mxu0
        %2631 = vdwg.mxu0
        %2632 = vrot.lane.b32.xlu0 %v1393, 48
        %v2633 = vpop.permute.xlu0 %2632
        %v2635 = vsel %vm1087, %v2582, 0
        %v2638 = vsel %vm1248, %v2633, 0
        %2640 = vmatprep.subr.bf16.mxu0 0
        %2641 = vmatpush1.bf16.msra.mxu0 %v2638
        %2642 = vmatprep.subr.bf16.mxu0 0
        %2643 = vmatpush1.bf16.msra.mxu0 0
        %2644 = vmatprep.subr.bf16.mxu0 0
        %2645 = vmatpush1.bf16.msra.mxu0 0
        %2646 = vmatprep.subr.bf16.mxu0 0
        %2647 = vmatpush1.bf16.msra.mxu0 0
        %2648 = vmatprep.subr.bf16.mxu0 0
        %2649 = vmatpush1.bf16.msra.mxu0 0
        %2650 = vmatprep.subr.bf16.mxu0 0
        %2651 = vmatpush1.bf16.msra.mxu0 0
        %2652 = vmatprep.subr.bf16.mxu0 0
        %2653 = vmatpush1.bf16.msra.mxu0 0
        %2654 = vmatprep.subr.bf16.mxu0 0
        %2655 = vmatpush1.bf16.msra.mxu0 0
        %2656 = vmatprep.subr.bf16.mxu0 0
        %2657 = vmatpush1.bf16.msra.mxu0 0
        %2658 = vmatprep.subr.bf16.mxu0 0
        %2659 = vmatpush1.bf16.msra.mxu0 0
        %2660 = vmatprep.subr.bf16.mxu0 0
        %2661 = vmatpush1.bf16.msra.mxu0 0
        %2662 = vmatprep.subr.bf16.mxu0 0
        %2663 = vmatpush1.bf16.msra.mxu0 0
        %2664 = vmatprep.subr.bf16.mxu0 0
        %2665 = vmatpush1.bf16.msra.mxu0 0
        %2666 = vmatprep.subr.bf16.mxu0 0
        %2667 = vmatpush1.bf16.msra.mxu0 0
        %2668 = vmatprep.subr.bf16.mxu0 0
        %2669 = vmatpush1.bf16.msra.mxu0 0
        %2670 = vmatprep.subr.bf16.mxu0 0
        %2671 = vmatpush1.bf16.msra.mxu0 0
        %2672 = vmatprep.mubr.bf16.mxu0 0
        %2673 = vmatmul.mubr.bf16.gmra.mrb[0].mxu0 %v2635
        %v2674 = vpop.f32.mrb[0].mxu0
        %v2675 = vadd.f32 0.0, %v2674
        %v2676 = vpop.f32.mrb[0].mxu0
        %v2677 = vpop.f32.mrb[0].mxu0
        %v2678 = vadd.f32 0.0, %v2677
        %v2679 = vpop.f32.mrb[0].mxu0
        %2680 = vdwg.mxu0
        %v2681 = vadd.f32 %v2577, %v2626
        %v2682 = vadd.f32 %v2578, %v2629
        %v2683 = vadd.f32 %v2579, %v2675
        %v2684 = vadd.f32 %v2580, %v2678
        %v2685 = vrcp.pop %v2573
        %v2686 = vrcp.pop %v2574
        %v2687 = vrcp.pop %v2575
        %v2688 = vrcp.pop %v2576
        %v2689 = vmul.f32 %v2681, %v2685
        %v2690 = vmul.f32 %v2682, %v2686
        %v2691 = vmul.f32 %v2683, %v2687
        %v2692 = vmul.f32 %v2684, %v2688
        %v2693 = vpack.c.bf16 %v2690, %v2689
        %v2694 = vpack.c.bf16 %v2692, %v2691
        %2697 = vrot.lane.b32.xlu0 %v2693, 16
        %v2698 = vpop.permute.xlu0 %2697
        %2699 = vrot.lane.b32.xlu0 %v2694, 16
        %v2700 = vpop.permute.xlu0 %2699
        %vm2703 = vcmask 195712
        %2704 = vst.msk [vmem:[#allocation3] sm:$0xff] %vm2703, %v2698
        %2705 = vst.msk [vmem:[#allocation3 + $0x8] sm:$0xff] %vm2703, %v2700
        %2706 = vrot.lane.b32.xlu0 %v1082, 104
        %v2707 = vpop.permute.xlu0 %2706
        %2708 = vrot.lane.b32.xlu0 %v1082, 72
        %v2709 = vpop.permute.xlu0 %2708
        %v2711 = vsel %vm1087, %v2707, 0
        %v2714 = vsel %vm1087, %v2709, 0
        %2716 = vmatprep.subr.bf16.mxu0 0
        %2717 = vmatpush1.bf16.xpose.msra.mxu0 %v2714
        %2718 = vmatprep.subr.bf16.mxu0 0
        %2719 = vmatpush1.bf16.xpose.msra.mxu0 0
        %2720 = vmatprep.subr.bf16.mxu0 0
        %2721 = vmatpush1.bf16.xpose.msra.mxu0 0
        %2722 = vmatprep.subr.bf16.mxu0 0
        %2723 = vmatpush1.bf16.xpose.msra.mxu0 0
        %2724 = vmatprep.subr.bf16.mxu0 0
        %2725 = vmatpush1.bf16.xpose.msra.mxu0 0
        %2726 = vmatprep.subr.bf16.mxu0 0
        %2727 = vmatpush1.bf16.xpose.msra.mxu0 0
        %2728 = vmatprep.subr.bf16.mxu0 0
        %2729 = vmatpush1.bf16.xpose.msra.mxu0 0
        %2730 = vmatprep.subr.bf16.mxu0 0
        %2731 = vmatpush1.bf16.xpose.msra.mxu0 0
        %2732 = vmatprep.subr.bf16.mxu0 0
        %2733 = vmatpush1.bf16.xpose.msra.mxu0 0
        %2734 = vmatprep.subr.bf16.mxu0 0
        %2735 = vmatpush1.bf16.xpose.msra.mxu0 0
        %2736 = vmatprep.subr.bf16.mxu0 0
        %2737 = vmatpush1.bf16.xpose.msra.mxu0 0
        %2738 = vmatprep.subr.bf16.mxu0 0
        %2739 = vmatpush1.bf16.xpose.msra.mxu0 0
        %2740 = vmatprep.subr.bf16.mxu0 0
        %2741 = vmatpush1.bf16.xpose.msra.mxu0 0
        %2742 = vmatprep.subr.bf16.mxu0 0
        %2743 = vmatpush1.bf16.xpose.msra.mxu0 0
        %2744 = vmatprep.subr.bf16.mxu0 0
        %2745 = vmatpush1.bf16.xpose.msra.mxu0 0
        %2746 = vmatprep.subr.bf16.mxu0 0
        %2747 = vmatpush1.bf16.xpose.msra.mxu0 0
        %2748 = vmatprep.mubr.bf16.mxu0 0
        %2749 = vmatmul.mubr.bf16.gmra.mrb[0].mxu0 %v2711
        %v2750 = vpop.f32.mrb[0].mxu0
        %v2751 = vadd.f32 0.0, %v2750
        %v2752 = vpop.f32.mrb[0].mxu0
        %v2753 = vpop.f32.mrb[0].mxu0
        %v2754 = vadd.f32 0.0, %v2753
        %v2755 = vpop.f32.mrb[0].mxu0
        %2756 = vdwg.mxu0
        %2757 = vrot.lane.b32.xlu0 %v1083, 104
        %v2758 = vpop.permute.xlu0 %2757
        %2759 = vrot.lane.b32.xlu0 %v1083, 72
        %v2760 = vpop.permute.xlu0 %2759
        %v2762 = vsel %vm1087, %v2758, 0
        %v2765 = vsel %vm1087, %v2760, 0
        %2767 = vmatprep.subr.bf16.mxu0 0
        %2768 = vmatpush1.bf16.xpose.msra.mxu0 %v2765
        %2769 = vmatprep.subr.bf16.mxu0 0
        %2770 = vmatpush1.bf16.xpose.msra.mxu0 0
        %2771 = vmatprep.subr.bf16.mxu0 0
        %2772 = vmatpush1.bf16.xpose.msra.mxu0 0
        %2773 = vmatprep.subr.bf16.mxu0 0
        %2774 = vmatpush1.bf16.xpose.msra.mxu0 0
        %2775 = vmatprep.subr.bf16.mxu0 0
        %2776 = vmatpush1.bf16.xpose.msra.mxu0 0
        %2777 = vmatprep.subr.bf16.mxu0 0
        %2778 = vmatpush1.bf16.xpose.msra.mxu0 0
        %2779 = vmatprep.subr.bf16.mxu0 0
        %2780 = vmatpush1.bf16.xpose.msra.mxu0 0
        %2781 = vmatprep.subr.bf16.mxu0 0
        %2782 = vmatpush1.bf16.xpose.msra.mxu0 0
        %2783 = vmatprep.subr.bf16.mxu0 0
        %2784 = vmatpush1.bf16.xpose.msra.mxu0 0
        %2785 = vmatprep.subr.bf16.mxu0 0
        %2786 = vmatpush1.bf16.xpose.msra.mxu0 0
        %2787 = vmatprep.subr.bf16.mxu0 0
        %2788 = vmatpush1.bf16.xpose.msra.mxu0 0
        %2789 = vmatprep.subr.bf16.mxu0 0
        %2790 = vmatpush1.bf16.xpose.msra.mxu0 0
        %2791 = vmatprep.subr.bf16.mxu0 0
        %2792 = vmatpush1.bf16.xpose.msra.mxu0 0
        %2793 = vmatprep.subr.bf16.mxu0 0
        %2794 = vmatpush1.bf16.xpose.msra.mxu0 0
        %2795 = vmatprep.subr.bf16.mxu0 0
        %2796 = vmatpush1.bf16.xpose.msra.mxu0 0
        %2797 = vmatprep.subr.bf16.mxu0 0
        %2798 = vmatpush1.bf16.xpose.msra.mxu0 0
        %2799 = vmatprep.mubr.bf16.mxu0 0
        %2800 = vmatmul.mubr.bf16.gmra.mrb[0].mxu0 %v2762
        %v2801 = vpop.f32.mrb[0].mxu0
        %v2802 = vadd.f32 0.0, %v2801
        %v2803 = vpop.f32.mrb[0].mxu0
        %v2804 = vpop.f32.mrb[0].mxu0
        %v2805 = vadd.f32 0.0, %v2804
        %v2806 = vpop.f32.mrb[0].mxu0
        %2807 = vdwg.mxu0
        %v2808 = vsel %vm1087, %v2751, -inf
        %2809 = vmax.xlane.f32.xlu0 %v2808
        %v2810 = vpop.xlane.xlu0 %2809
        %v2811 = vsel %vm1087, %v2754, -inf
        %2812 = vmax.xlane.f32.xlu0 %v2811
        %v2813 = vpop.xlane.xlu0 %2812
        %v2814 = vsel %vm1087, %v2802, -inf
        %2815 = vmax.xlane.f32.xlu0 %v2814
        %v2816 = vpop.xlane.xlu0 %2815
        %v2817 = vsel %vm1087, %v2805, -inf
        %2818 = vmax.xlane.f32.xlu0 %v2817
        %v2819 = vpop.xlane.xlu0 %2818
        %v2820 = vsub.f32 -inf, %v2810
        %v2821 = vsub.f32 -inf, %v2813
        %v2822 = vsub.f32 -inf, %v2816
        %v2823 = vsub.f32 -inf, %v2819
        %v2824 = vmul.f32 %v2820, 1.442695
        %v2825 = vpow.pop %v2824
        %v2826 = vmul.f32 %v2821, 1.442695
        %v2827 = vpow.pop %v2826
        %v2828 = vmul.f32 %v2822, 1.442695
        %v2829 = vpow.pop %v2828
        %v2830 = vmul.f32 %v2823, 1.442695
        %v2831 = vpow.pop %v2830
        %v2832 = vsub.f32 %v2751, %v2810
        %v2833 = vsub.f32 %v2754, %v2813
        %v2834 = vsub.f32 %v2802, %v2816
        %v2835 = vsub.f32 %v2805, %v2819
        %v2836 = vmul.f32 %v2832, 1.442695
        %v2837 = vpow.pop %v2836
        %v2838 = vmul.f32 %v2833, 1.442695
        %v2839 = vpow.pop %v2838
        %v2840 = vmul.f32 %v2834, 1.442695
        %v2841 = vpow.pop %v2840
        %v2842 = vmul.f32 %v2835, 1.442695
        %v2843 = vpow.pop %v2842
        %v2844 = vmul.f32 %v2825, 0.0
        %v2845 = vmul.f32 %v2827, 0.0
        %v2846 = vmul.f32 %v2829, 0.0
        %v2847 = vmul.f32 %v2831, 0.0
        %v2848 = vsel %vm1087, %v2837, 0.0
        %2849 = vadd.xlane.f32.xlu0 %v2848
        %v2850 = vpop.xlane.xlu0 %2849
        %v2851 = vsel %vm1087, %v2839, 0.0
        %2852 = vadd.xlane.f32.xlu0 %v2851
        %v2853 = vpop.xlane.xlu0 %2852
        %v2854 = vsel %vm1087, %v2841, 0.0
        %2855 = vadd.xlane.f32.xlu0 %v2854
        %v2856 = vpop.xlane.xlu0 %2855
        %v2857 = vsel %vm1087, %v2843, 0.0
        %2858 = vadd.xlane.f32.xlu0 %v2857
        %v2859 = vpop.xlane.xlu0 %2858
        %v2860 = vadd.f32 %v2844, %v2850
        %v2861 = vadd.f32 %v2845, %v2853
        %v2862 = vadd.f32 %v2846, %v2856
        %v2863 = vadd.f32 %v2847, %v2859
        %v2864 = vpack.c.bf16 %v2839, %v2837
        %v2865 = vpack.c.bf16 %v2843, %v2841
        %2866 = vrot.lane.b32.xlu0 %v1082, 40
        %v2867 = vpop.permute.xlu0 %2866
        %v2869 = vsel %vm1087, %v2864, 0
        %v2872 = vsel %vm1248, %v2867, 0
        %2874 = vmatprep.subr.bf16.mxu0 0
        %2875 = vmatpush1.bf16.msra.mxu0 %v2872
        %2876 = vmatprep.subr.bf16.mxu0 0
        %2877 = vmatpush1.bf16.msra.mxu0 0
        %2878 = vmatprep.subr.bf16.mxu0 0
        %2879 = vmatpush1.bf16.msra.mxu0 0
        %2880 = vmatprep.subr.bf16.mxu0 0
        %2881 = vmatpush1.bf16.msra.mxu0 0
        %2882 = vmatprep.subr.bf16.mxu0 0
        %2883 = vmatpush1.bf16.msra.mxu0 0
        %2884 = vmatprep.subr.bf16.mxu0 0
        %2885 = vmatpush1.bf16.msra.mxu0 0
        %2886 = vmatprep.subr.bf16.mxu0 0
        %2887 = vmatpush1.bf16.msra.mxu0 0
        %2888 = vmatprep.subr.bf16.mxu0 0
        %2889 = vmatpush1.bf16.msra.mxu0 0
        %2890 = vmatprep.subr.bf16.mxu0 0
        %2891 = vmatpush1.bf16.msra.mxu0 0
        %2892 = vmatprep.subr.bf16.mxu0 0
        %2893 = vmatpush1.bf16.msra.mxu0 0
        %2894 = vmatprep.subr.bf16.mxu0 0
        %2895 = vmatpush1.bf16.msra.mxu0 0
        %2896 = vmatprep.subr.bf16.mxu0 0
        %2897 = vmatpush1.bf16.msra.mxu0 0
        %2898 = vmatprep.subr.bf16.mxu0 0
        %2899 = vmatpush1.bf16.msra.mxu0 0
        %2900 = vmatprep.subr.bf16.mxu0 0
        %2901 = vmatpush1.bf16.msra.mxu0 0
        %2902 = vmatprep.subr.bf16.mxu0 0
        %2903 = vmatpush1.bf16.msra.mxu0 0
        %2904 = vmatprep.subr.bf16.mxu0 0
        %2905 = vmatpush1.bf16.msra.mxu0 0
        %2906 = vmatprep.mubr.bf16.mxu0 0
        %2907 = vmatmul.mubr.bf16.gmra.mrb[0].mxu0 %v2869
        %v2908 = vpop.f32.mrb[0].mxu0
        %v2909 = vadd.f32 0.0, %v2908
        %v2910 = vpop.f32.mrb[0].mxu0
        %v2911 = vpop.f32.mrb[0].mxu0
        %v2912 = vadd.f32 0.0, %v2911
        %v2913 = vpop.f32.mrb[0].mxu0
        %2914 = vdwg.mxu0
        %2915 = vrot.lane.b32.xlu0 %v1083, 40
        %v2916 = vpop.permute.xlu0 %2915
        %v2918 = vsel %vm1087, %v2865, 0
        %v2921 = vsel %vm1248, %v2916, 0
        %2923 = vmatprep.subr.bf16.mxu0 0
        %2924 = vmatpush1.bf16.msra.mxu0 %v2921
        %2925 = vmatprep.subr.bf16.mxu0 0
        %2926 = vmatpush1.bf16.msra.mxu0 0
        %2927 = vmatprep.subr.bf16.mxu0 0
        %2928 = vmatpush1.bf16.msra.mxu0 0
        %2929 = vmatprep.subr.bf16.mxu0 0
        %2930 = vmatpush1.bf16.msra.mxu0 0
        %2931 = vmatprep.subr.bf16.mxu0 0
        %2932 = vmatpush1.bf16.msra.mxu0 0
        %2933 = vmatprep.subr.bf16.mxu0 0
        %2934 = vmatpush1.bf16.msra.mxu0 0
        %2935 = vmatprep.subr.bf16.mxu0 0
        %2936 = vmatpush1.bf16.msra.mxu0 0
        %2937 = vmatprep.subr.bf16.mxu0 0
        %2938 = vmatpush1.bf16.msra.mxu0 0
        %2939 = vmatprep.subr.bf16.mxu0 0
        %2940 = vmatpush1.bf16.msra.mxu0 0
        %2941 = vmatprep.subr.bf16.mxu0 0
        %2942 = vmatpush1.bf16.msra.mxu0 0
        %2943 = vmatprep.subr.bf16.mxu0 0
        %2944 = vmatpush1.bf16.msra.mxu0 0
        %2945 = vmatprep.subr.bf16.mxu0 0
        %2946 = vmatpush1.bf16.msra.mxu0 0
        %2947 = vmatprep.subr.bf16.mxu0 0
        %2948 = vmatpush1.bf16.msra.mxu0 0
        %2949 = vmatprep.subr.bf16.mxu0 0
        %2950 = vmatpush1.bf16.msra.mxu0 0
        %2951 = vmatprep.subr.bf16.mxu0 0
        %2952 = vmatpush1.bf16.msra.mxu0 0
        %2953 = vmatprep.subr.bf16.mxu0 0
        %2954 = vmatpush1.bf16.msra.mxu0 0
        %2955 = vmatprep.mubr.bf16.mxu0 0
        %2956 = vmatmul.mubr.bf16.gmra.mrb[0].mxu0 %v2918
        %v2957 = vpop.f32.mrb[0].mxu0
        %v2958 = vadd.f32 0.0, %v2957
        %v2959 = vpop.f32.mrb[0].mxu0
        %v2960 = vpop.f32.mrb[0].mxu0
        %v2961 = vadd.f32 0.0, %v2960
        %v2962 = vpop.f32.mrb[0].mxu0
        %2963 = vdwg.mxu0
        %v2964 = vadd.f32 %v2844, %v2909
        %v2965 = vadd.f32 %v2845, %v2912
        %v2966 = vadd.f32 %v2846, %v2958
        %v2967 = vadd.f32 %v2847, %v2961
        %2968 = vrot.lane.b32.xlu0 %v1346, 72
        %v2969 = vpop.permute.xlu0 %2968
        %v2971 = vsel %vm1087, %v2969, 0
        %2973 = vmatprep.subr.bf16.mxu0 0
        %2974 = vmatpush1.bf16.xpose.msra.mxu0 %v2971
        %2975 = vmatprep.subr.bf16.mxu0 0
        %2976 = vmatpush1.bf16.xpose.msra.mxu0 0
        %2977 = vmatprep.subr.bf16.mxu0 0
        %2978 = vmatpush1.bf16.xpose.msra.mxu0 0
        %2979 = vmatprep.subr.bf16.mxu0 0
        %2980 = vmatpush1.bf16.xpose.msra.mxu0 0
        %2981 = vmatprep.subr.bf16.mxu0 0
        %2982 = vmatpush1.bf16.xpose.msra.mxu0 0
        %2983 = vmatprep.subr.bf16.mxu0 0
        %2984 = vmatpush1.bf16.xpose.msra.mxu0 0
        %2985 = vmatprep.subr.bf16.mxu0 0
        %2986 = vmatpush1.bf16.xpose.msra.mxu0 0
        %2987 = vmatprep.subr.bf16.mxu0 0
        %2988 = vmatpush1.bf16.xpose.msra.mxu0 0
        %2989 = vmatprep.subr.bf16.mxu0 0
        %2990 = vmatpush1.bf16.xpose.msra.mxu0 0
        %2991 = vmatprep.subr.bf16.mxu0 0
        %2992 = vmatpush1.bf16.xpose.msra.mxu0 0
        %2993 = vmatprep.subr.bf16.mxu0 0
        %2994 = vmatpush1.bf16.xpose.msra.mxu0 0
        %2995 = vmatprep.subr.bf16.mxu0 0
        %2996 = vmatpush1.bf16.xpose.msra.mxu0 0
        %2997 = vmatprep.subr.bf16.mxu0 0
        %2998 = vmatpush1.bf16.xpose.msra.mxu0 0
        %2999 = vmatprep.subr.bf16.mxu0 0
        %3000 = vmatpush1.bf16.xpose.msra.mxu0 0
        %3001 = vmatprep.subr.bf16.mxu0 0
        %3002 = vmatpush1.bf16.xpose.msra.mxu0 0
        %3003 = vmatprep.subr.bf16.mxu0 0
        %3004 = vmatpush1.bf16.xpose.msra.mxu0 0
        %3005 = vmatprep.mubr.bf16.mxu0 0
        %3006 = vmatmul.mubr.bf16.gmra.mrb[0].mxu0 %v2711
        %v3007 = vpop.f32.mrb[0].mxu0
        %v3008 = vadd.f32 0.0, %v3007
        %v3009 = vpop.f32.mrb[0].mxu0
        %v3010 = vpop.f32.mrb[0].mxu0
        %v3011 = vadd.f32 0.0, %v3010
        %v3012 = vpop.f32.mrb[0].mxu0
        %3013 = vdwg.mxu0
        %3014 = vrot.lane.b32.xlu0 %v1393, 72
        %v3015 = vpop.permute.xlu0 %3014
        %v3017 = vsel %vm1087, %v3015, 0
        %3019 = vmatprep.subr.bf16.mxu0 0
        %3020 = vmatpush1.bf16.xpose.msra.mxu0 %v3017
        %3021 = vmatprep.subr.bf16.mxu0 0
        %3022 = vmatpush1.bf16.xpose.msra.mxu0 0
        %3023 = vmatprep.subr.bf16.mxu0 0
        %3024 = vmatpush1.bf16.xpose.msra.mxu0 0
        %3025 = vmatprep.subr.bf16.mxu0 0
        %3026 = vmatpush1.bf16.xpose.msra.mxu0 0
        %3027 = vmatprep.subr.bf16.mxu0 0
        %3028 = vmatpush1.bf16.xpose.msra.mxu0 0
        %3029 = vmatprep.subr.bf16.mxu0 0
        %3030 = vmatpush1.bf16.xpose.msra.mxu0 0
        %3031 = vmatprep.subr.bf16.mxu0 0
        %3032 = vmatpush1.bf16.xpose.msra.mxu0 0
        %3033 = vmatprep.subr.bf16.mxu0 0
        %3034 = vmatpush1.bf16.xpose.msra.mxu0 0
        %3035 = vmatprep.subr.bf16.mxu0 0
        %3036 = vmatpush1.bf16.xpose.msra.mxu0 0
        %3037 = vmatprep.subr.bf16.mxu0 0
        %3038 = vmatpush1.bf16.xpose.msra.mxu0 0
        %3039 = vmatprep.subr.bf16.mxu0 0
        %3040 = vmatpush1.bf16.xpose.msra.mxu0 0
        %3041 = vmatprep.subr.bf16.mxu0 0
        %3042 = vmatpush1.bf16.xpose.msra.mxu0 0
        %3043 = vmatprep.subr.bf16.mxu0 0
        %3044 = vmatpush1.bf16.xpose.msra.mxu0 0
        %3045 = vmatprep.subr.bf16.mxu0 0
        %3046 = vmatpush1.bf16.xpose.msra.mxu0 0
        %3047 = vmatprep.subr.bf16.mxu0 0
        %3048 = vmatpush1.bf16.xpose.msra.mxu0 0
        %3049 = vmatprep.subr.bf16.mxu0 0
        %3050 = vmatpush1.bf16.xpose.msra.mxu0 0
        %3051 = vmatprep.mubr.bf16.mxu0 0
        %3052 = vmatmul.mubr.bf16.gmra.mrb[0].mxu0 %v2762
        %v3053 = vpop.f32.mrb[0].mxu0
        %v3054 = vadd.f32 0.0, %v3053
        %v3055 = vpop.f32.mrb[0].mxu0
        %v3056 = vpop.f32.mrb[0].mxu0
        %v3057 = vadd.f32 0.0, %v3056
        %v3058 = vpop.f32.mrb[0].mxu0
        %3059 = vdwg.mxu0
        %v3060 = vsel %vm1087, %v3008, -inf
        %3061 = vmax.xlane.f32.xlu0 %v3060
        %v3062 = vpop.xlane.xlu0 %3061
        %v3063 = vsel %vm1087, %v3011, -inf
        %3064 = vmax.xlane.f32.xlu0 %v3063
        %v3065 = vpop.xlane.xlu0 %3064
        %v3066 = vsel %vm1087, %v3054, -inf
        %3067 = vmax.xlane.f32.xlu0 %v3066
        %v3068 = vpop.xlane.xlu0 %3067
        %v3069 = vsel %vm1087, %v3057, -inf
        %3070 = vmax.xlane.f32.xlu0 %v3069
        %v3071 = vpop.xlane.xlu0 %3070
        %v3072 = vmax.f32 %v2810, %v3062
        %v3073 = vmax.f32 %v2813, %v3065
        %v3074 = vmax.f32 %v2816, %v3068
        %v3075 = vmax.f32 %v2819, %v3071
        %v3076 = vsub.f32 %v2810, %v3072
        %v3077 = vsub.f32 %v2813, %v3073
        %v3078 = vsub.f32 %v2816, %v3074
        %v3079 = vsub.f32 %v2819, %v3075
        %v3080 = vmul.f32 %v3076, 1.442695
        %v3081 = vpow.pop %v3080
        %v3082 = vmul.f32 %v3077, 1.442695
        %v3083 = vpow.pop %v3082
        %v3084 = vmul.f32 %v3078, 1.442695
        %v3085 = vpow.pop %v3084
        %v3086 = vmul.f32 %v3079, 1.442695
        %v3087 = vpow.pop %v3086
        %v3088 = vsub.f32 %v3008, %v3072
        %v3089 = vsub.f32 %v3011, %v3073
        %v3090 = vsub.f32 %v3054, %v3074
        %v3091 = vsub.f32 %v3057, %v3075
        %v3092 = vmul.f32 %v3088, 1.442695
        %v3093 = vpow.pop %v3092
        %v3094 = vmul.f32 %v3089, 1.442695
        %v3095 = vpow.pop %v3094
        %v3096 = vmul.f32 %v3090, 1.442695
        %v3097 = vpow.pop %v3096
        %v3098 = vmul.f32 %v3091, 1.442695
        %v3099 = vpow.pop %v3098
        %v3100 = vmul.f32 %v3081, %v2860
        %v3101 = vmul.f32 %v3083, %v2861
        %v3102 = vmul.f32 %v3085, %v2862
        %v3103 = vmul.f32 %v3087, %v2863
        %v3104 = vsel %vm1087, %v3093, 0.0
        %3105 = vadd.xlane.f32.xlu0 %v3104
        %v3106 = vpop.xlane.xlu0 %3105
        %v3107 = vsel %vm1087, %v3095, 0.0
        %3108 = vadd.xlane.f32.xlu0 %v3107
        %v3109 = vpop.xlane.xlu0 %3108
        %v3110 = vsel %vm1087, %v3097, 0.0
        %3111 = vadd.xlane.f32.xlu0 %v3110
        %v3112 = vpop.xlane.xlu0 %3111
        %v3113 = vsel %vm1087, %v3099, 0.0
        %3114 = vadd.xlane.f32.xlu0 %v3113
        %v3115 = vpop.xlane.xlu0 %3114
        %v3116 = vadd.f32 %v3100, %v3106
        %v3117 = vadd.f32 %v3101, %v3109
        %v3118 = vadd.f32 %v3102, %v3112
        %v3119 = vadd.f32 %v3103, %v3115
        %v3120 = vmul.f32 %v3081, %v2964
        %v3121 = vmul.f32 %v3083, %v2965
        %v3122 = vmul.f32 %v3085, %v2966
        %v3123 = vmul.f32 %v3087, %v2967
        %v3124 = vpack.c.bf16 %v3095, %v3093
        %v3125 = vpack.c.bf16 %v3099, %v3097
        %3126 = vrot.lane.b32.xlu0 %v1346, 40
        %v3127 = vpop.permute.xlu0 %3126
        %v3129 = vsel %vm1087, %v3124, 0
        %v3132 = vsel %vm1248, %v3127, 0
        %3134 = vmatprep.subr.bf16.mxu0 0
        %3135 = vmatpush1.bf16.msra.mxu0 %v3132
        %3136 = vmatprep.subr.bf16.mxu0 0
        %3137 = vmatpush1.bf16.msra.mxu0 0
        %3138 = vmatprep.subr.bf16.mxu0 0
        %3139 = vmatpush1.bf16.msra.mxu0 0
        %3140 = vmatprep.subr.bf16.mxu0 0
        %3141 = vmatpush1.bf16.msra.mxu0 0
        %3142 = vmatprep.subr.bf16.mxu0 0
        %3143 = vmatpush1.bf16.msra.mxu0 0
        %3144 = vmatprep.subr.bf16.mxu0 0
        %3145 = vmatpush1.bf16.msra.mxu0 0
        %3146 = vmatprep.subr.bf16.mxu0 0
        %3147 = vmatpush1.bf16.msra.mxu0 0
        %3148 = vmatprep.subr.bf16.mxu0 0
        %3149 = vmatpush1.bf16.msra.mxu0 0
        %3150 = vmatprep.subr.bf16.mxu0 0
        %3151 = vmatpush1.bf16.msra.mxu0 0
        %3152 = vmatprep.subr.bf16.mxu0 0
        %3153 = vmatpush1.bf16.msra.mxu0 0
        %3154 = vmatprep.subr.bf16.mxu0 0
        %3155 = vmatpush1.bf16.msra.mxu0 0
        %3156 = vmatprep.subr.bf16.mxu0 0
        %3157 = vmatpush1.bf16.msra.mxu0 0
        %3158 = vmatprep.subr.bf16.mxu0 0
        %3159 = vmatpush1.bf16.msra.mxu0 0
        %3160 = vmatprep.subr.bf16.mxu0 0
        %3161 = vmatpush1.bf16.msra.mxu0 0
        %3162 = vmatprep.subr.bf16.mxu0 0
        %3163 = vmatpush1.bf16.msra.mxu0 0
        %3164 = vmatprep.subr.bf16.mxu0 0
        %3165 = vmatpush1.bf16.msra.mxu0 0
        %3166 = vmatprep.mubr.bf16.mxu0 0
        %3167 = vmatmul.mubr.bf16.gmra.mrb[0].mxu0 %v3129
        %v3168 = vpop.f32.mrb[0].mxu0
        %v3169 = vadd.f32 0.0, %v3168
        %v3170 = vpop.f32.mrb[0].mxu0
        %v3171 = vpop.f32.mrb[0].mxu0
        %v3172 = vadd.f32 0.0, %v3171
        %v3173 = vpop.f32.mrb[0].mxu0
        %3174 = vdwg.mxu0
        %3175 = vrot.lane.b32.xlu0 %v1393, 40
        %v3176 = vpop.permute.xlu0 %3175
        %v3178 = vsel %vm1087, %v3125, 0
        %v3181 = vsel %vm1248, %v3176, 0
        %3183 = vmatprep.subr.bf16.mxu0 0
        %3184 = vmatpush1.bf16.msra.mxu0 %v3181
        %3185 = vmatprep.subr.bf16.mxu0 0
        %3186 = vmatpush1.bf16.msra.mxu0 0
        %3187 = vmatprep.subr.bf16.mxu0 0
        %3188 = vmatpush1.bf16.msra.mxu0 0
        %3189 = vmatprep.subr.bf16.mxu0 0
        %3190 = vmatpush1.bf16.msra.mxu0 0
        %3191 = vmatprep.subr.bf16.mxu0 0
        %3192 = vmatpush1.bf16.msra.mxu0 0
        %3193 = vmatprep.subr.bf16.mxu0 0
        %3194 = vmatpush1.bf16.msra.mxu0 0
        %3195 = vmatprep.subr.bf16.mxu0 0
        %3196 = vmatpush1.bf16.msra.mxu0 0
        %3197 = vmatprep.subr.bf16.mxu0 0
        %3198 = vmatpush1.bf16.msra.mxu0 0
        %3199 = vmatprep.subr.bf16.mxu0 0
        %3200 = vmatpush1.bf16.msra.mxu0 0
        %3201 = vmatprep.subr.bf16.mxu0 0
        %3202 = vmatpush1.bf16.msra.mxu0 0
        %3203 = vmatprep.subr.bf16.mxu0 0
        %3204 = vmatpush1.bf16.msra.mxu0 0
        %3205 = vmatprep.subr.bf16.mxu0 0
        %3206 = vmatpush1.bf16.msra.mxu0 0
        %3207 = vmatprep.subr.bf16.mxu0 0
        %3208 = vmatpush1.bf16.msra.mxu0 0
        %3209 = vmatprep.subr.bf16.mxu0 0
        %3210 = vmatpush1.bf16.msra.mxu0 0
        %3211 = vmatprep.subr.bf16.mxu0 0
        %3212 = vmatpush1.bf16.msra.mxu0 0
        %3213 = vmatprep.subr.bf16.mxu0 0
        %3214 = vmatpush1.bf16.msra.mxu0 0
        %3215 = vmatprep.mubr.bf16.mxu0 0
        %3216 = vmatmul.mubr.bf16.gmra.mrb[0].mxu0 %v3178
        %v3217 = vpop.f32.mrb[0].mxu0
        %v3218 = vadd.f32 0.0, %v3217
        %v3219 = vpop.f32.mrb[0].mxu0
        %v3220 = vpop.f32.mrb[0].mxu0
        %v3221 = vadd.f32 0.0, %v3220
        %v3222 = vpop.f32.mrb[0].mxu0
        %3223 = vdwg.mxu0
        %v3224 = vadd.f32 %v3120, %v3169
        %v3225 = vadd.f32 %v3121, %v3172
        %v3226 = vadd.f32 %v3122, %v3218
        %v3227 = vadd.f32 %v3123, %v3221
        %v3228 = vrcp.pop %v3116
        %v3229 = vrcp.pop %v3117
        %v3230 = vrcp.pop %v3118
        %v3231 = vrcp.pop %v3119
        %v3232 = vmul.f32 %v3224, %v3228
        %v3233 = vmul.f32 %v3225, %v3229
        %v3234 = vmul.f32 %v3226, %v3230
        %v3235 = vmul.f32 %v3227, %v3231
        %v3236 = vpack.c.bf16 %v3233, %v3232
        %v3237 = vpack.c.bf16 %v3235, %v3234
        %3240 = vrot.lane.b32.xlu0 %v3236, 24
        %v3241 = vpop.permute.xlu0 %3240
        %3242 = vrot.lane.b32.xlu0 %v3237, 24
        %v3243 = vpop.permute.xlu0 %3242
        %vm3246 = vcmask 261312
        %3247 = vst.msk [vmem:[#allocation3] sm:$0xff] %vm3246, %v3241
        %3248 = vst.msk [vmem:[#allocation3 + $0x8] sm:$0xff] %vm3246, %v3243
        %v3249 = vld [vmem:[#allocation3] sm:$0xff]
        %v3250 = vld [vmem:[#allocation3 + $0x8] sm:$0xff]
        %v3251 = vld [vmem:[%s794] sm:$0xf]
        %v3252 = vld [vmem:[%s794 + $0x4] sm:$0xf]
        %v3253 = vld [vmem:[%s794 + $0x8] sm:$0xf]
        %v3254 = vld [vmem:[%s794 + $0xc] sm:$0xf]
        %v3255 = vld [vmem:[%s802] sm:$0x1]
        %v3257 = vlaneseq
        %v3258 = vshrl.u32 %v3257, 7
        %v3259 = vsub.s32 0, %v3258
        %v3260 = vrot.slane %v3255, %v3259
        %v3266 = vunpack.c.l.b16 %v3251
        %v3267 = vunpack.c.l.b16 %v3252
        %v3268 = vunpack.c.l.b16 %v3253
        %v3269 = vunpack.c.l.b16 %v3254
        %v3270 = vpack.c.b16 %v3267, %v3266
        %v3271 = vpack.c.b16 %v3269, %v3268
        %v3275 = vsel %vm1026, %v3249, 0
        %v3278 = vsel %vm1026, %v3250, 0
        %3280 = vmatprep.subr.bf16.mxu0 0
        %3281 = vmatpush1.bf16.msra.mxu0 %v3270
        %3282 = vmatprep.subr.bf16.mxu0 0
        %3283 = vmatpush1.bf16.msra.mxu0 %v3271
        %3284 = vmatprep.subr.bf16.mxu0 0
        %3285 = vmatpush1.bf16.msra.mxu0 0
        %3286 = vmatprep.subr.bf16.mxu0 0
        %3287 = vmatpush1.bf16.msra.mxu0 0
        %3288 = vmatprep.subr.bf16.mxu0 0
        %3289 = vmatpush1.bf16.msra.mxu0 0
        %3290 = vmatprep.subr.bf16.mxu0 0
        %3291 = vmatpush1.bf16.msra.mxu0 0
        %3292 = vmatprep.subr.bf16.mxu0 0
        %3293 = vmatpush1.bf16.msra.mxu0 0
        %3294 = vmatprep.subr.bf16.mxu0 0
        %3295 = vmatpush1.bf16.msra.mxu0 0
        %3296 = vmatprep.subr.bf16.mxu0 0
        %3297 = vmatpush1.bf16.msra.mxu0 0
        %3298 = vmatprep.subr.bf16.mxu0 0
        %3299 = vmatpush1.bf16.msra.mxu0 0
        %3300 = vmatprep.subr.bf16.mxu0 0
        %3301 = vmatpush1.bf16.msra.mxu0 0
        %3302 = vmatprep.subr.bf16.mxu0 0
        %3303 = vmatpush1.bf16.msra.mxu0 0
        %3304 = vmatprep.subr.bf16.mxu0 0
        %3305 = vmatpush1.bf16.msra.mxu0 0
        %3306 = vmatprep.subr.bf16.mxu0 0
        %3307 = vmatpush1.bf16.msra.mxu0 0
        %3308 = vmatprep.subr.bf16.mxu0 0
        %3309 = vmatpush1.bf16.msra.mxu0 0
        %3310 = vmatprep.subr.bf16.mxu0 0
        %3311 = vmatpush1.bf16.msra.mxu0 0
        %3312 = vmatprep.mubr.bf16.mxu0 0
        %3313 = vmatmul.mubr.bf16.gmra.mrb[0].mxu0 %v3275
        %v3314 = vpop.f32.mrb[0].mxu0
        %v3315 = vadd.f32 %v3260, %v3314
        %v3316 = vpop.f32.mrb[0].mxu0
        %v3317 = vpop.f32.mrb[0].mxu0
        %v3318 = vadd.f32 %v3260, %v3317
        %v3319 = vpop.f32.mrb[0].mxu0
        %3320 = vmatprep.mubr.bf16.mxu0 0
        %3321 = vmatmul.mubr.bf16.gmra.mrb[0].mxu0 %v3278
        %v3322 = vpop.f32.mrb[0].mxu0
        %v3323 = vadd.f32 %v3260, %v3322
        %v3324 = vpop.f32.mrb[0].mxu0
        %v3325 = vpop.f32.mrb[0].mxu0
        %v3326 = vadd.f32 %v3260, %v3325
        %v3327 = vpop.f32.mrb[0].mxu0
        %3328 = vdwg.mxu0
        %v3329 = vadd.f32 %v997, %v3315
        %v3330 = vadd.f32 %v998, %v3318
        %v3331 = vadd.f32 %v999, %v3323
        %v3332 = vadd.f32 %v1000, %v3326
        %v3333 = vld [vmem:[%s810] sm:$0x1]
        %v3334 = vld [vmem:[%s818] sm:$0x1]
        %v3335 = vsel %vm1026, %v3329, 0.0
        %3336 = vadd.xlane.f32.xlu0 %v3335
        %v3337 = vpop.xlane.xlu0 %3336
        %v3338 = vsel %vm1026, %v3330, 0.0
        %3339 = vadd.xlane.f32.xlu0 %v3338
        %v3340 = vpop.xlane.xlu0 %3339
        %v3341 = vsel %vm1026, %v3331, 0.0
        %3342 = vadd.xlane.f32.xlu0 %v3341
        %v3343 = vpop.xlane.xlu0 %3342
        %v3344 = vsel %vm1026, %v3332, 0.0
        %3345 = vadd.xlane.f32.xlu0 %v3344
        %v3346 = vpop.xlane.xlu0 %3345
        %v3347 = vrcp.pop 32.0
        %v3348 = vmul.f32 %v3337, %v3347
        %v3349 = vmul.f32 %v3340, %v3347
        %v3350 = vmul.f32 %v3343, %v3347
        %v3351 = vmul.f32 %v3346, %v3347
        %v3352 = vsub.f32 %v3329, %v3348
        %v3353 = vsub.f32 %v3330, %v3349
        %v3354 = vsub.f32 %v3331, %v3350
        %v3355 = vsub.f32 %v3332, %v3351
        %v3356 = vmul.f32 %v3352, %v3352
        %v3357 = vmul.f32 %v3353, %v3353
        %v3358 = vmul.f32 %v3354, %v3354
        %v3359 = vmul.f32 %v3355, %v3355
        %v3360 = vsel %vm1026, %v3356, 0.0
        %3361 = vadd.xlane.f32.xlu0 %v3360
        %v3362 = vpop.xlane.xlu0 %3361
        %v3363 = vsel %vm1026, %v3357, 0.0
        %3364 = vadd.xlane.f32.xlu0 %v3363
        %v3365 = vpop.xlane.xlu0 %3364
        %v3366 = vsel %vm1026, %v3358, 0.0
        %3367 = vadd.xlane.f32.xlu0 %v3366
        %v3368 = vpop.xlane.xlu0 %3367
        %v3369 = vsel %vm1026, %v3359, 0.0
        %3370 = vadd.xlane.f32.xlu0 %v3369
        %v3371 = vpop.xlane.xlu0 %3370
        %v3372 = vmul.f32 %v3362, %v3347
        %v3373 = vmul.f32 %v3365, %v3347
        %v3374 = vmul.f32 %v3368, %v3347
        %v3375 = vmul.f32 %v3371, %v3347
        %v3376 = vadd.f32 %v3372, 1e-05
        %v3377 = vadd.f32 %v3373, 1e-05
        %v3378 = vadd.f32 %v3374, 1e-05
        %v3379 = vadd.f32 %v3375, 1e-05
        %v3380 = vrsqrt.pop %v3376
        %v3381 = vrsqrt.pop %v3377
        %v3382 = vrsqrt.pop %v3378
        %v3383 = vrsqrt.pop %v3379
        %v3384 = vmul.f32 %v3352, %v3380
        %v3385 = vmul.f32 %v3353, %v3381
        %v3386 = vmul.f32 %v3354, %v3382
        %v3387 = vmul.f32 %v3355, %v3383
        %v3389 = vlaneseq
        %v3390 = vshrl.u32 %v3389, 7
        %v3391 = vsub.s32 0, %v3390
        %v3392 = vrot.slane %v3333, %v3391
        %v3394 = vmul.f32 %v3384, %v3392
        %v3395 = vmul.f32 %v3385, %v3392
        %v3396 = vmul.f32 %v3386, %v3392
        %v3397 = vmul.f32 %v3387, %v3392
        %v3399 = vlaneseq
        %v3400 = vshrl.u32 %v3399, 7
        %v3401 = vsub.s32 0, %v3400
        %v3402 = vrot.slane %v3334, %v3401
        %v3404 = vadd.f32 %v3394, %v3402
        %v3405 = vadd.f32 %v3395, %v3402
        %v3406 = vadd.f32 %v3396, %v3402
        %v3407 = vadd.f32 %v3397, %v3402
        %v3408 = vpack.c.bf16 %v3405, %v3404
        %v3409 = vpack.c.bf16 %v3407, %v3406
        %v3410 = vld [vmem:[%s827] sm:$0xf]
        %v3411 = vld [vmem:[%s827 + $0x4] sm:$0xf]
        %v3412 = vld [vmem:[%s827 + $0x8] sm:$0xf]
        %v3413 = vld [vmem:[%s827 + $0xc] sm:$0xf]
        %v3414 = vld [vmem:[%s835] sm:$0x1]
        %v3416 = vlaneseq
        %v3417 = vshrl.u32 %v3416, 7
        %v3418 = vsub.s32 0, %v3417
        %v3419 = vrot.slane %v3414, %v3418
        %v3425 = vunpack.c.l.b16 %v3410
        %v3426 = vunpack.c.l.b16 %v3411
        %v3427 = vunpack.c.l.b16 %v3412
        %v3428 = vunpack.c.l.b16 %v3413
        %v3429 = vpack.c.b16 %v3426, %v3425
        %v3430 = vpack.c.b16 %v3428, %v3427
        %v3434 = vsel %vm1026, %v3408, 0
        %v3437 = vsel %vm1026, %v3409, 0
        %3439 = vmatprep.subr.bf16.mxu0 0
        %3440 = vmatpush1.bf16.msra.mxu0 %v3429
        %3441 = vmatprep.subr.bf16.mxu0 0
        %3442 = vmatpush1.bf16.msra.mxu0 %v3430
        %3443 = vmatprep.subr.bf16.mxu0 0
        %3444 = vmatpush1.bf16.msra.mxu0 0
        %3445 = vmatprep.subr.bf16.mxu0 0
        %3446 = vmatpush1.bf16.msra.mxu0 0
        %3447 = vmatprep.subr.bf16.mxu0 0
        %3448 = vmatpush1.bf16.msra.mxu0 0
        %3449 = vmatprep.subr.bf16.mxu0 0
        %3450 = vmatpush1.bf16.msra.mxu0 0
        %3451 = vmatprep.subr.bf16.mxu0 0
        %3452 = vmatpush1.bf16.msra.mxu0 0
        %3453 = vmatprep.subr.bf16.mxu0 0
        %3454 = vmatpush1.bf16.msra.mxu0 0
        %3455 = vmatprep.subr.bf16.mxu0 0
        %3456 = vmatpush1.bf16.msra.mxu0 0
        %3457 = vmatprep.subr.bf16.mxu0 0
        %3458 = vmatpush1.bf16.msra.mxu0 0
        %3459 = vmatprep.subr.bf16.mxu0 0
        %3460 = vmatpush1.bf16.msra.mxu0 0
        %3461 = vmatprep.subr.bf16.mxu0 0
        %3462 = vmatpush1.bf16.msra.mxu0 0
        %3463 = vmatprep.subr.bf16.mxu0 0
        %3464 = vmatpush1.bf16.msra.mxu0 0
        %3465 = vmatprep.subr.bf16.mxu0 0
        %3466 = vmatpush1.bf16.msra.mxu0 0
        %3467 = vmatprep.subr.bf16.mxu0 0
        %3468 = vmatpush1.bf16.msra.mxu0 0
        %3469 = vmatprep.subr.bf16.mxu0 0
        %3470 = vmatpush1.bf16.msra.mxu0 0
        %3471 = vmatprep.mubr.bf16.mxu0 0
        %3472 = vmatmul.mubr.bf16.gmra.mrb[0].mxu0 %v3434
        %v3473 = vpop.f32.mrb[0].mxu0
        %v3474 = vadd.f32 %v3419, %v3473
        %v3475 = vpop.f32.mrb[0].mxu0
        %v3476 = vpop.f32.mrb[0].mxu0
        %v3477 = vadd.f32 %v3419, %v3476
        %v3478 = vpop.f32.mrb[0].mxu0
        %3479 = vmatprep.mubr.bf16.mxu0 0
        %3480 = vmatmul.mubr.bf16.gmra.mrb[0].mxu0 %v3437
        %v3481 = vpop.f32.mrb[0].mxu0
        %v3482 = vadd.f32 %v3419, %v3481
        %v3483 = vpop.f32.mrb[0].mxu0
        %v3484 = vpop.f32.mrb[0].mxu0
        %v3485 = vadd.f32 %v3419, %v3484
        %v3486 = vpop.f32.mrb[0].mxu0
        %3487 = vdwg.mxu0
        %v3488 = vmax.f32 %v3474, 0.0
        %v3489 = vmax.f32 %v3477, 0.0
        %v3490 = vmax.f32 %v3482, 0.0
        %v3491 = vmax.f32 %v3485, 0.0
        %v3492 = vpack.c.bf16 %v3489, %v3488
        %v3493 = vpack.c.bf16 %v3491, %v3490
        %v3494 = vld [vmem:[%s844] sm:$0xf]
        %v3495 = vld [vmem:[%s844 + $0x4] sm:$0xf]
        %v3496 = vld [vmem:[%s844 + $0x8] sm:$0xf]
        %v3497 = vld [vmem:[%s844 + $0xc] sm:$0xf]
        %v3498 = vld [vmem:[%s844 + $0x10] sm:$0xf]
        %v3499 = vld [vmem:[%s844 + $0x14] sm:$0xf]
        %v3500 = vld [vmem:[%s844 + $0x18] sm:$0xf]
        %v3501 = vld [vmem:[%s844 + $0x1c] sm:$0xf]
        %v3502 = vld [vmem:[%s852] sm:$0x1]
        %v3504 = vlaneseq
        %v3505 = vshrl.u32 %v3504, 7
        %v3506 = vsub.s32 0, %v3505
        %v3507 = vrot.slane %v3502, %v3506
        %v3517 = vunpack.c.l.b16 %v3494
        %v3518 = vunpack.c.l.b16 %v3495
        %v3519 = vunpack.c.l.b16 %v3496
        %v3520 = vunpack.c.l.b16 %v3497
        %v3521 = vunpack.c.l.b16 %v3498
        %v3522 = vunpack.c.l.b16 %v3499
        %v3523 = vunpack.c.l.b16 %v3500
        %v3524 = vunpack.c.l.b16 %v3501
        %v3525 = vpack.c.b16 %v3518, %v3517
        %v3526 = vpack.c.b16 %v3520, %v3519
        %v3527 = vpack.c.b16 %v3522, %v3521
        %v3528 = vpack.c.b16 %v3524, %v3523
        %vm3533 = vcmask 523264
        %v3535 = vsel %vm3533, %v3492, 0
        %v3538 = vsel %vm3533, %v3493, 0
        %3540 = vmatprep.subr.bf16.mxu0 0
        %3541 = vmatpush1.bf16.msra.mxu0 %v3525
        %3542 = vmatprep.subr.bf16.mxu0 0
        %3543 = vmatpush1.bf16.msra.mxu0 %v3526
        %3544 = vmatprep.subr.bf16.mxu0 0
        %3545 = vmatpush1.bf16.msra.mxu0 %v3527
        %3546 = vmatprep.subr.bf16.mxu0 0
        %3547 = vmatpush1.bf16.msra.mxu0 %v3528
        %3548 = vmatprep.subr.bf16.mxu0 0
        %3549 = vmatpush1.bf16.msra.mxu0 0
        %3550 = vmatprep.subr.bf16.mxu0 0
        %3551 = vmatpush1.bf16.msra.mxu0 0
        %3552 = vmatprep.subr.bf16.mxu0 0
        %3553 = vmatpush1.bf16.msra.mxu0 0
        %3554 = vmatprep.subr.bf16.mxu0 0
        %3555 = vmatpush1.bf16.msra.mxu0 0
        %3556 = vmatprep.subr.bf16.mxu0 0
        %3557 = vmatpush1.bf16.msra.mxu0 0
        %3558 = vmatprep.subr.bf16.mxu0 0
        %3559 = vmatpush1.bf16.msra.mxu0 0
        %3560 = vmatprep.subr.bf16.mxu0 0
        %3561 = vmatpush1.bf16.msra.mxu0 0
        %3562 = vmatprep.subr.bf16.mxu0 0
        %3563 = vmatpush1.bf16.msra.mxu0 0
        %3564 = vmatprep.subr.bf16.mxu0 0
        %3565 = vmatpush1.bf16.msra.mxu0 0
        %3566 = vmatprep.subr.bf16.mxu0 0
        %3567 = vmatpush1.bf16.msra.mxu0 0
        %3568 = vmatprep.subr.bf16.mxu0 0
        %3569 = vmatpush1.bf16.msra.mxu0 0
        %3570 = vmatprep.subr.bf16.mxu0 0
        %3571 = vmatpush1.bf16.msra.mxu0 0
        %3572 = vmatprep.mubr.bf16.mxu0 0
        %3573 = vmatmul.mubr.bf16.gmra.mrb[0].mxu0 %v3535
        %v3574 = vpop.f32.mrb[0].mxu0
        %v3575 = vadd.f32 %v3507, %v3574
        %v3576 = vpop.f32.mrb[0].mxu0
        %v3577 = vpop.f32.mrb[0].mxu0
        %v3578 = vadd.f32 %v3507, %v3577
        %v3579 = vpop.f32.mrb[0].mxu0
        %3580 = vmatprep.mubr.bf16.mxu0 0
        %3581 = vmatmul.mubr.bf16.gmra.mrb[0].mxu0 %v3538
        %v3582 = vpop.f32.mrb[0].mxu0
        %v3583 = vadd.f32 %v3507, %v3582
        %v3584 = vpop.f32.mrb[0].mxu0
        %v3585 = vpop.f32.mrb[0].mxu0
        %v3586 = vadd.f32 %v3507, %v3585
        %v3587 = vpop.f32.mrb[0].mxu0
        %3588 = vdwg.mxu0
        %v3589 = vadd.f32 %v3404, %v3575
        %v3590 = vadd.f32 %v3405, %v3578
        %v3591 = vadd.f32 %v3406, %v3583
        %v3592 = vadd.f32 %v3407, %v3586
        %v3593 = vld [vmem:[%s860] sm:$0x1]
        %v3594 = vld [vmem:[%s868] sm:$0x1]
        %v3595 = vsel %vm1026, %v3589, 0.0
        %3596 = vadd.xlane.f32.xlu0 %v3595
        %v3597 = vpop.xlane.xlu0 %3596
        %v3598 = vsel %vm1026, %v3590, 0.0
        %3599 = vadd.xlane.f32.xlu0 %v3598
        %v3600 = vpop.xlane.xlu0 %3599
        %v3601 = vsel %vm1026, %v3591, 0.0
        %3602 = vadd.xlane.f32.xlu0 %v3601
        %v3603 = vpop.xlane.xlu0 %3602
        %v3604 = vsel %vm1026, %v3592, 0.0
        %3605 = vadd.xlane.f32.xlu0 %v3604
        %v3606 = vpop.xlane.xlu0 %3605
        %v3607 = vmul.f32 %v3597, %v3347
        %v3608 = vmul.f32 %v3600, %v3347
        %v3609 = vmul.f32 %v3603, %v3347
        %v3610 = vmul.f32 %v3606, %v3347
        %v3611 = vsub.f32 %v3589, %v3607
        %v3612 = vsub.f32 %v3590, %v3608
        %v3613 = vsub.f32 %v3591, %v3609
        %v3614 = vsub.f32 %v3592, %v3610
        %v3615 = vmul.f32 %v3611, %v3611
        %v3616 = vmul.f32 %v3612, %v3612
        %v3617 = vmul.f32 %v3613, %v3613
        %v3618 = vmul.f32 %v3614, %v3614
        %v3619 = vsel %vm1026, %v3615, 0.0
        %3620 = vadd.xlane.f32.xlu0 %v3619
        %v3621 = vpop.xlane.xlu0 %3620
        %v3622 = vsel %vm1026, %v3616, 0.0
        %3623 = vadd.xlane.f32.xlu0 %v3622
        %v3624 = vpop.xlane.xlu0 %3623
        %v3625 = vsel %vm1026, %v3617, 0.0
        %3626 = vadd.xlane.f32.xlu0 %v3625
        %v3627 = vpop.xlane.xlu0 %3626
        %v3628 = vsel %vm1026, %v3618, 0.0
        %3629 = vadd.xlane.f32.xlu0 %v3628
        %v3630 = vpop.xlane.xlu0 %3629
        %v3631 = vmul.f32 %v3621, %v3347
        %v3632 = vmul.f32 %v3624, %v3347
        %v3633 = vmul.f32 %v3627, %v3347
        %v3634 = vmul.f32 %v3630, %v3347
        %v3635 = vadd.f32 %v3631, 1e-05
        %v3636 = vadd.f32 %v3632, 1e-05
        %v3637 = vadd.f32 %v3633, 1e-05
        %v3638 = vadd.f32 %v3634, 1e-05
        %v3639 = vrsqrt.pop %v3635
        %v3640 = vrsqrt.pop %v3636
        %v3641 = vrsqrt.pop %v3637
        %v3642 = vrsqrt.pop %v3638
        %v3643 = vmul.f32 %v3611, %v3639
        %v3644 = vmul.f32 %v3612, %v3640
        %v3645 = vmul.f32 %v3613, %v3641
        %v3646 = vmul.f32 %v3614, %v3642
        %v3648 = vlaneseq
        %v3649 = vshrl.u32 %v3648, 7
        %v3650 = vsub.s32 0, %v3649
        %v3651 = vrot.slane %v3593, %v3650
        %v3653 = vmul.f32 %v3643, %v3651
        %v3654 = vmul.f32 %v3644, %v3651
        %v3655 = vmul.f32 %v3645, %v3651
        %v3656 = vmul.f32 %v3646, %v3651
        %v3658 = vlaneseq
        %v3659 = vshrl.u32 %v3658, 7
        %v3660 = vsub.s32 0, %v3659
        %v3661 = vrot.slane %v3594, %v3660
        %v3663 = vadd.f32 %v3653, %v3661
        %v3664 = vadd.f32 %v3654, %v3661
        %v3665 = vadd.f32 %v3655, %v3661
        %v3666 = vadd.f32 %v3656, %v3661
        %v3667 = vadd.f32 %v3663, %v997
        %v3668 = vadd.f32 %v3664, %v998
        %v3669 = vadd.f32 %v3665, %v999
        %v3670 = vadd.f32 %v3666, %v1000
        %v3671 = vld [vmem:[%s876] sm:$0x1]
        %v3672 = vld [vmem:[%s884] sm:$0x1]
        %v3673 = vsel %vm1026, %v3667, 0.0
        %3674 = vadd.xlane.f32.xlu0 %v3673
        %v3675 = vpop.xlane.xlu0 %3674
        %v3676 = vsel %vm1026, %v3668, 0.0
        %3677 = vadd.xlane.f32.xlu0 %v3676
        %v3678 = vpop.xlane.xlu0 %3677
        %v3679 = vsel %vm1026, %v3669, 0.0
        %3680 = vadd.xlane.f32.xlu0 %v3679
        %v3681 = vpop.xlane.xlu0 %3680
        %v3682 = vsel %vm1026, %v3670, 0.0
        %3683 = vadd.xlane.f32.xlu0 %v3682
        %v3684 = vpop.xlane.xlu0 %3683
        %v3685 = vmul.f32 %v3675, %v3347
        %v3686 = vmul.f32 %v3678, %v3347
        %v3687 = vmul.f32 %v3681, %v3347
        %v3688 = vmul.f32 %v3684, %v3347
        %v3689 = vsub.f32 %v3667, %v3685
        %v3690 = vsub.f32 %v3668, %v3686
        %v3691 = vsub.f32 %v3669, %v3687
        %v3692 = vsub.f32 %v3670, %v3688
        %v3693 = vmul.f32 %v3689, %v3689
        %v3694 = vmul.f32 %v3690, %v3690
        %v3695 = vmul.f32 %v3691, %v3691
        %v3696 = vmul.f32 %v3692, %v3692
        %v3697 = vsel %vm1026, %v3693, 0.0
        %3698 = vadd.xlane.f32.xlu0 %v3697
        %v3699 = vpop.xlane.xlu0 %3698
        %v3700 = vsel %vm1026, %v3694, 0.0
        %3701 = vadd.xlane.f32.xlu0 %v3700
        %v3702 = vpop.xlane.xlu0 %3701
        %v3703 = vsel %vm1026, %v3695, 0.0
        %3704 = vadd.xlane.f32.xlu0 %v3703
        %v3705 = vpop.xlane.xlu0 %3704
        %v3706 = vsel %vm1026, %v3696, 0.0
        %3707 = vadd.xlane.f32.xlu0 %v3706
        %v3708 = vpop.xlane.xlu0 %3707
        %v3709 = vmul.f32 %v3699, %v3347
        %v3710 = vmul.f32 %v3702, %v3347
        %v3711 = vmul.f32 %v3705, %v3347
        %v3712 = vmul.f32 %v3708, %v3347
        %v3713 = vadd.f32 %v3709, 1e-05
        %v3714 = vadd.f32 %v3710, 1e-05
        %v3715 = vadd.f32 %v3711, 1e-05
        %v3716 = vadd.f32 %v3712, 1e-05
        %v3717 = vrsqrt.pop %v3713
        %v3718 = vrsqrt.pop %v3714
        %v3719 = vrsqrt.pop %v3715
        %v3720 = vrsqrt.pop %v3716
        %v3721 = vmul.f32 %v3689, %v3717
        %v3722 = vmul.f32 %v3690, %v3718
        %v3723 = vmul.f32 %v3691, %v3719
        %v3724 = vmul.f32 %v3692, %v3720
        %v3726 = vlaneseq
        %v3727 = vshrl.u32 %v3726, 7
        %v3728 = vsub.s32 0, %v3727
        %v3729 = vrot.slane %v3671, %v3728
        %v3731 = vmul.f32 %v3721, %v3729
        %v3732 = vmul.f32 %v3722, %v3729
        %v3733 = vmul.f32 %v3723, %v3729
        %v3734 = vmul.f32 %v3724, %v3729
        %v3736 = vlaneseq
        %v3737 = vshrl.u32 %v3736, 7
        %v3738 = vsub.s32 0, %v3737
        %v3739 = vrot.slane %v3672, %v3738
        %v3741 = vadd.f32 %v3731, %v3739
        %v3742 = vadd.f32 %v3732, %v3739
        %v3743 = vadd.f32 %v3733, %v3739
        %v3744 = vadd.f32 %v3734, %v3739
        %3745 = vst.msk [vmem:[#allocation2] sm:$0xff] %vm1026, %v3741
        %3746 = vst.msk [vmem:[#allocation2 + $0x8] sm:$0xff] %vm1026, %v3742
        %3747 = vst.msk [vmem:[#allocation2 + $0x10] sm:$0xff] %vm1026, %v3743
        %3748 = vst.msk [vmem:[#allocation2 + $0x18] sm:$0xff] %vm1026, %v3744
        %p3749 = scmp.eq.s32.totalorder %s54, 1
        // Predicated region
        $region145: #{tpu_custom_call.1} parent=79 // pred_check
          %p3750 = pneg %p3749
        $region146: #{tpu_custom_call.1} parent=79 // pred_check_branch
          %3752 = sbr.rel (%p3750) target = $region148
        $region147: #{tpu_custom_call.1} parent=79 // pred_region
          %3753 = vst.msk [vmem:[#allocation28] sm:$0xff] %vm1026, %v3741
          %3754 = vst.msk [vmem:[#allocation28 + $0x8] sm:$0xff] %vm1026, %v3742
          %3755 = vst.msk [vmem:[#allocation28 + $0x10] sm:$0xff] %vm1026, %v3743
          %3756 = vst.msk [vmem:[#allocation28 + $0x18] sm:$0xff] %vm1026, %v3744
        $region148: #{tpu_custom_call.1} parent=79 // pred_fallthru
          _
        // Predicated region
        $region149: #{tpu_custom_call.1} parent=79 // pred_check
          %p3757 = pneg %p469
        $region150: #{tpu_custom_call.1} parent=79 // pred_check_branch
          %3759 = sbr.rel (%p3757) target = $region152
        $region151: #{tpu_custom_call.1} parent=79 // pred_region
          %s3760 = smul.u32 2, %s53
          %s3762 = ssub.s32 512, 512
          %3763 = vsyncadd [#allocation6], %s3762
          %s3764 = smul.addr %s3760, 2
          %s3765 = smul.addr %s3764, 128
          %s3766 = scalar_lea.hbm %s15, %s3765
          %s3767 = sshll.u32 [#allocation28], 4
          %s3768 = int_to_ptr.vmem [resolvable:$true] %s3767
          %3773 = dma.vmem_to_hbm [thread:$0]  %s3768, 512, %s3766, [#allocation6], 128, 128, 8
        $region152: #{tpu_custom_call.1} parent=79 // pred_fallthru
          _
        // Predicated region
        $region153: #{tpu_custom_call.1} parent=79 // pred_check
          %p3774 = pneg %p469
        $region154: #{tpu_custom_call.1} parent=79 // pred_check_branch
          %3776 = sbr.rel (%p3774) target = $region156
        $region155: #{tpu_custom_call.1} parent=79 // pred_region
          %3777 = dma.done [#allocation6], 512
        $region156: #{tpu_custom_call.1} parent=79 // pred_fallthru
          _
      $region80: #{tpu_custom_call.1} parent=5 // pred_fallthru
        _
      %p3778 = scmp.le.s32.totalorder 2, %s44
      // Predicated region
      $region157: #{tpu_custom_call.1} parent=5 // pred_check
        %p3779 = pneg %p3778
      $region158: #{tpu_custom_call.1} parent=5 // pred_check_branch
        %3781 = sbr.rel (%p3779) target = $region160
      $region159: #{tpu_custom_call.1} parent=5 // pred_region
        %s3782 = ssub.s32 %s44, 2
      $region160: #{tpu_custom_call.1} parent=5 // pred_fallthru
        _
    $region6: #{tpu_custom_call.1} parent=1 // loop_footer
      %s48 = sadd.s32 1, %s44
    $region7: #{tpu_custom_call.1} parent=1 // loop_footer_branch
      %43 = sbr.rel target = $region3
    $region8: #{tpu_custom_call.1} parent=1 // loop_exit
      _
    %3783 = vsyncpa [#allocation5], 1
    %s3784 = scalar_lea.sflag [#allocation5], 1
    %3785 = vsyncpa %s3784, 1
    %3786 = vsyncpa [#allocation8], 1
    %s3787 = scalar_lea.sflag [#allocation8], 1
    %3788 = vsyncpa %s3787, 1
    %3789 = vsyncpa [#allocation11], 1
    %s3790 = scalar_lea.sflag [#allocation11], 1
    %3791 = vsyncpa %s3790, 1
    %3792 = vsyncpa [#allocation14], 1
    %s3793 = scalar_lea.sflag [#allocation14], 1
    %3794 = vsyncpa %s3793, 1
    %3795 = vsyncpa [#allocation17], 1
    %s3796 = scalar_lea.sflag [#allocation17], 1
    %3797 = vsyncpa %s3796, 1
    %3798 = vsyncpa [#allocation20], 1
    %s3799 = scalar_lea.sflag [#allocation20], 1
    %3800 = vsyncpa %s3799, 1
    %3801 = vsyncpa [#allocation23], 1
    %s3802 = scalar_lea.sflag [#allocation23], 1
    %3803 = vsyncpa %s3802, 1
    %3804 = vsyncpa [#allocation26], 1
    %s3805 = scalar_lea.sflag [#allocation26], 1
    %3806 = vsyncpa %s3805, 1
    %3807 = vsyncpa [#allocation6], 1
    %s3808 = scalar_lea.sflag [#allocation6], 1
    %3809 = vsyncpa %s3808, 1

</llo_original>
